<compile_context>
chip_gen: v7x
topology: tpu7x:2x2x1
jax: 0.10.0
libtpu: 0.0.40
codegen_flags: <defaults>
</compile_context>

<pallas_src>
import functools

import jax
import jax.numpy as jnp
from jax.experimental import pallas as pl
from jax.experimental.pallas import tpu as pltpu


# ----------------------------- Pallas kernels -------------------------------

def _stage_kernel(a_ref, mc_ref, mr_ref, x_ref, wc_ref, bc_ref, wp_ref, bp_ref,
                  h_ref, s_ref):
    """Fused GCNConv(+ReLU) and SAGPool score GCN for G graphs per grid step.

    a_ref : [G, N, N] int8   (A + I), 0/1 entries
    mc_ref: [G, N, 1] f32    node mask (column form)
    mr_ref: [G, 1, N] f32    node mask (row form)
    x_ref : [G, N, Fin] bf16 node features
    wc_ref: [Fin, H] bf16, bc_ref: [1, H] f32   conv weight / bias
    wp_ref: [1, 1, H] f32,  bp_ref: [1, 1] f32  pool-score weight (row) / bias
    h_ref : [G, N, H] bf16   relu(GCN(x))            (output)
    s_ref : [G, 1, N] f32    pool score, lane-dense  (output)
    """
    G, N, _ = a_ref.shape
    Fin = x_ref.shape[-1]
    H = wc_ref.shape[-1]

    # 0/1 entries: int8 -> f32 -> bf16 is exact.
    a = a_ref[...].astype(jnp.float32).astype(jnp.bfloat16)      # [G,N,N]
    mc = mc_ref[...]                                             # [G,N,1]
    mr = mr_ref[...]                                             # [G,1,N]

    # Degrees of the mask-restricted graph straight off the MXU (no N^2 VALU
    # masking pass, no N^2 XLU reduce).  A is symmetric.
    deg_c = jnp.einsum('gij,gjo->gio', a, mc.astype(jnp.bfloat16),
                       preferred_element_type=jnp.float32) * mc  # [G,N,1]
    deg_r = jnp.einsum('goj,gjn->gon', mr.astype(jnp.bfloat16), a,
                       preferred_element_type=jnp.float32) * mr  # [G,1,N]
    dinv_c = jnp.where(deg_c > 0, jax.lax.rsqrt(deg_c), 0.0)     # 0 on invalid
    dinv_r = jnp.where(deg_r > 0, jax.lax.rsqrt(deg_r), 0.0)

    # conv GCN:  h = relu(Â X Wc + bc) ⊙ m, with the normalization folded into
    # f32 per-node scalings:  Â (X Wc) = dinv_c ⊙ ( A @ (dinv_c ⊙ (X Wc)) ).
    xw = jnp.dot(x_ref[...].reshape(G * N, Fin), wc_ref[...],
                 preferred_element_type=jnp.float32).reshape(G, N, H)
    xw_s = (xw * dinv_c).astype(jnp.bfloat16)
    agg = jnp.einsum('gij,gjf->gif', a, xw_s,
                     preferred_element_type=jnp.float32)
    h = jnp.maximum(agg * dinv_c + bc_ref[...], 0.0) * mc        # [G,N,H] f32
    h_b = h.astype(jnp.bfloat16)
    h_ref[...] = h_b

    # pool-score GCN, emitted lane-dense as [G,1,N], entirely on the MXU:
    #   hw_row = wp · h^T              (rhs-transposed matmul, flash-style)
    #   s      = dinv ⊙ ((dinv ⊙ hw_row) @ A) + bp          (A symmetric)
    wp_g = jnp.broadcast_to(wp_ref[...].astype(jnp.bfloat16), (G, 1, H))
    hw_row = jnp.einsum('gof,gnf->gon', wp_g, h_b,
                        preferred_element_type=jnp.float32)      # [G,1,N]
    t_row = (hw_row * dinv_r).astype(jnp.bfloat16)
    s_mm = jnp.einsum('goj,gjn->gon', t_row, a,
                      preferred_element_type=jnp.float32)        # [G,1,N]
    s_ref[...] = (s_mm * dinv_r + bp_ref[...]).astype(s_ref.dtype)


def _gate_readout_kernel(h_ref, s_ref, m_ref, hg_ref, r_ref):
    """SAGPool gating (h*tanh(s)*m) fused with the [global_max | global_mean] readout.

    Readout is emitted as [G, 2, H] (sublane split: row 0 = max, row 1 = mean)
    so the H lanes stay dense — no mid-vreg lane-slice stores.
    """
    h = h_ref[...].astype(jnp.float32)          # [G,N,H]
    s = s_ref[...]                              # [G,N,1]
    m = m_ref[...]                              # [G,N,1] selected-node mask

    hg = h * (jnp.tanh(s) * m)                  # gated features (0 for dropped)
    hg_ref[...] = hg.astype(hg_ref.dtype)

    neg = jnp.finfo(jnp.float32).min
    cnt = jnp.sum(m, axis=1, keepdims=True)                             # [G,1,1]
    gmax = jnp.max(jnp.where(m > 0, hg, neg), axis=1, keepdims=True)    # [G,1,H]
    gmax = jnp.where(cnt > 0, gmax, 0.0)        # guard empty graphs (no -inf leak)
    gmean = jnp.sum(hg, axis=1, keepdims=True) / jnp.maximum(cnt, 1.0)  # [G,1,H]

    r_ref[:, 0:1, :] = gmax.astype(r_ref.dtype)
    r_ref[:, 1:2, :] = gmean.astype(r_ref.dtype)


def _mlp_kernel(x1_ref, x2_ref, x3_ref, w1_ref, b1_ref, w2_ref, b2_ref,
                w3_ref, b3_ref, o_ref):
    x = x1_ref[...] + x2_ref[...] + x3_ref[...]
    h = jnp.maximum(jnp.dot(x, w1_ref[...], preferred_element_type=jnp.float32)
                    + b1_ref[...], 0.0)
    # TODO(synk): F.dropout(p=dropout_ratio, training=self.training) is modeled in
    # eval mode (identity); training-mode stochastic dropout is not reproduced.
    h = jnp.maximum(jnp.dot(h, w2_ref[...], preferred_element_type=jnp.float32)
                    + b2_ref[...], 0.0)
    logits = jnp.dot(h, w3_ref[...], preferred_element_type=jnp.float32) + b3_ref[...]
    mx = jnp.max(logits, axis=-1, keepdims=True)
    lse = jnp.log(jnp.sum(jnp.exp(logits - mx), axis=-1, keepdims=True)) + mx
    o_ref[...] = logits - lse


# ------------------------------ wrappers -------------------------------------

def _pick_block_config(B, N, fin, h):
    """Chip-aware graphs-per-block + scoped-VMEM limit.

    Budgets double-buffered input/output blocks plus in-kernel f32 temporaries
    against the physical VMEM of the current chip (v7x: 64 MiB vs v5e/v6e: 128
    MiB); keeps >= 2 grid steps (even when possible) so the "parallel" batch
    axis splits cleanly across megacore / v7x's two TensorCores.
    """
    try:
        vmem_cap = int(pltpu.get_tpu_info().vmem_capacity_bytes)
    except Exception:
        vmem_cap = 64 * 1024 * 1024          # assume the smallest (v7x)

    lane = 128

    def block_bytes(g):
        fin_p = max(fin, lane)
        h_p = max(h, lane)
        n_p = max(N, 8)
        per_graph = (N * N * 1                 # A+I, int8
                     + n_p * fin_p * 2         # x, bf16
                     + n_p * h_p * 2           # h out, bf16
                     + 3 * n_p * lane * 4)     # masks / score, f32 (lane padded)
        io = 2 * 2 * g * per_graph             # inputs+outputs, double buffered
        temps = 5 * g * n_p * h_p * 4          # xw / agg / h / hg f32 temporaries
        return io + temps

    budget = vmem_cap // 2                     # headroom for compiler scratch
    fitting = [g for g in range(1, B + 1)
               if B % g == 0 and B // g >= 2 and block_bytes(g) <= budget]
    even = [g for g in fitting if (B // g) % 2 == 0]
    g = max(even) if even else (max(fitting) if fitting else 1)
    vmem_limit = int(min(0.9 * vmem_cap, max(2 * block_bytes(g), 32 * 1024 * 1024)))
    return g, vmem_limit


def gcn_stage(a_i8, mask_col, mask_row, x, wc, bc, wp_row, bp,
              *, graphs_per_block, vmem_limit):
    B, N, _ = a_i8.shape
    Fin = x.shape[-1]
    H = wc.shape[-1]
    G = graphs_per_block
    return pl.pallas_call(
        _stage_kernel,
        out_shape=(jax.ShapeDtypeStruct((B, N, H), jnp.bfloat16),
                   jax.ShapeDtypeStruct((B, 1, N), jnp.float32)),
        grid=(B // G,),
        in_specs=[
            pl.BlockSpec((G, N, N), lambda i: (i, 0, 0)),
            pl.BlockSpec((G, N, 1), lambda i: (i, 0, 0)),
            pl.BlockSpec((G, 1, N), lambda i: (i, 0, 0)),
            pl.BlockSpec((G, N, Fin), lambda i: (i, 0, 0)),
            pl.BlockSpec((Fin, H), lambda i: (0, 0)),
            pl.BlockSpec((1, H), lambda i: (0, 0)),
            pl.BlockSpec((1, 1, H), lambda i: (0, 0, 0)),
            pl.BlockSpec((1, 1), lambda i: (0, 0)),
        ],
        out_specs=(pl.BlockSpec((G, N, H), lambda i: (i, 0, 0)),
                   pl.BlockSpec((G, 1, N), lambda i: (i, 0, 0))),
        compiler_params=pltpu.CompilerParams(
            dimension_semantics=("parallel",),
            vmem_limit_bytes=vmem_limit),
    )(a_i8, mask_col, mask_row, x, wc, bc, wp_row, bp)


def gate_readout(h, score_col, new_mask, *, graphs_per_block, vmem_limit):
    B, N, H = h.shape
    G = graphs_per_block
    return pl.pallas_call(
        _gate_readout_kernel,
        out_shape=(jax.ShapeDtypeStruct((B, N, H), jnp.bfloat16),
                   jax.ShapeDtypeStruct((B, 2, H), jnp.float32)),
        grid=(B // G,),
        in_specs=[
            pl.BlockSpec((G, N, H), lambda i: (i, 0, 0)),
            pl.BlockSpec((G, N, 1), lambda i: (i, 0, 0)),
            pl.BlockSpec((G, N, 1), lambda i: (i, 0, 0)),
        ],
        out_specs=(pl.BlockSpec((G, N, H), lambda i: (i, 0, 0)),
                   pl.BlockSpec((G, 2, H), lambda i: (i, 0, 0))),
        compiler_params=pltpu.CompilerParams(
            dimension_semantics=("parallel",),
            vmem_limit_bytes=vmem_limit),
    )(h, score_col, new_mask)


def mlp_head(x1, x2, x3, p):
    B = x1.shape[0]
    C = p["lin3_w"].shape[-1]
    return pl.pallas_call(
        _mlp_kernel,
        out_shape=jax.ShapeDtypeStruct((B, C), jnp.float32),
    )(x1, x2, x3, p["lin1_w"], p["lin1_b"], p["lin2_w"], p["lin2_b"],
      p["lin3_w"], p["lin3_b"])


# ------------------------------- JAX glue ------------------------------------

def topk_mask(score, mask, ratio):
    """Exact per-graph top-k (k = ceil(ratio * num_valid)) selection as a 0/1 mask.

    Rank-based selection (top_k indices -> ranks) picks exactly k nodes even on
    score ties, matching PyG SAGPool's `perm[:k]` semantics.
    """
    B, N = score.shape
    valid = mask > 0
    num_valid = jnp.sum(mask, axis=-1)
    k = jnp.ceil(ratio * num_valid).astype(jnp.int32)            # [B]
    neg = jnp.finfo(score.dtype).min
    masked = jnp.where(valid, score, neg)
    _, idx = jax.lax.top_k(masked, N)                            # [B,N] desc order
    ranks = jnp.zeros((B, N), jnp.int32).at[
        jnp.arange(B)[:, None], idx].set(
            jnp.broadcast_to(jnp.arange(N, dtype=jnp.int32)[None, :], (B, N)))
    new_mask = (ranks < k[:, None]) & valid
    return new_mask.astype(jnp.float32)


def net_forward(params, x, adj, mask, ratio):
    B, N, _ = adj.shape
    nhid = params["conv1_w"].shape[-1]
    G, vlim = _pick_block_config(B, N, max(x.shape[-1], nhid), nhid)

    # A + I built once, stored as int8 (entries exactly 0/1): halves the dominant
    # HBM stream that is re-read by all three stages; widened in-kernel.
    a_i8 = (adj + jnp.eye(N, dtype=adj.dtype)[None]).astype(jnp.int8)

    def stage(m_col, feat, cw, cb, pw, pb):
        m_row = jnp.swapaxes(m_col, 1, 2)
        wp_row = jnp.transpose(pw).reshape(1, 1, -1).astype(jnp.float32)
        h, s = gcn_stage(a_i8, m_col, m_row, feat, cw.astype(jnp.bfloat16), cb,
                         wp_row, pb.reshape(1, 1),
                         graphs_per_block=G, vmem_limit=vlim)
        s2 = s.reshape(B, N)                    # [B,1,N] -> [B,N]: metadata reshape
        m_new = topk_mask(s2, m_col[..., 0], ratio)                       # [B,N]
        h_g, r = gate_readout(h, s2[..., None], m_new[..., None],
                              graphs_per_block=G, vmem_limit=vlim)
        # r is [B,2,H] (row0 = max, row1 = mean) -> [B,2H] == cat([gmp, gap], -1)
        return h_g, m_new[..., None], r.reshape(B, -1)

    h, m1, x1 = stage(mask, x.astype(jnp.bfloat16),
                      params["conv1_w"], params["conv1_b"],
                      params["pool1_w"], params["pool1_b"])
    h, m2, x2 = stage(m1, h,
                      params["conv2_w"], params["conv2_b"],
                      params["pool2_w"], params["pool2_b"])
    h, m3, x3 = stage(m2, h,
                      params["conv3_w"], params["conv3_b"],
                      params["pool3_w"], params["pool3_b"])

    return mlp_head(x1, x2, x3, params)


def init_params(key, num_features, nhid, num_classes):
    def dense(k, fin, fout):
        kw, kb = jax.random.split(k)
        scale = 1.0 / jnp.sqrt(fin)
        w = jax.random.uniform(kw, (fin, fout), jnp.float32, -scale, scale)
        b = jax.random.uniform(kb, (1, fout), jnp.float32, -scale, scale)
        return w, b

    keys = jax.random.split(key, 9)
    p = {}
    p["conv1_w"], p["conv1_b"] = dense(keys[0], num_features, nhid)
    p["pool1_w"], p["pool1_b"] = dense(keys[1], nhid, 1)
    p["conv2_w"], p["conv2_b"] = dense(keys[2], nhid, nhid)
    p["pool2_w"], p["pool2_b"] = dense(keys[3], nhid, 1)
    p["conv3_w"], p["conv3_b"] = dense(keys[4], nhid, nhid)
    p["pool3_w"], p["pool3_b"] = dense(keys[5], nhid, 1)
    p["lin1_w"], p["lin1_b"] = dense(keys[6], 2 * nhid, nhid)
    p["lin2_w"], p["lin2_b"] = dense(keys[7], nhid, nhid // 2)
    p["lin3_w"], p["lin3_b"] = dense(keys[8], nhid // 2, num_classes)
    return p


if __name__ == "__main__":
    B, N = 2, 16                       # 2 graphs, up to 16 nodes each
    num_features, nhid, num_classes = 8, 32, 4
    pooling_ratio = 0.5

    key = jax.random.PRNGKey(0)
    kx, ka, kp = jax.random.split(key, 3)

    x = jax.random.normal(kx, (B, N, num_features), jnp.float32)

    # random undirected adjacency (symmetric, no self loops), masked to valid nodes
    upper = (jax.random.uniform(ka, (B, N, N)) < 0.3).astype(jnp.float32)
    upper = jnp.triu(upper, k=1)
    adj = upper + jnp.transpose(upper, (0, 2, 1))

    num_nodes = jnp.array([16, 12], jnp.int32)          # graph sizes
    node_ids = jnp.arange(N)[None, :]
    mask = (node_ids < num_nodes[:, None]).astype(jnp.float32)[..., None]  # [B,N,1]
    adj = adj * mask * jnp.transpose(mask, (0, 2, 1))

    params = init_params(kp, num_features, nhid, num_classes)

    fwd = jax.jit(functools.partial(net_forward, ratio=pooling_ratio))
    out = fwd(params, x, adj, mask)
    out = jax.block_until_ready(out)
    assert out.shape == (B, num_classes)
    assert bool(jnp.all(jnp.isfinite(out)))
    print("KERNEL_OK")
</pallas_src>

<mosaic_0001>
module attributes {stable_mosaic.version = 11 : i64} {
  func.func @_stage_kernel(%arg0: i32, %arg1: memref<1x16x16xi8, #tpu.memory_space<vmem>>, %arg2: memref<1x16x1xf32, #tpu.memory_space<vmem>>, %arg3: memref<1x1x16xf32, #tpu.memory_space<vmem>>, %arg4: memref<1x16x8xbf16, #tpu.memory_space<vmem>>, %arg5: memref<8x32xbf16, #tpu.memory_space<vmem>>, %arg6: memref<1x32xf32, #tpu.memory_space<vmem>>, %arg7: memref<1x1x32xf32, #tpu.memory_space<vmem>>, %arg8: memref<1x1xf32, #tpu.memory_space<vmem>>, %arg9: memref<1x16x32xbf16, #tpu.memory_space<vmem>>, %arg10: memref<1x1x16xf32, #tpu.memory_space<vmem>>) attributes {dimension_semantics = [#tpu.dimension_semantics<parallel>], iteration_bounds = array<i64: 2>, scalar_prefetch = 0 : i64, scratch_operands = 0 : i64, tpu.core_type = #tpu.core_type<tc>, window_params = [{transform_indices = @transform_0, window_bounds = array<i64: 1, 16, 16>}, {transform_indices = @transform_1, window_bounds = array<i64: 1, 16, 1>}, {transform_indices = @transform_2, window_bounds = array<i64: 1, 1, 16>}, {transform_indices = @transform_3, window_bounds = array<i64: 1, 16, 8>}, {pipeline_mode = #tpu.pipeline_mode<synchronous>, transform_indices = @transform_4, window_bounds = array<i64: 8, 32>}, {pipeline_mode = #tpu.pipeline_mode<synchronous>, transform_indices = @transform_5, window_bounds = array<i64: 1, 32>}, {pipeline_mode = #tpu.pipeline_mode<synchronous>, transform_indices = @transform_6, window_bounds = array<i64: 1, 1, 32>}, {pipeline_mode = #tpu.pipeline_mode<synchronous>, transform_indices = @transform_7, window_bounds = array<i64: 1, 1>}, {transform_indices = @transform_8, window_bounds = array<i64: 1, 16, 32>}, {transform_indices = @transform_9, window_bounds = array<i64: 1, 1, 16>}]} {
    %c0 = arith.constant 0 : index
    %c0_0 = arith.constant 0 : index
    %c0_1 = arith.constant 0 : index
    %0 = vector.load %arg1[%c0, %c0_0, %c0_1] : memref<1x16x16xi8, #tpu.memory_space<vmem>>, vector<1x16x16xi8>
    %1 = arith.sitofp %0 : vector<1x16x16xi8> to vector<1x16x16xf32>
    %2 = arith.truncf %1 : vector<1x16x16xf32> to vector<1x16x16xbf16>
    %c0_2 = arith.constant 0 : index
    %c0_3 = arith.constant 0 : index
    %c0_4 = arith.constant 0 : index
    %3 = vector.load %arg2[%c0_2, %c0_3, %c0_4] : memref<1x16x1xf32, #tpu.memory_space<vmem>>, vector<1x16x1xf32>
    %c0_5 = arith.constant 0 : index
    %c0_6 = arith.constant 0 : index
    %c0_7 = arith.constant 0 : index
    %4 = vector.load %arg3[%c0_5, %c0_6, %c0_7] : memref<1x1x16xf32, #tpu.memory_space<vmem>>, vector<1x1x16xf32>
    %5 = arith.truncf %3 : vector<1x16x1xf32> to vector<1x16x1xbf16>
    "tpu.trace_start"() <{level = 10 : i32, message = "gij,gjo->gio"}> : () -> ()
    %cst = arith.constant dense<0.000000e+00> : vector<1x16x1xf32>
    %6 = tpu.matmul %2, %5, %cst {dimension_numbers = #tpu.dot_dimension_numbers<[2], [1], [1], [2], [0, 0, 0, 1, 1, 2], [0], [0]>} : vector<1x16x16xbf16>, vector<1x16x1xbf16>, vector<1x16x1xf32> -> vector<1x16x1xf32>
    "tpu.trace_stop"() : () -> ()
    %7 = arith.mulf %6, %3 : vector<1x16x1xf32>
    %8 = arith.truncf %4 : vector<1x1x16xf32> to vector<1x1x16xbf16>
    "tpu.trace_start"() <{level = 10 : i32, message = "goj,gjn->gon"}> : () -> ()
    %cst_8 = arith.constant dense<0.000000e+00> : vector<1x1x16xf32>
    %9 = tpu.matmul %8, %2, %cst_8 {dimension_numbers = #tpu.dot_dimension_numbers<[2], [1], [1], [2], [0, 0, 0, 1, 1, 2], [0], [0]>} : vector<1x1x16xbf16>, vector<1x16x16xbf16>, vector<1x1x16xf32> -> vector<1x1x16xf32>
    "tpu.trace_stop"() : () -> ()
    %10 = arith.mulf %9, %4 : vector<1x1x16xf32>
    %cst_9 = arith.constant 0.000000e+00 : f32
    %11 = vector.broadcast %cst_9 : f32 to vector<1x16x1xf32>
    %12 = arith.cmpf ogt, %7, %11 : vector<1x16x1xf32>
    %13 = math.rsqrt %7 : vector<1x16x1xf32>
    %cst_10 = arith.constant 0.000000e+00 : f32
    %14 = vector.broadcast %cst_10 : f32 to vector<1x16x1xf32>
    %15 = arith.select %12, %13, %14 : vector<1x16x1xi1>, vector<1x16x1xf32>
    %cst_11 = arith.constant 0.000000e+00 : f32
    %16 = vector.broadcast %cst_11 : f32 to vector<1x1x16xf32>
    %17 = arith.cmpf ogt, %10, %16 : vector<1x1x16xf32>
    %18 = math.rsqrt %10 : vector<1x1x16xf32>
    %cst_12 = arith.constant 0.000000e+00 : f32
    %19 = vector.broadcast %cst_12 : f32 to vector<1x1x16xf32>
    %20 = arith.select %17, %18, %19 : vector<1x1x16xi1>, vector<1x1x16xf32>
    %c0_13 = arith.constant 0 : index
    %c0_14 = arith.constant 0 : index
    %c0_15 = arith.constant 0 : index
    %21 = vector.load %arg4[%c0_13, %c0_14, %c0_15] : memref<1x16x8xbf16, #tpu.memory_space<vmem>>, vector<1x16x8xbf16>
    %22 = vector.shape_cast %21 : vector<1x16x8xbf16> to vector<16x8xbf16>
    %c0_16 = arith.constant 0 : index
    %c0_17 = arith.constant 0 : index
    %23 = vector.load %arg5[%c0_16, %c0_17] : memref<8x32xbf16, #tpu.memory_space<vmem>>, vector<8x32xbf16>
    %cst_18 = arith.constant dense<0.000000e+00> : vector<16x32xf32>
    %24 = tpu.matmul %22, %23, %cst_18 {dimension_numbers = #tpu.dot_dimension_numbers<[1], [0], [0], [1], [0, 0, 1, 1], [], []>} : vector<16x8xbf16>, vector<8x32xbf16>, vector<16x32xf32> -> vector<16x32xf32>
    %25 = vector.shape_cast %24 : vector<16x32xf32> to vector<1x16x32xf32>
    %26 = vector.broadcast %15 : vector<1x16x1xf32> to vector<1x16x32xf32>
    %27 = arith.mulf %25, %26 : vector<1x16x32xf32>
    %28 = arith.truncf %27 : vector<1x16x32xf32> to vector<1x16x32xbf16>
    "tpu.trace_start"() <{level = 10 : i32, message = "gij,gjf->gif"}> : () -> ()
    %cst_19 = arith.constant dense<0.000000e+00> : vector<1x16x32xf32>
    %29 = tpu.matmul %2, %28, %cst_19 {dimension_numbers = #tpu.dot_dimension_numbers<[2], [1], [1], [2], [0, 0, 0, 1, 1, 2], [0], [0]>} : vector<1x16x16xbf16>, vector<1x16x32xbf16>, vector<1x16x32xf32> -> vector<1x16x32xf32>
    "tpu.trace_stop"() : () -> ()
    %30 = vector.broadcast %15 : vector<1x16x1xf32> to vector<1x16x32xf32>
    %31 = arith.mulf %29, %30 : vector<1x16x32xf32>
    %c0_20 = arith.constant 0 : index
    %c0_21 = arith.constant 0 : index
    %32 = vector.load %arg6[%c0_20, %c0_21] : memref<1x32xf32, #tpu.memory_space<vmem>>, vector<1x32xf32>
    %33 = vector.shape_cast %32 : vector<1x32xf32> to vector<1x1x32xf32>
    %34 = vector.broadcast %33 : vector<1x1x32xf32> to vector<1x16x32xf32>
    %35 = arith.addf %31, %34 : vector<1x16x32xf32>
    %cst_22 = arith.constant 0.000000e+00 : f32
    %36 = vector.broadcast %cst_22 : f32 to vector<1x16x32xf32>
    %37 = arith.maximumf %35, %36 : vector<1x16x32xf32>
    %38 = vector.broadcast %3 : vector<1x16x1xf32> to vector<1x16x32xf32>
    %39 = arith.mulf %37, %38 : vector<1x16x32xf32>
    %40 = arith.truncf %39 : vector<1x16x32xf32> to vector<1x16x32xbf16>
    %c0_23 = arith.constant 0 : index
    %c0_24 = arith.constant 0 : index
    %c0_25 = arith.constant 0 : index
    %41 = vector.load %arg9[%c0_23, %c0_24, %c0_25] : memref<1x16x32xbf16, #tpu.memory_space<vmem>>, vector<1x16x32xbf16>
    tpu.vector_store %arg9[%c0_23, %c0_24, %c0_25], %40 {strides = array<i32>} : memref<1x16x32xbf16, #tpu.memory_space<vmem>>, vector<1x16x32xbf16>,
    %c0_26 = arith.constant 0 : index
    %c0_27 = arith.constant 0 : index
    %c0_28 = arith.constant 0 : index
    %42 = vector.load %arg7[%c0_26, %c0_27, %c0_28] : memref<1x1x32xf32, #tpu.memory_space<vmem>>, vector<1x1x32xf32>
    %43 = arith.truncf %42 : vector<1x1x32xf32> to vector<1x1x32xbf16>
    "tpu.trace_start"() <{level = 10 : i32, message = "gof,gnf->gon"}> : () -> ()
    %cst_29 = arith.constant dense<0.000000e+00> : vector<1x1x16xf32>
    %44 = tpu.matmul %43, %40, %cst_29 {dimension_numbers = #tpu.dot_dimension_numbers<[2], [2], [1], [1], [0, 0, 0, 1, 1, 1], [0], [0]>} : vector<1x1x32xbf16>, vector<1x16x32xbf16>, vector<1x1x16xf32> -> vector<1x1x16xf32>
    "tpu.trace_stop"() : () -> ()
    %45 = arith.mulf %44, %20 : vector<1x1x16xf32>
    %46 = arith.truncf %45 : vector<1x1x16xf32> to vector<1x1x16xbf16>
    "tpu.trace_start"() <{level = 10 : i32, message = "goj,gjn->gon"}> : () -> ()
    %cst_30 = arith.constant dense<0.000000e+00> : vector<1x1x16xf32>
    %47 = tpu.matmul %46, %2, %cst_30 {dimension_numbers = #tpu.dot_dimension_numbers<[2], [1], [1], [2], [0, 0, 0, 1, 1, 2], [0], [0]>} : vector<1x1x16xbf16>, vector<1x16x16xbf16>, vector<1x1x16xf32> -> vector<1x1x16xf32>
    "tpu.trace_stop"() : () -> ()
    %48 = arith.mulf %47, %20 : vector<1x1x16xf32>
    %c0_31 = arith.constant 0 : index
    %c0_32 = arith.constant 0 : index
    %49 = vector.load %arg8[%c0_31, %c0_32] : memref<1x1xf32, #tpu.memory_space<vmem>>, vector<1x1xf32>
    %50 = vector.shape_cast %49 : vector<1x1xf32> to vector<1x1x1xf32>
    %51 = vector.broadcast %50 : vector<1x1x1xf32> to vector<1x1x16xf32>
    %52 = arith.addf %48, %51 : vector<1x1x16xf32>
    %c0_33 = arith.constant 0 : index
    %c0_34 = arith.constant 0 : index
    %c0_35 = arith.constant 0 : index
    %53 = vector.load %arg10[%c0_33, %c0_34, %c0_35] : memref<1x1x16xf32, #tpu.memory_space<vmem>>, vector<1x1x16xf32>
    tpu.vector_store %arg10[%c0_33, %c0_34, %c0_35], %52 {strides = array<i32>} : memref<1x1x16xf32, #tpu.memory_space<vmem>>, vector<1x1x16xf32>,
    return
  }
  func.func @transform_0(%arg0: i32) -> (i32, i32, i32) {
    %c0_i32 = arith.constant 0 : i32
    %c0_i32_0 = arith.constant 0 : i32
    %c0_i32_1 = arith.constant 0 : i32
    return %arg0, %c0_i32, %c0_i32_0 : i32, i32, i32
  }
  func.func @transform_1(%arg0: i32) -> (i32, i32, i32) {
    %c0_i32 = arith.constant 0 : i32
    %c0_i32_0 = arith.constant 0 : i32
    %c0_i32_1 = arith.constant 0 : i32
    return %arg0, %c0_i32, %c0_i32_0 : i32, i32, i32
  }
  func.func @transform_2(%arg0: i32) -> (i32, i32, i32) {
    %c0_i32 = arith.constant 0 : i32
    %c0_i32_0 = arith.constant 0 : i32
    %c0_i32_1 = arith.constant 0 : i32
    return %arg0, %c0_i32, %c0_i32_0 : i32, i32, i32
  }
  func.func @transform_3(%arg0: i32) -> (i32, i32, i32) {
    %c0_i32 = arith.constant 0 : i32
    %c0_i32_0 = arith.constant 0 : i32
    %c0_i32_1 = arith.constant 0 : i32
    return %arg0, %c0_i32, %c0_i32_0 : i32, i32, i32
  }
  func.func @transform_4(%arg0: i32) -> (i32, i32) {
    %c0_i32 = arith.constant 0 : i32
    %c0_i32_0 = arith.constant 0 : i32
    %c0_i32_1 = arith.constant 0 : i32
    return %c0_i32, %c0_i32_0 : i32, i32
  }
  func.func @transform_5(%arg0: i32) -> (i32, i32) {
    %c0_i32 = arith.constant 0 : i32
    %c0_i32_0 = arith.constant 0 : i32
    %c0_i32_1 = arith.constant 0 : i32
    return %c0_i32, %c0_i32_0 : i32, i32
  }
  func.func @transform_6(%arg0: i32) -> (i32, i32, i32) {
    %c0_i32 = arith.constant 0 : i32
    %c0_i32_0 = arith.constant 0 : i32
    %c0_i32_1 = arith.constant 0 : i32
    %c0_i32_2 = arith.constant 0 : i32
    return %c0_i32, %c0_i32_0, %c0_i32_1 : i32, i32, i32
  }
  func.func @transform_7(%arg0: i32) -> (i32, i32) {
    %c0_i32 = arith.constant 0 : i32
    %c0_i32_0 = arith.constant 0 : i32
    %c0_i32_1 = arith.constant 0 : i32
    return %c0_i32, %c0_i32_0 : i32, i32
  }
  func.func @transform_8(%arg0: i32) -> (i32, i32, i32) {
    %c0_i32 = arith.constant 0 : i32
    %c0_i32_0 = arith.constant 0 : i32
    %c0_i32_1 = arith.constant 0 : i32
    return %arg0, %c0_i32, %c0_i32_0 : i32, i32, i32
  }
  func.func @transform_9(%arg0: i32) -> (i32, i32, i32) {
    %c0_i32 = arith.constant 0 : i32
    %c0_i32_0 = arith.constant 0 : i32
    %c0_i32_1 = arith.constant 0 : i32
    return %arg0, %c0_i32, %c0_i32_0 : i32, i32, i32
  }
}

module attributes {stable_mosaic.version = 11 : i64} {
  func.func @_gate_readout_kernel(%arg0: i32, %arg1: memref<1x16x32xbf16, #tpu.memory_space<vmem>>, %arg2: memref<1x16x1xf32, #tpu.memory_space<vmem>>, %arg3: memref<1x16x1xf32, #tpu.memory_space<vmem>>, %arg4: memref<1x16x32xbf16, #tpu.memory_space<vmem>>, %arg5: memref<1x2x32xf32, #tpu.memory_space<vmem>>) attributes {dimension_semantics = [#tpu.dimension_semantics<parallel>], iteration_bounds = array<i64: 2>, scalar_prefetch = 0 : i64, scratch_operands = 0 : i64, tpu.core_type = #tpu.core_type<tc>, window_params = [{transform_indices = @transform_0, window_bounds = array<i64: 1, 16, 32>}, {transform_indices = @transform_1, window_bounds = array<i64: 1, 16, 1>}, {transform_indices = @transform_2, window_bounds = array<i64: 1, 16, 1>}, {transform_indices = @transform_3, window_bounds = array<i64: 1, 16, 32>}, {transform_indices = @transform_4, window_bounds = array<i64: 1, 2, 32>}]} {
    %c0 = arith.constant 0 : index
    %c0_0 = arith.constant 0 : index
    %c0_1 = arith.constant 0 : index
    %0 = vector.load %arg1[%c0, %c0_0, %c0_1] : memref<1x16x32xbf16, #tpu.memory_space<vmem>>, vector<1x16x32xbf16>
    %1 = arith.extf %0 : vector<1x16x32xbf16> to vector<1x16x32xf32>
    %c0_2 = arith.constant 0 : index
    %c0_3 = arith.constant 0 : index
    %c0_4 = arith.constant 0 : index
    %2 = vector.load %arg2[%c0_2, %c0_3, %c0_4] : memref<1x16x1xf32, #tpu.memory_space<vmem>>, vector<1x16x1xf32>
    %c0_5 = arith.constant 0 : index
    %c0_6 = arith.constant 0 : index
    %c0_7 = arith.constant 0 : index
    %3 = vector.load %arg3[%c0_5, %c0_6, %c0_7] : memref<1x16x1xf32, #tpu.memory_space<vmem>>, vector<1x16x1xf32>
    %4 = math.tanh %2 : vector<1x16x1xf32>
    %5 = arith.mulf %4, %3 : vector<1x16x1xf32>
    %6 = vector.broadcast %5 : vector<1x16x1xf32> to vector<1x16x32xf32>
    %7 = arith.mulf %1, %6 : vector<1x16x32xf32>
    %8 = arith.truncf %7 : vector<1x16x32xf32> to vector<1x16x32xbf16>
    %c0_8 = arith.constant 0 : index
    %c0_9 = arith.constant 0 : index
    %c0_10 = arith.constant 0 : index
    %9 = vector.load %arg4[%c0_8, %c0_9, %c0_10] : memref<1x16x32xbf16, #tpu.memory_space<vmem>>, vector<1x16x32xbf16>
    tpu.vector_store %arg4[%c0_8, %c0_9, %c0_10], %8 {strides = array<i32>} : memref<1x16x32xbf16, #tpu.memory_space<vmem>>, vector<1x16x32xbf16>,
    %cst = arith.constant dense<0.000000e+00> : vector<1x1xf32>
    %10 = vector.multi_reduction <add>, %3, %cst [1] : vector<1x16x1xf32> to vector<1x1xf32>
    %11 = vector.shape_cast %10 : vector<1x1xf32> to vector<1x1x1xf32>
    %cst_11 = arith.constant 0.000000e+00 : f32
    %12 = vector.broadcast %cst_11 : f32 to vector<1x16x1xf32>
    %13 = arith.cmpf ogt, %3, %12 : vector<1x16x1xf32>
    %cst_12 = arith.constant -3.40282347E+38 : f32
    %14 = vector.shape_cast %13 : vector<1x16x1xi1> to vector<1x16x1xi1>
    %15 = vector.broadcast %14 : vector<1x16x1xi1> to vector<1x16x32xi1>
    %16 = vector.broadcast %cst_12 : f32 to vector<1x16x32xf32>
    %17 = arith.select %15, %7, %16 : vector<1x16x32xi1>, vector<1x16x32xf32>
    %cst_13 = arith.constant dense<0xFF800000> : vector<1x32xf32>
    %18 = vector.multi_reduction <maximumf>, %17, %cst_13 [1] : vector<1x16x32xf32> to vector<1x32xf32>
    %19 = vector.shape_cast %18 : vector<1x32xf32> to vector<1x1x32xf32>
    %cst_14 = arith.constant 0.000000e+00 : f32
    %20 = vector.broadcast %cst_14 : f32 to vector<1x1x1xf32>
    %21 = arith.cmpf ogt, %11, %20 : vector<1x1x1xf32>
    %cst_15 = arith.constant 0.000000e+00 : f32
    %22 = vector.shape_cast %21 : vector<1x1x1xi1> to vector<1x1x1xi1>
    %23 = vector.broadcast %22 : vector<1x1x1xi1> to vector<1x1x32xi1>
    %24 = vector.broadcast %cst_15 : f32 to vector<1x1x32xf32>
    %25 = arith.select %23, %19, %24 : vector<1x1x32xi1>, vector<1x1x32xf32>
    %cst_16 = arith.constant dense<0.000000e+00> : vector<1x32xf32>
    %26 = vector.multi_reduction <add>, %7, %cst_16 [1] : vector<1x16x32xf32> to vector<1x32xf32>
    %27 = vector.shape_cast %26 : vector<1x32xf32> to vector<1x1x32xf32>
    %cst_17 = arith.constant 1.000000e+00 : f32
    %28 = vector.broadcast %cst_17 : f32 to vector<1x1x1xf32>
    %29 = arith.maximumf %11, %28 : vector<1x1x1xf32>
    %30 = vector.broadcast %29 : vector<1x1x1xf32> to vector<1x1x32xf32>
    %31 = arith.divf %27, %30 : vector<1x1x32xf32>
    %c0_18 = arith.constant 0 : index
    %c0_19 = arith.constant 0 : index
    %c0_20 = arith.constant 0 : index
    %32 = vector.load %arg5[%c0_18, %c0_19, %c0_20] : memref<1x2x32xf32, #tpu.memory_space<vmem>>, vector<1x1x32xf32>
    tpu.vector_store %arg5[%c0_18, %c0_19, %c0_20], %25 {strides = array<i32>} : memref<1x2x32xf32, #tpu.memory_space<vmem>>, vector<1x1x32xf32>,
    %c0_21 = arith.constant 0 : index
    %c1 = arith.constant 1 : index
    %c0_22 = arith.constant 0 : index
    %33 = vector.load %arg5[%c0_21, %c1, %c0_22] : memref<1x2x32xf32, #tpu.memory_space<vmem>>, vector<1x1x32xf32>
    tpu.vector_store %arg5[%c0_21, %c1, %c0_22], %31 {strides = array<i32>} : memref<1x2x32xf32, #tpu.memory_space<vmem>>, vector<1x1x32xf32>,
    return
  }
  func.func @transform_0(%arg0: i32) -> (i32, i32, i32) {
    %c0_i32 = arith.constant 0 : i32
    %c0_i32_0 = arith.constant 0 : i32
    %c0_i32_1 = arith.constant 0 : i32
    return %arg0, %c0_i32, %c0_i32_0 : i32, i32, i32
  }
  func.func @transform_1(%arg0: i32) -> (i32, i32, i32) {
    %c0_i32 = arith.constant 0 : i32
    %c0_i32_0 = arith.constant 0 : i32
    %c0_i32_1 = arith.constant 0 : i32
    return %arg0, %c0_i32, %c0_i32_0 : i32, i32, i32
  }
  func.func @transform_2(%arg0: i32) -> (i32, i32, i32) {
    %c0_i32 = arith.constant 0 : i32
    %c0_i32_0 = arith.constant 0 : i32
    %c0_i32_1 = arith.constant 0 : i32
    return %arg0, %c0_i32, %c0_i32_0 : i32, i32, i32
  }
  func.func @transform_3(%arg0: i32) -> (i32, i32, i32) {
    %c0_i32 = arith.constant 0 : i32
    %c0_i32_0 = arith.constant 0 : i32
    %c0_i32_1 = arith.constant 0 : i32
    return %arg0, %c0_i32, %c0_i32_0 : i32, i32, i32
  }
  func.func @transform_4(%arg0: i32) -> (i32, i32, i32) {
    %c0_i32 = arith.constant 0 : i32
    %c0_i32_0 = arith.constant 0 : i32
    %c0_i32_1 = arith.constant 0 : i32
    return %arg0, %c0_i32, %c0_i32_0 : i32, i32, i32
  }
}

module attributes {stable_mosaic.version = 11 : i64} {
  func.func @_stage_kernel(%arg0: i32, %arg1: memref<1x16x16xi8, #tpu.memory_space<vmem>>, %arg2: memref<1x16x1xf32, #tpu.memory_space<vmem>>, %arg3: memref<1x1x16xf32, #tpu.memory_space<vmem>>, %arg4: memref<1x16x32xbf16, #tpu.memory_space<vmem>>, %arg5: memref<32x32xbf16, #tpu.memory_space<vmem>>, %arg6: memref<1x32xf32, #tpu.memory_space<vmem>>, %arg7: memref<1x1x32xf32, #tpu.memory_space<vmem>>, %arg8: memref<1x1xf32, #tpu.memory_space<vmem>>, %arg9: memref<1x16x32xbf16, #tpu.memory_space<vmem>>, %arg10: memref<1x1x16xf32, #tpu.memory_space<vmem>>) attributes {dimension_semantics = [#tpu.dimension_semantics<parallel>], iteration_bounds = array<i64: 2>, scalar_prefetch = 0 : i64, scratch_operands = 0 : i64, tpu.core_type = #tpu.core_type<tc>, window_params = [{transform_indices = @transform_0, window_bounds = array<i64: 1, 16, 16>}, {transform_indices = @transform_1, window_bounds = array<i64: 1, 16, 1>}, {transform_indices = @transform_2, window_bounds = array<i64: 1, 1, 16>}, {transform_indices = @transform_3, window_bounds = array<i64: 1, 16, 32>}, {pipeline_mode = #tpu.pipeline_mode<synchronous>, transform_indices = @transform_4, window_bounds = array<i64: 32, 32>}, {pipeline_mode = #tpu.pipeline_mode<synchronous>, transform_indices = @transform_5, window_bounds = array<i64: 1, 32>}, {pipeline_mode = #tpu.pipeline_mode<synchronous>, transform_indices = @transform_6, window_bounds = array<i64: 1, 1, 32>}, {pipeline_mode = #tpu.pipeline_mode<synchronous>, transform_indices = @transform_7, window_bounds = array<i64: 1, 1>}, {transform_indices = @transform_8, window_bounds = array<i64: 1, 16, 32>}, {transform_indices = @transform_9, window_bounds = array<i64: 1, 1, 16>}]} {
    %c0 = arith.constant 0 : index
    %c0_0 = arith.constant 0 : index
    %c0_1 = arith.constant 0 : index
    %0 = vector.load %arg1[%c0, %c0_0, %c0_1] : memref<1x16x16xi8, #tpu.memory_space<vmem>>, vector<1x16x16xi8>
    %1 = arith.sitofp %0 : vector<1x16x16xi8> to vector<1x16x16xf32>
    %2 = arith.truncf %1 : vector<1x16x16xf32> to vector<1x16x16xbf16>
    %c0_2 = arith.constant 0 : index
    %c0_3 = arith.constant 0 : index
    %c0_4 = arith.constant 0 : index
    %3 = vector.load %arg2[%c0_2, %c0_3, %c0_4] : memref<1x16x1xf32, #tpu.memory_space<vmem>>, vector<1x16x1xf32>
    %c0_5 = arith.constant 0 : index
    %c0_6 = arith.constant 0 : index
    %c0_7 = arith.constant 0 : index
    %4 = vector.load %arg3[%c0_5, %c0_6, %c0_7] : memref<1x1x16xf32, #tpu.memory_space<vmem>>, vector<1x1x16xf32>
    %5 = arith.truncf %3 : vector<1x16x1xf32> to vector<1x16x1xbf16>
    "tpu.trace_start"() <{level = 10 : i32, message = "gij,gjo->gio"}> : () -> ()
    %cst = arith.constant dense<0.000000e+00> : vector<1x16x1xf32>
    %6 = tpu.matmul %2, %5, %cst {dimension_numbers = #tpu.dot_dimension_numbers<[2], [1], [1], [2], [0, 0, 0, 1, 1, 2], [0], [0]>} : vector<1x16x16xbf16>, vector<1x16x1xbf16>, vector<1x16x1xf32> -> vector<1x16x1xf32>
    "tpu.trace_stop"() : () -> ()
    %7 = arith.mulf %6, %3 : vector<1x16x1xf32>
    %8 = arith.truncf %4 : vector<1x1x16xf32> to vector<1x1x16xbf16>
    "tpu.trace_start"() <{level = 10 : i32, message = "goj,gjn->gon"}> : () -> ()
    %cst_8 = arith.constant dense<0.000000e+00> : vector<1x1x16xf32>
    %9 = tpu.matmul %8, %2, %cst_8 {dimension_numbers = #tpu.dot_dimension_numbers<[2], [1], [1], [2], [0, 0, 0, 1, 1, 2], [0], [0]>} : vector<1x1x16xbf16>, vector<1x16x16xbf16>, vector<1x1x16xf32> -> vector<1x1x16xf32>
    "tpu.trace_stop"() : () -> ()
    %10 = arith.mulf %9, %4 : vector<1x1x16xf32>
    %cst_9 = arith.constant 0.000000e+00 : f32
    %11 = vector.broadcast %cst_9 : f32 to vector<1x16x1xf32>
    %12 = arith.cmpf ogt, %7, %11 : vector<1x16x1xf32>
    %13 = math.rsqrt %7 : vector<1x16x1xf32>
    %cst_10 = arith.constant 0.000000e+00 : f32
    %14 = vector.broadcast %cst_10 : f32 to vector<1x16x1xf32>
    %15 = arith.select %12, %13, %14 : vector<1x16x1xi1>, vector<1x16x1xf32>
    %cst_11 = arith.constant 0.000000e+00 : f32
    %16 = vector.broadcast %cst_11 : f32 to vector<1x1x16xf32>
    %17 = arith.cmpf ogt, %10, %16 : vector<1x1x16xf32>
    %18 = math.rsqrt %10 : vector<1x1x16xf32>
    %cst_12 = arith.constant 0.000000e+00 : f32
    %19 = vector.broadcast %cst_12 : f32 to vector<1x1x16xf32>
    %20 = arith.select %17, %18, %19 : vector<1x1x16xi1>, vector<1x1x16xf32>
    %c0_13 = arith.constant 0 : index
    %c0_14 = arith.constant 0 : index
    %c0_15 = arith.constant 0 : index
    %21 = vector.load %arg4[%c0_13, %c0_14, %c0_15] : memref<1x16x32xbf16, #tpu.memory_space<vmem>>, vector<1x16x32xbf16>
    %22 = vector.shape_cast %21 : vector<1x16x32xbf16> to vector<16x32xbf16>
    %c0_16 = arith.constant 0 : index
    %c0_17 = arith.constant 0 : index
    %23 = vector.load %arg5[%c0_16, %c0_17] : memref<32x32xbf16, #tpu.memory_space<vmem>>, vector<32x32xbf16>
    %cst_18 = arith.constant dense<0.000000e+00> : vector<16x32xf32>
    %24 = tpu.matmul %22, %23, %cst_18 {dimension_numbers = #tpu.dot_dimension_numbers<[1], [0], [0], [1], [0, 0, 1, 1], [], []>} : vector<16x32xbf16>, vector<32x32xbf16>, vector<16x32xf32> -> vector<16x32xf32>
    %25 = vector.shape_cast %24 : vector<16x32xf32> to vector<1x16x32xf32>
    %26 = vector.broadcast %15 : vector<1x16x1xf32> to vector<1x16x32xf32>
    %27 = arith.mulf %25, %26 : vector<1x16x32xf32>
    %28 = arith.truncf %27 : vector<1x16x32xf32> to vector<1x16x32xbf16>
    "tpu.trace_start"() <{level = 10 : i32, message = "gij,gjf->gif"}> : () -> ()
    %cst_19 = arith.constant dense<0.000000e+00> : vector<1x16x32xf32>
    %29 = tpu.matmul %2, %28, %cst_19 {dimension_numbers = #tpu.dot_dimension_numbers<[2], [1], [1], [2], [0, 0, 0, 1, 1, 2], [0], [0]>} : vector<1x16x16xbf16>, vector<1x16x32xbf16>, vector<1x16x32xf32> -> vector<1x16x32xf32>
    "tpu.trace_stop"() : () -> ()
    %30 = vector.broadcast %15 : vector<1x16x1xf32> to vector<1x16x32xf32>
    %31 = arith.mulf %29, %30 : vector<1x16x32xf32>
    %c0_20 = arith.constant 0 : index
    %c0_21 = arith.constant 0 : index
    %32 = vector.load %arg6[%c0_20, %c0_21] : memref<1x32xf32, #tpu.memory_space<vmem>>, vector<1x32xf32>
    %33 = vector.shape_cast %32 : vector<1x32xf32> to vector<1x1x32xf32>
    %34 = vector.broadcast %33 : vector<1x1x32xf32> to vector<1x16x32xf32>
    %35 = arith.addf %31, %34 : vector<1x16x32xf32>
    %cst_22 = arith.constant 0.000000e+00 : f32
    %36 = vector.broadcast %cst_22 : f32 to vector<1x16x32xf32>
    %37 = arith.maximumf %35, %36 : vector<1x16x32xf32>
    %38 = vector.broadcast %3 : vector<1x16x1xf32> to vector<1x16x32xf32>
    %39 = arith.mulf %37, %38 : vector<1x16x32xf32>
    %40 = arith.truncf %39 : vector<1x16x32xf32> to vector<1x16x32xbf16>
    %c0_23 = arith.constant 0 : index
    %c0_24 = arith.constant 0 : index
    %c0_25 = arith.constant 0 : index
    %41 = vector.load %arg9[%c0_23, %c0_24, %c0_25] : memref<1x16x32xbf16, #tpu.memory_space<vmem>>, vector<1x16x32xbf16>
    tpu.vector_store %arg9[%c0_23, %c0_24, %c0_25], %40 {strides = array<i32>} : memref<1x16x32xbf16, #tpu.memory_space<vmem>>, vector<1x16x32xbf16>,
    %c0_26 = arith.constant 0 : index
    %c0_27 = arith.constant 0 : index
    %c0_28 = arith.constant 0 : index
    %42 = vector.load %arg7[%c0_26, %c0_27, %c0_28] : memref<1x1x32xf32, #tpu.memory_space<vmem>>, vector<1x1x32xf32>
    %43 = arith.truncf %42 : vector<1x1x32xf32> to vector<1x1x32xbf16>
    "tpu.trace_start"() <{level = 10 : i32, message = "gof,gnf->gon"}> : () -> ()
    %cst_29 = arith.constant dense<0.000000e+00> : vector<1x1x16xf32>
    %44 = tpu.matmul %43, %40, %cst_29 {dimension_numbers = #tpu.dot_dimension_numbers<[2], [2], [1], [1], [0, 0, 0, 1, 1, 1], [0], [0]>} : vector<1x1x32xbf16>, vector<1x16x32xbf16>, vector<1x1x16xf32> -> vector<1x1x16xf32>
    "tpu.trace_stop"() : () -> ()
    %45 = arith.mulf %44, %20 : vector<1x1x16xf32>
    %46 = arith.truncf %45 : vector<1x1x16xf32> to vector<1x1x16xbf16>
    "tpu.trace_start"() <{level = 10 : i32, message = "goj,gjn->gon"}> : () -> ()
    %cst_30 = arith.constant dense<0.000000e+00> : vector<1x1x16xf32>
    %47 = tpu.matmul %46, %2, %cst_30 {dimension_numbers = #tpu.dot_dimension_numbers<[2], [1], [1], [2], [0, 0, 0, 1, 1, 2], [0], [0]>} : vector<1x1x16xbf16>, vector<1x16x16xbf16>, vector<1x1x16xf32> -> vector<1x1x16xf32>
    "tpu.trace_stop"() : () -> ()
    %48 = arith.mulf %47, %20 : vector<1x1x16xf32>
    %c0_31 = arith.constant 0 : index
    %c0_32 = arith.constant 0 : index
    %49 = vector.load %arg8[%c0_31, %c0_32] : memref<1x1xf32, #tpu.memory_space<vmem>>, vector<1x1xf32>
    %50 = vector.shape_cast %49 : vector<1x1xf32> to vector<1x1x1xf32>
    %51 = vector.broadcast %50 : vector<1x1x1xf32> to vector<1x1x16xf32>
    %52 = arith.addf %48, %51 : vector<1x1x16xf32>
    %c0_33 = arith.constant 0 : index
    %c0_34 = arith.constant 0 : index
    %c0_35 = arith.constant 0 : index
    %53 = vector.load %arg10[%c0_33, %c0_34, %c0_35] : memref<1x1x16xf32, #tpu.memory_space<vmem>>, vector<1x1x16xf32>
    tpu.vector_store %arg10[%c0_33, %c0_34, %c0_35], %52 {strides = array<i32>} : memref<1x1x16xf32, #tpu.memory_space<vmem>>, vector<1x1x16xf32>,
    return
  }
  func.func @transform_0(%arg0: i32) -> (i32, i32, i32) {
    %c0_i32 = arith.constant 0 : i32
    %c0_i32_0 = arith.constant 0 : i32
    %c0_i32_1 = arith.constant 0 : i32
    return %arg0, %c0_i32, %c0_i32_0 : i32, i32, i32
  }
  func.func @transform_1(%arg0: i32) -> (i32, i32, i32) {
    %c0_i32 = arith.constant 0 : i32
    %c0_i32_0 = arith.constant 0 : i32
    %c0_i32_1 = arith.constant 0 : i32
    return %arg0, %c0_i32, %c0_i32_0 : i32, i32, i32
  }
  func.func @transform_2(%arg0: i32) -> (i32, i32, i32) {
    %c0_i32 = arith.constant 0 : i32
    %c0_i32_0 = arith.constant 0 : i32
    %c0_i32_1 = arith.constant 0 : i32
    return %arg0, %c0_i32, %c0_i32_0 : i32, i32, i32
  }
  func.func @transform_3(%arg0: i32) -> (i32, i32, i32) {
    %c0_i32 = arith.constant 0 : i32
    %c0_i32_0 = arith.constant 0 : i32
    %c0_i32_1 = arith.constant 0 : i32
    return %arg0, %c0_i32, %c0_i32_0 : i32, i32, i32
  }
  func.func @transform_4(%arg0: i32) -> (i32, i32) {
    %c0_i32 = arith.constant 0 : i32
    %c0_i32_0 = arith.constant 0 : i32
    %c0_i32_1 = arith.constant 0 : i32
    return %c0_i32, %c0_i32_0 : i32, i32
  }
  func.func @transform_5(%arg0: i32) -> (i32, i32) {
    %c0_i32 = arith.constant 0 : i32
    %c0_i32_0 = arith.constant 0 : i32
    %c0_i32_1 = arith.constant 0 : i32
    return %c0_i32, %c0_i32_0 : i32, i32
  }
  func.func @transform_6(%arg0: i32) -> (i32, i32, i32) {
    %c0_i32 = arith.constant 0 : i32
    %c0_i32_0 = arith.constant 0 : i32
    %c0_i32_1 = arith.constant 0 : i32
    %c0_i32_2 = arith.constant 0 : i32
    return %c0_i32, %c0_i32_0, %c0_i32_1 : i32, i32, i32
  }
  func.func @transform_7(%arg0: i32) -> (i32, i32) {
    %c0_i32 = arith.constant 0 : i32
    %c0_i32_0 = arith.constant 0 : i32
    %c0_i32_1 = arith.constant 0 : i32
    return %c0_i32, %c0_i32_0 : i32, i32
  }
  func.func @transform_8(%arg0: i32) -> (i32, i32, i32) {
    %c0_i32 = arith.constant 0 : i32
    %c0_i32_0 = arith.constant 0 : i32
    %c0_i32_1 = arith.constant 0 : i32
    return %arg0, %c0_i32, %c0_i32_0 : i32, i32, i32
  }
  func.func @transform_9(%arg0: i32) -> (i32, i32, i32) {
    %c0_i32 = arith.constant 0 : i32
    %c0_i32_0 = arith.constant 0 : i32
    %c0_i32_1 = arith.constant 0 : i32
    return %arg0, %c0_i32, %c0_i32_0 : i32, i32, i32
  }
}

module attributes {stable_mosaic.version = 11 : i64} {
  func.func @_gate_readout_kernel(%arg0: i32, %arg1: memref<1x16x32xbf16, #tpu.memory_space<vmem>>, %arg2: memref<1x16x1xf32, #tpu.memory_space<vmem>>, %arg3: memref<1x16x1xf32, #tpu.memory_space<vmem>>, %arg4: memref<1x16x32xbf16, #tpu.memory_space<vmem>>, %arg5: memref<1x2x32xf32, #tpu.memory_space<vmem>>) attributes {dimension_semantics = [#tpu.dimension_semantics<parallel>], iteration_bounds = array<i64: 2>, scalar_prefetch = 0 : i64, scratch_operands = 0 : i64, tpu.core_type = #tpu.core_type<tc>, window_params = [{transform_indices = @transform_0, window_bounds = array<i64: 1, 16, 32>}, {transform_indices = @transform_1, window_bounds = array<i64: 1, 16, 1>}, {transform_indices = @transform_2, window_bounds = array<i64: 1, 16, 1>}, {transform_indices = @transform_3, window_bounds = array<i64: 1, 16, 32>}, {transform_indices = @transform_4, window_bounds = array<i64: 1, 2, 32>}]} {
    %c0 = arith.constant 0 : index
    %c0_0 = arith.constant 0 : index
    %c0_1 = arith.constant 0 : index
    %0 = vector.load %arg1[%c0, %c0_0, %c0_1] : memref<1x16x32xbf16, #tpu.memory_space<vmem>>, vector<1x16x32xbf16>
    %1 = arith.extf %0 : vector<1x16x32xbf16> to vector<1x16x32xf32>
    %c0_2 = arith.constant 0 : index
    %c0_3 = arith.constant 0 : index
    %c0_4 = arith.constant 0 : index
    %2 = vector.load %arg2[%c0_2, %c0_3, %c0_4] : memref<1x16x1xf32, #tpu.memory_space<vmem>>, vector<1x16x1xf32>
    %c0_5 = arith.constant 0 : index
    %c0_6 = arith.constant 0 : index
    %c0_7 = arith.constant 0 : index
    %3 = vector.load %arg3[%c0_5, %c0_6, %c0_7] : memref<1x16x1xf32, #tpu.memory_space<vmem>>, vector<1x16x1xf32>
    %4 = math.tanh %2 : vector<1x16x1xf32>
    %5 = arith.mulf %4, %3 : vector<1x16x1xf32>
    %6 = vector.broadcast %5 : vector<1x16x1xf32> to vector<1x16x32xf32>
    %7 = arith.mulf %1, %6 : vector<1x16x32xf32>
    %8 = arith.truncf %7 : vector<1x16x32xf32> to vector<1x16x32xbf16>
    %c0_8 = arith.constant 0 : index
    %c0_9 = arith.constant 0 : index
    %c0_10 = arith.constant 0 : index
    %9 = vector.load %arg4[%c0_8, %c0_9, %c0_10] : memref<1x16x32xbf16, #tpu.memory_space<vmem>>, vector<1x16x32xbf16>
    tpu.vector_store %arg4[%c0_8, %c0_9, %c0_10], %8 {strides = array<i32>} : memref<1x16x32xbf16, #tpu.memory_space<vmem>>, vector<1x16x32xbf16>,
    %cst = arith.constant dense<0.000000e+00> : vector<1x1xf32>
    %10 = vector.multi_reduction <add>, %3, %cst [1] : vector<1x16x1xf32> to vector<1x1xf32>
    %11 = vector.shape_cast %10 : vector<1x1xf32> to vector<1x1x1xf32>
    %cst_11 = arith.constant 0.000000e+00 : f32
    %12 = vector.broadcast %cst_11 : f32 to vector<1x16x1xf32>
    %13 = arith.cmpf ogt, %3, %12 : vector<1x16x1xf32>
    %cst_12 = arith.constant -3.40282347E+38 : f32
    %14 = vector.shape_cast %13 : vector<1x16x1xi1> to vector<1x16x1xi1>
    %15 = vector.broadcast %14 : vector<1x16x1xi1> to vector<1x16x32xi1>
    %16 = vector.broadcast %cst_12 : f32 to vector<1x16x32xf32>
    %17 = arith.select %15, %7, %16 : vector<1x16x32xi1>, vector<1x16x32xf32>
    %cst_13 = arith.constant dense<0xFF800000> : vector<1x32xf32>
    %18 = vector.multi_reduction <maximumf>, %17, %cst_13 [1] : vector<1x16x32xf32> to vector<1x32xf32>
    %19 = vector.shape_cast %18 : vector<1x32xf32> to vector<1x1x32xf32>
    %cst_14 = arith.constant 0.000000e+00 : f32
    %20 = vector.broadcast %cst_14 : f32 to vector<1x1x1xf32>
    %21 = arith.cmpf ogt, %11, %20 : vector<1x1x1xf32>
    %cst_15 = arith.constant 0.000000e+00 : f32
    %22 = vector.shape_cast %21 : vector<1x1x1xi1> to vector<1x1x1xi1>
    %23 = vector.broadcast %22 : vector<1x1x1xi1> to vector<1x1x32xi1>
    %24 = vector.broadcast %cst_15 : f32 to vector<1x1x32xf32>
    %25 = arith.select %23, %19, %24 : vector<1x1x32xi1>, vector<1x1x32xf32>
    %cst_16 = arith.constant dense<0.000000e+00> : vector<1x32xf32>
    %26 = vector.multi_reduction <add>, %7, %cst_16 [1] : vector<1x16x32xf32> to vector<1x32xf32>
    %27 = vector.shape_cast %26 : vector<1x32xf32> to vector<1x1x32xf32>
    %cst_17 = arith.constant 1.000000e+00 : f32
    %28 = vector.broadcast %cst_17 : f32 to vector<1x1x1xf32>
    %29 = arith.maximumf %11, %28 : vector<1x1x1xf32>
    %30 = vector.broadcast %29 : vector<1x1x1xf32> to vector<1x1x32xf32>
    %31 = arith.divf %27, %30 : vector<1x1x32xf32>
    %c0_18 = arith.constant 0 : index
    %c0_19 = arith.constant 0 : index
    %c0_20 = arith.constant 0 : index
    %32 = vector.load %arg5[%c0_18, %c0_19, %c0_20] : memref<1x2x32xf32, #tpu.memory_space<vmem>>, vector<1x1x32xf32>
    tpu.vector_store %arg5[%c0_18, %c0_19, %c0_20], %25 {strides = array<i32>} : memref<1x2x32xf32, #tpu.memory_space<vmem>>, vector<1x1x32xf32>,
    %c0_21 = arith.constant 0 : index
    %c1 = arith.constant 1 : index
    %c0_22 = arith.constant 0 : index
    %33 = vector.load %arg5[%c0_21, %c1, %c0_22] : memref<1x2x32xf32, #tpu.memory_space<vmem>>, vector<1x1x32xf32>
    tpu.vector_store %arg5[%c0_21, %c1, %c0_22], %31 {strides = array<i32>} : memref<1x2x32xf32, #tpu.memory_space<vmem>>, vector<1x1x32xf32>,
    return
  }
  func.func @transform_0(%arg0: i32) -> (i32, i32, i32) {
    %c0_i32 = arith.constant 0 : i32
    %c0_i32_0 = arith.constant 0 : i32
    %c0_i32_1 = arith.constant 0 : i32
    return %arg0, %c0_i32, %c0_i32_0 : i32, i32, i32
  }
  func.func @transform_1(%arg0: i32) -> (i32, i32, i32) {
    %c0_i32 = arith.constant 0 : i32
    %c0_i32_0 = arith.constant 0 : i32
    %c0_i32_1 = arith.constant 0 : i32
    return %arg0, %c0_i32, %c0_i32_0 : i32, i32, i32
  }
  func.func @transform_2(%arg0: i32) -> (i32, i32, i32) {
    %c0_i32 = arith.constant 0 : i32
    %c0_i32_0 = arith.constant 0 : i32
    %c0_i32_1 = arith.constant 0 : i32
    return %arg0, %c0_i32, %c0_i32_0 : i32, i32, i32
  }
  func.func @transform_3(%arg0: i32) -> (i32, i32, i32) {
    %c0_i32 = arith.constant 0 : i32
    %c0_i32_0 = arith.constant 0 : i32
    %c0_i32_1 = arith.constant 0 : i32
    return %arg0, %c0_i32, %c0_i32_0 : i32, i32, i32
  }
  func.func @transform_4(%arg0: i32) -> (i32, i32, i32) {
    %c0_i32 = arith.constant 0 : i32
    %c0_i32_0 = arith.constant 0 : i32
    %c0_i32_1 = arith.constant 0 : i32
    return %arg0, %c0_i32, %c0_i32_0 : i32, i32, i32
  }
}

module attributes {stable_mosaic.version = 11 : i64} {
  func.func @_mlp_kernel(%arg0: memref<2x64xf32, #tpu.memory_space<vmem>>, %arg1: memref<2x64xf32, #tpu.memory_space<vmem>>, %arg2: memref<2x64xf32, #tpu.memory_space<vmem>>, %arg3: memref<64x32xf32, #tpu.memory_space<vmem>>, %arg4: memref<1x32xf32, #tpu.memory_space<vmem>>, %arg5: memref<32x16xf32, #tpu.memory_space<vmem>>, %arg6: memref<1x16xf32, #tpu.memory_space<vmem>>, %arg7: memref<16x4xf32, #tpu.memory_space<vmem>>, %arg8: memref<1x4xf32, #tpu.memory_space<vmem>>, %arg9: memref<2x4xf32, #tpu.memory_space<vmem>>) attributes {dimension_semantics = [], scalar_prefetch = 0 : i64, scratch_operands = 0 : i64, tpu.core_type = #tpu.core_type<tc>} {
    %c0 = arith.constant 0 : index
    %c0_0 = arith.constant 0 : index
    %0 = vector.load %arg0[%c0, %c0_0] : memref<2x64xf32, #tpu.memory_space<vmem>>, vector<2x64xf32>
    %c0_1 = arith.constant 0 : index
    %c0_2 = arith.constant 0 : index
    %1 = vector.load %arg1[%c0_1, %c0_2] : memref<2x64xf32, #tpu.memory_space<vmem>>, vector<2x64xf32>
    %2 = arith.addf %0, %1 : vector<2x64xf32>
    %c0_3 = arith.constant 0 : index
    %c0_4 = arith.constant 0 : index
    %3 = vector.load %arg2[%c0_3, %c0_4] : memref<2x64xf32, #tpu.memory_space<vmem>>, vector<2x64xf32>
    %4 = arith.addf %2, %3 : vector<2x64xf32>
    %c0_5 = arith.constant 0 : index
    %c0_6 = arith.constant 0 : index
    %5 = vector.load %arg3[%c0_5, %c0_6] : memref<64x32xf32, #tpu.memory_space<vmem>>, vector<64x32xf32>
    %cst = arith.constant dense<0.000000e+00> : vector<2x32xf32>
    %6 = tpu.matmul %4, %5, %cst {dimension_numbers = #tpu.dot_dimension_numbers<[1], [0], [0], [1], [0, 0, 1, 1], [], []>} : vector<2x64xf32>, vector<64x32xf32>, vector<2x32xf32> -> vector<2x32xf32>
    %c0_7 = arith.constant 0 : index
    %c0_8 = arith.constant 0 : index
    %7 = vector.load %arg4[%c0_7, %c0_8] : memref<1x32xf32, #tpu.memory_space<vmem>>, vector<1x32xf32>
    %8 = vector.broadcast %7 : vector<1x32xf32> to vector<2x32xf32>
    %9 = arith.addf %6, %8 : vector<2x32xf32>
    %cst_9 = arith.constant 0.000000e+00 : f32
    %10 = vector.broadcast %cst_9 : f32 to vector<2x32xf32>
    %11 = arith.maximumf %9, %10 : vector<2x32xf32>
    %c0_10 = arith.constant 0 : index
    %c0_11 = arith.constant 0 : index
    %12 = vector.load %arg5[%c0_10, %c0_11] : memref<32x16xf32, #tpu.memory_space<vmem>>, vector<32x16xf32>
    %cst_12 = arith.constant dense<0.000000e+00> : vector<2x16xf32>
    %13 = tpu.matmul %11, %12, %cst_12 {dimension_numbers = #tpu.dot_dimension_numbers<[1], [0], [0], [1], [0, 0, 1, 1], [], []>} : vector<2x32xf32>, vector<32x16xf32>, vector<2x16xf32> -> vector<2x16xf32>
    %c0_13 = arith.constant 0 : index
    %c0_14 = arith.constant 0 : index
    %14 = vector.load %arg6[%c0_13, %c0_14] : memref<1x16xf32, #tpu.memory_space<vmem>>, vector<1x16xf32>
    %15 = vector.broadcast %14 : vector<1x16xf32> to vector<2x16xf32>
    %16 = arith.addf %13, %15 : vector<2x16xf32>
    %cst_15 = arith.constant 0.000000e+00 : f32
    %17 = vector.broadcast %cst_15 : f32 to vector<2x16xf32>
    %18 = arith.maximumf %16, %17 : vector<2x16xf32>
    %c0_16 = arith.constant 0 : index
    %c0_17 = arith.constant 0 : index
    %19 = vector.load %arg7[%c0_16, %c0_17] : memref<16x4xf32, #tpu.memory_space<vmem>>, vector<16x4xf32>
    %cst_18 = arith.constant dense<0.000000e+00> : vector<2x4xf32>
    %20 = tpu.matmul %18, %19, %cst_18 {dimension_numbers = #tpu.dot_dimension_numbers<[1], [0], [0], [1], [0, 0, 1, 1], [], []>} : vector<2x16xf32>, vector<16x4xf32>, vector<2x4xf32> -> vector<2x4xf32>
    %c0_19 = arith.constant 0 : index
    %c0_20 = arith.constant 0 : index
    %21 = vector.load %arg8[%c0_19, %c0_20] : memref<1x4xf32, #tpu.memory_space<vmem>>, vector<1x4xf32>
    %22 = vector.broadcast %21 : vector<1x4xf32> to vector<2x4xf32>
    %23 = arith.addf %20, %22 : vector<2x4xf32>
    %cst_21 = arith.constant dense<0xFF800000> : vector<2xf32>
    %24 = vector.multi_reduction <maximumf>, %23, %cst_21 [1] : vector<2x4xf32> to vector<2xf32>
    %25 = vector.shape_cast %24 : vector<2xf32> to vector<2x1xf32>
    %26 = vector.broadcast %25 : vector<2x1xf32> to vector<2x4xf32>
    %27 = arith.subf %23, %26 : vector<2x4xf32>
    %28 = math.exp %27 : vector<2x4xf32>
    %cst_22 = arith.constant dense<0.000000e+00> : vector<2xf32>
    %29 = vector.multi_reduction <add>, %28, %cst_22 [1] : vector<2x4xf32> to vector<2xf32>
    %30 = vector.shape_cast %29 : vector<2xf32> to vector<2x1xf32>
    %31 = math.log %30 : vector<2x1xf32>
    %32 = arith.addf %31, %25 : vector<2x1xf32>
    %33 = vector.broadcast %32 : vector<2x1xf32> to vector<2x4xf32>
    %34 = arith.subf %23, %33 : vector<2x4xf32>
    %c0_23 = arith.constant 0 : index
    %c0_24 = arith.constant 0 : index
    %35 = vector.load %arg9[%c0_23, %c0_24] : memref<2x4xf32, #tpu.memory_space<vmem>>, vector<2x4xf32>
    tpu.vector_store %arg9[%c0_23, %c0_24], %34 {strides = array<i32>} : memref<2x4xf32, #tpu.memory_space<vmem>>, vector<2x4xf32>,
    return
  }
}

</mosaic_0001>

<llo_original>
// kernel: net_forward.7
$region0: #{net_forward.7}
  #allocation0 [shape = 'u32[]', space=smem, size = 0x4, offset = 0x4, fixed_abs, tag = 'smem constant byte address 0x4 - core index']
  #allocation1 [shape = 'u32[144,128]{1,0:T(1,128)}', space=vmem, size = 0x12000, scoped, tag = 'internal scratch']
  #allocation2 [shape = 'f32[1,1]{1,0:T(1,128)S(1)}', space=vmem, size = 0x200, scoped, tag = 'scoped memory for net_forward.7']
  %s0 = inlined_call_operand.vmem [shape: s8[2,16,16], index: 0, kind: input, shape index: {}]
  %s1 = inlined_call_operand.vmem [shape: f32[2,16,1], index: 1, kind: input, shape index: {}]
  %s2 = inlined_call_operand.vmem [shape: f32[2,1,16], index: 2, kind: input, shape index: {}]
  %s3 = inlined_call_operand.vmem [shape: bf16[2,16,8], index: 3, kind: input, shape index: {}]
  %s4 = inlined_call_operand.vmem [shape: bf16[8,32], index: 4, kind: input, shape index: {}]
  %s5 = inlined_call_operand.vmem [shape: f32[1,32], index: 5, kind: input, shape index: {}]
  %s6 = inlined_call_operand.vmem [shape: f32[1,1,32], index: 6, kind: input, shape index: {}]
  %s7 = inlined_call_operand.<no memory space> [shape: f32[1,1], index: 7, kind: input, shape index: {}]
  %s8 = inlined_call_operand.vmem [shape: bf16[2,16,32], index: 8, kind: output, shape index: {0}]
  %s9 = inlined_call_operand.vmem [shape: f32[2,1,16], index: 9, kind: output, shape index: {1}]
  %10 = xla_tuple %s8, %s9
  %s11 = sld [smem:[#allocation0]]
  $region73: #{net_forward.7} parent=0
    _
  %s13 = ssub.s32 1, %s11
  %s14 = scalar_select 0, %s13, %s11
  %v15 = vstv %s7
  %16 = vst [vmem:[#allocation2] sm:$0x1] %v15
  loop: start=0, step=1, limit=4
  $region2: #{net_forward.7} parent=0 // loop_pre_header
    _
  $region3: #{net_forward.7} parent=0 // loop_header
    %s18 = sphi 0, %s22
    %p19 = scmp.ge.s32.totalorder %s18, 4
    %s28 = sphi 0, %s30
    %s31 = sphi 0, %s28
    %s32 = sphi 0, %s31
    %s48 = sphi 0, %s32
    %s54 = sphi 0, %s56
    %s57 = sphi 0, %s54
    %s58 = sphi 0, %s57
    %s74 = sphi 0, %s58
    %s80 = sphi 0, %s82
    %s83 = sphi 0, %s80
    %s84 = sphi 0, %s83
    %s100 = sphi 0, %s84
    %s106 = sphi 0, %s108
    %s109 = sphi 0, %s106
    %s110 = sphi 0, %s109
    %s126 = sphi 0, %s110
    %s130 = sphi 0, %s130
    %s132 = sphi 0, %s130
    %s133 = sphi 0, %s132
    %s147 = sphi 0, %s133
    %s151 = sphi 0, %s151
    %s153 = sphi 0, %s151
    %s154 = sphi 0, %s153
    %s168 = sphi 0, %s154
    %s172 = sphi 0, %s172
    %s174 = sphi 0, %s172
    %s175 = sphi 0, %s174
    %s189 = sphi 0, %s175
    %s193 = sphi 0, %s193
    %s195 = sphi 0, %s193
    %s196 = sphi 0, %s195
    %s210 = sphi 0, %s196
    %s216 = sphi 0, %s218
    %s219 = sphi 0, %s216
    %s220 = sphi 0, %s219
    %s236 = sphi 0, %s220
    %s242 = sphi 0, %s244
    %s245 = sphi 0, %s242
    %s246 = sphi 0, %s245
    %s262 = sphi 0, %s246
  $region4: #{net_forward.7} parent=0 // loop_header_branch
    %21 = sbr.rel (%p19) target = $region8
  $region5: #{net_forward.7} parent=0 // loop_body
    %s23 = ssub.s32 %s18, 1
    %s24 = ssub.s32 %s18, 2
    %s25 = sadd.s32 %s18, 1
    %s26 = ssub.s32 %s18, %s25
    %p27 = scmp.eq.s32.totalorder %s26, 0
    %s29 = sadd.s32 %s28, 1
    %s30 = scalar_select %p27, %s28, %s29
    %p33 = pneg %p27
    %p34 = scmp.eq.s32.totalorder %s18, 1
    %p35 = por %p33, %p34
    %p36 = scmp.ne.s32.totalorder %s28, %s31
    %p37 = scmp.eq.s32.totalorder %s18, 0
    %p38 = por %p36, %p37
    %p39 = scmp.ne.s32.totalorder %s28, %s31
    %p40 = scmp.eq.s32.totalorder %s23, 1
    %p41 = por %p39, %p40
    %p42 = scmp.ne.s32.totalorder %s31, %s32
    %p43 = scmp.eq.s32.totalorder %s23, 0
    %p44 = por %p42, %p43
    %p45 = scmp.ne.s32.totalorder %s31, %s32
    %p46 = scmp.eq.s32.totalorder %s24, 1
    %p47 = por %p45, %p46
    %p49 = scmp.ne.s32.totalorder %s32, %s48
    %p50 = scmp.eq.s32.totalorder %s24, 0
    %p51 = por %p49, %p50
    %s52 = ssub.s32 %s18, %s25
    %p53 = scmp.eq.s32.totalorder %s52, 0
    %s55 = sadd.s32 %s54, 1
    %s56 = scalar_select %p53, %s54, %s55
    %p59 = pneg %p53
    %p60 = scmp.eq.s32.totalorder %s18, 1
    %p61 = por %p59, %p60
    %p62 = scmp.ne.s32.totalorder %s54, %s57
    %p63 = scmp.eq.s32.totalorder %s18, 0
    %p64 = por %p62, %p63
    %p65 = scmp.ne.s32.totalorder %s54, %s57
    %p66 = scmp.eq.s32.totalorder %s23, 1
    %p67 = por %p65, %p66
    %p68 = scmp.ne.s32.totalorder %s57, %s58
    %p69 = scmp.eq.s32.totalorder %s23, 0
    %p70 = por %p68, %p69
    %p71 = scmp.ne.s32.totalorder %s57, %s58
    %p72 = scmp.eq.s32.totalorder %s24, 1
    %p73 = por %p71, %p72
    %p75 = scmp.ne.s32.totalorder %s58, %s74
    %p76 = scmp.eq.s32.totalorder %s24, 0
    %p77 = por %p75, %p76
    %s78 = ssub.s32 %s18, %s25
    %p79 = scmp.eq.s32.totalorder %s78, 0
    %s81 = sadd.s32 %s80, 1
    %s82 = scalar_select %p79, %s80, %s81
    %p85 = pneg %p79
    %p86 = scmp.eq.s32.totalorder %s18, 1
    %p87 = por %p85, %p86
    %p88 = scmp.ne.s32.totalorder %s80, %s83
    %p89 = scmp.eq.s32.totalorder %s18, 0
    %p90 = por %p88, %p89
    %p91 = scmp.ne.s32.totalorder %s80, %s83
    %p92 = scmp.eq.s32.totalorder %s23, 1
    %p93 = por %p91, %p92
    %p94 = scmp.ne.s32.totalorder %s83, %s84
    %p95 = scmp.eq.s32.totalorder %s23, 0
    %p96 = por %p94, %p95
    %p97 = scmp.ne.s32.totalorder %s83, %s84
    %p98 = scmp.eq.s32.totalorder %s24, 1
    %p99 = por %p97, %p98
    %p101 = scmp.ne.s32.totalorder %s84, %s100
    %p102 = scmp.eq.s32.totalorder %s24, 0
    %p103 = por %p101, %p102
    %s104 = ssub.s32 %s18, %s25
    %p105 = scmp.eq.s32.totalorder %s104, 0
    %s107 = sadd.s32 %s106, 1
    %s108 = scalar_select %p105, %s106, %s107
    %p111 = pneg %p105
    %p112 = scmp.eq.s32.totalorder %s18, 1
    %p113 = por %p111, %p112
    %p114 = scmp.ne.s32.totalorder %s106, %s109
    %p115 = scmp.eq.s32.totalorder %s18, 0
    %p116 = por %p114, %p115
    %p117 = scmp.ne.s32.totalorder %s106, %s109
    %p118 = scmp.eq.s32.totalorder %s23, 1
    %p119 = por %p117, %p118
    %p120 = scmp.ne.s32.totalorder %s109, %s110
    %p121 = scmp.eq.s32.totalorder %s23, 0
    %p122 = por %p120, %p121
    %p123 = scmp.ne.s32.totalorder %s109, %s110
    %p124 = scmp.eq.s32.totalorder %s24, 1
    %p125 = por %p123, %p124
    %p127 = scmp.ne.s32.totalorder %s110, %s126
    %p128 = scmp.eq.s32.totalorder %s24, 0
    %p129 = por %p127, %p128
    %s131 = sadd.s32 %s130, 1
    %p134 = scmp.eq.s32.totalorder %s18, 1
    %p135 = scmp.ne.s32.totalorder %s130, %s132
    %p136 = scmp.eq.s32.totalorder %s18, 0
    %p137 = por %p135, %p136
    %p138 = scmp.ne.s32.totalorder %s130, %s132
    %p139 = scmp.eq.s32.totalorder %s23, 1
    %p140 = por %p138, %p139
    %p141 = scmp.ne.s32.totalorder %s132, %s133
    %p142 = scmp.eq.s32.totalorder %s23, 0
    %p143 = por %p141, %p142
    %p144 = scmp.ne.s32.totalorder %s132, %s133
    %p145 = scmp.eq.s32.totalorder %s24, 1
    %p146 = por %p144, %p145
    %p148 = scmp.ne.s32.totalorder %s133, %s147
    %p149 = scmp.eq.s32.totalorder %s24, 0
    %p150 = por %p148, %p149
    %s152 = sadd.s32 %s151, 1
    %p155 = scmp.eq.s32.totalorder %s18, 1
    %p156 = scmp.ne.s32.totalorder %s151, %s153
    %p157 = scmp.eq.s32.totalorder %s18, 0
    %p158 = por %p156, %p157
    %p159 = scmp.ne.s32.totalorder %s151, %s153
    %p160 = scmp.eq.s32.totalorder %s23, 1
    %p161 = por %p159, %p160
    %p162 = scmp.ne.s32.totalorder %s153, %s154
    %p163 = scmp.eq.s32.totalorder %s23, 0
    %p164 = por %p162, %p163
    %p165 = scmp.ne.s32.totalorder %s153, %s154
    %p166 = scmp.eq.s32.totalorder %s24, 1
    %p167 = por %p165, %p166
    %p169 = scmp.ne.s32.totalorder %s154, %s168
    %p170 = scmp.eq.s32.totalorder %s24, 0
    %p171 = por %p169, %p170
    %s173 = sadd.s32 %s172, 1
    %p176 = scmp.eq.s32.totalorder %s18, 1
    %p177 = scmp.ne.s32.totalorder %s172, %s174
    %p178 = scmp.eq.s32.totalorder %s18, 0
    %p179 = por %p177, %p178
    %p180 = scmp.ne.s32.totalorder %s172, %s174
    %p181 = scmp.eq.s32.totalorder %s23, 1
    %p182 = por %p180, %p181
    %p183 = scmp.ne.s32.totalorder %s174, %s175
    %p184 = scmp.eq.s32.totalorder %s23, 0
    %p185 = por %p183, %p184
    %p186 = scmp.ne.s32.totalorder %s174, %s175
    %p187 = scmp.eq.s32.totalorder %s24, 1
    %p188 = por %p186, %p187
    %p190 = scmp.ne.s32.totalorder %s175, %s189
    %p191 = scmp.eq.s32.totalorder %s24, 0
    %p192 = por %p190, %p191
    %s194 = sadd.s32 %s193, 1
    %p197 = scmp.eq.s32.totalorder %s18, 1
    %p198 = scmp.ne.s32.totalorder %s193, %s195
    %p199 = scmp.eq.s32.totalorder %s18, 0
    %p200 = por %p198, %p199
    %p201 = scmp.ne.s32.totalorder %s193, %s195
    %p202 = scmp.eq.s32.totalorder %s23, 1
    %p203 = por %p201, %p202
    %p204 = scmp.ne.s32.totalorder %s195, %s196
    %p205 = scmp.eq.s32.totalorder %s23, 0
    %p206 = por %p204, %p205
    %p207 = scmp.ne.s32.totalorder %s195, %s196
    %p208 = scmp.eq.s32.totalorder %s24, 1
    %p209 = por %p207, %p208
    %p211 = scmp.ne.s32.totalorder %s196, %s210
    %p212 = scmp.eq.s32.totalorder %s24, 0
    %p213 = por %p211, %p212
    %s214 = ssub.s32 %s18, %s25
    %p215 = scmp.eq.s32.totalorder %s214, 0
    %s217 = sadd.s32 %s216, 1
    %s218 = scalar_select %p215, %s216, %s217
    %p221 = pneg %p215
    %p222 = scmp.eq.s32.totalorder %s18, 1
    %p223 = por %p221, %p222
    %p224 = scmp.ne.s32.totalorder %s216, %s219
    %p225 = scmp.eq.s32.totalorder %s18, 0
    %p226 = por %p224, %p225
    %p227 = scmp.ne.s32.totalorder %s216, %s219
    %p228 = scmp.eq.s32.totalorder %s23, 1
    %p229 = por %p227, %p228
    %p230 = scmp.ne.s32.totalorder %s219, %s220
    %p231 = scmp.eq.s32.totalorder %s23, 0
    %p232 = por %p230, %p231
    %p233 = scmp.ne.s32.totalorder %s219, %s220
    %p234 = scmp.eq.s32.totalorder %s24, 1
    %p235 = por %p233, %p234
    %p237 = scmp.ne.s32.totalorder %s220, %s236
    %p238 = scmp.eq.s32.totalorder %s24, 0
    %p239 = por %p237, %p238
    %s240 = ssub.s32 %s18, %s25
    %p241 = scmp.eq.s32.totalorder %s240, 0
    %s243 = sadd.s32 %s242, 1
    %s244 = scalar_select %p241, %s242, %s243
    %p247 = pneg %p241
    %p248 = scmp.eq.s32.totalorder %s18, 1
    %p249 = por %p247, %p248
    %p250 = scmp.ne.s32.totalorder %s242, %s245
    %p251 = scmp.eq.s32.totalorder %s18, 0
    %p252 = por %p250, %p251
    %p253 = scmp.ne.s32.totalorder %s242, %s245
    %p254 = scmp.eq.s32.totalorder %s23, 1
    %p255 = por %p253, %p254
    %p256 = scmp.ne.s32.totalorder %s245, %s246
    %p257 = scmp.eq.s32.totalorder %s23, 0
    %p258 = por %p256, %p257
    %p259 = scmp.ne.s32.totalorder %s245, %s246
    %p260 = scmp.eq.s32.totalorder %s24, 1
    %p261 = por %p259, %p260
    %p263 = scmp.ne.s32.totalorder %s246, %s262
    %p264 = scmp.eq.s32.totalorder %s24, 0
    %p265 = por %p263, %p264
    %p266 = scmp.le.s32.totalorder 1, %s18
    %p267 = scmp.lt.s32.totalorder %s18, 3
    %p268 = pnand %p266, %p267
    %p269 = pneg %p268
    // Predicated region
    $region9: #{net_forward.7} parent=5 // pred_check
      _
    $region10: #{net_forward.7} parent=5 // pred_check_branch
      %271 = sbr.rel (%p268) target = $region12
    $region11: #{net_forward.7} parent=5 // pred_region
      %s272 = ssub.s32 %s18, 1
      // Predicated region
      $region13: #{net_forward.7} parent=11 // pred_check
        %p273 = pneg %p143
      $region14: #{net_forward.7} parent=11 // pred_check_branch
        %275 = sbr.rel (%p273) target = $region16
      $region15: #{net_forward.7} parent=11 // pred_region
        _
      $region16: #{net_forward.7} parent=11 // pred_fallthru
        _
      // Predicated region
      $region17: #{net_forward.7} parent=11 // pred_check
        %p276 = pneg %p164
      $region18: #{net_forward.7} parent=11 // pred_check_branch
        %278 = sbr.rel (%p276) target = $region20
      $region19: #{net_forward.7} parent=11 // pred_region
        _
      $region20: #{net_forward.7} parent=11 // pred_fallthru
        _
      // Predicated region
      $region21: #{net_forward.7} parent=11 // pred_check
        %p279 = pneg %p185
      $region22: #{net_forward.7} parent=11 // pred_check_branch
        %281 = sbr.rel (%p279) target = $region24
      $region23: #{net_forward.7} parent=11 // pred_region
        _
      $region24: #{net_forward.7} parent=11 // pred_fallthru
        _
      // Predicated region
      $region25: #{net_forward.7} parent=11 // pred_check
        %p282 = pneg %p206
      $region26: #{net_forward.7} parent=11 // pred_check_branch
        %284 = sbr.rel (%p282) target = $region28
      $region27: #{net_forward.7} parent=11 // pred_region
        _
      $region28: #{net_forward.7} parent=11 // pred_fallthru
        _
    $region12: #{net_forward.7} parent=5 // pred_fallthru
      _
    %p285 = scmp.lt.s32.totalorder %s18, 2
    // Predicated region
    $region29: #{net_forward.7} parent=5 // pred_check
      %p286 = pneg %p285
    $region30: #{net_forward.7} parent=5 // pred_check_branch
      %288 = sbr.rel (%p286) target = $region32
    $region31: #{net_forward.7} parent=5 // pred_region
      // Predicated region
      $region33: #{net_forward.7} parent=31 // pred_check
        %p289 = pneg %p38
      $region34: #{net_forward.7} parent=31 // pred_check_branch
        %291 = sbr.rel (%p289) target = $region36
      $region35: #{net_forward.7} parent=31 // pred_region
        %p292 = scmp.lt.s32.totalorder %s18, 1
        %s293 = scalar_select %p292, %s18, 1
        %s294 = smul.addr %s293, 2
        %s295 = smul.addr %s294, 2
        %s296 = scalar_lea.vmem %s0, %s295
      $region36: #{net_forward.7} parent=31 // pred_fallthru
        _
      // Predicated region
      $region37: #{net_forward.7} parent=31 // pred_check
        %p297 = pneg %p64
      $region38: #{net_forward.7} parent=31 // pred_check_branch
        %299 = sbr.rel (%p297) target = $region40
      $region39: #{net_forward.7} parent=31 // pred_region
        %p300 = scmp.lt.s32.totalorder %s18, 1
        %s301 = scalar_select %p300, %s18, 1
        %s302 = smul.addr %s301, 2
        %s303 = smul.addr %s302, 8
        %s304 = scalar_lea.vmem %s1, %s303
      $region40: #{net_forward.7} parent=31 // pred_fallthru
        _
      // Predicated region
      $region41: #{net_forward.7} parent=31 // pred_check
        %p305 = pneg %p90
      $region42: #{net_forward.7} parent=31 // pred_check_branch
        %307 = sbr.rel (%p305) target = $region44
      $region43: #{net_forward.7} parent=31 // pred_region
        %p308 = scmp.lt.s32.totalorder %s18, 1
        %s309 = scalar_select %p308, %s18, 1
        %s310 = scalar_lea.vmem %s2, %s309
      $region44: #{net_forward.7} parent=31 // pred_fallthru
        _
      // Predicated region
      $region45: #{net_forward.7} parent=31 // pred_check
        %p311 = pneg %p116
      $region46: #{net_forward.7} parent=31 // pred_check_branch
        %313 = sbr.rel (%p311) target = $region48
      $region47: #{net_forward.7} parent=31 // pred_region
        %p314 = scmp.lt.s32.totalorder %s18, 1
        %s315 = scalar_select %p314, %s18, 1
        %s316 = smul.addr %s315, 2
        %s317 = smul.addr %s316, 4
        %s318 = scalar_lea.vmem %s3, %s317
      $region48: #{net_forward.7} parent=31 // pred_fallthru
        _
    $region32: #{net_forward.7} parent=5 // pred_fallthru
      _
    %p319 = scmp.le.s32.totalorder 1, %s18
    %p320 = scmp.lt.s32.totalorder %s18, 3
    %p321 = pnand %p319, %p320
    %p322 = pneg %p321
    // Predicated region
    $region49: #{net_forward.7} parent=5 // pred_check
      _
    $region50: #{net_forward.7} parent=5 // pred_check_branch
      %324 = sbr.rel (%p321) target = $region52
    $region51: #{net_forward.7} parent=5 // pred_region
      %s325 = ssub.s32 %s18, 1
      %p326 = scmp.lt.s32.totalorder %s23, 1
      %s327 = scalar_select %p326, %s23, 1
      %s328 = smul.addr %s327, 2
      %s329 = smul.addr %s328, 2
      %s330 = scalar_lea.vmem %s0, %s329
      %p331 = pneg %p44
      %p332 = pneg %p41
      %p333 = scmp.lt.s32.totalorder %s23, 1
      %s334 = scalar_select %p333, %s23, 1
      %s335 = smul.addr %s334, 2
      %s336 = smul.addr %s335, 8
      %s337 = scalar_lea.vmem %s1, %s336
      %p338 = pneg %p70
      %p339 = pneg %p67
      %p340 = scmp.lt.s32.totalorder %s23, 1
      %s341 = scalar_select %p340, %s23, 1
      %s342 = scalar_lea.vmem %s2, %s341
      %p343 = pneg %p96
      %p344 = pneg %p93
      %p345 = scmp.lt.s32.totalorder %s23, 1
      %s346 = scalar_select %p345, %s23, 1
      %s347 = smul.addr %s346, 2
      %s348 = smul.addr %s347, 4
      %s349 = scalar_lea.vmem %s3, %s348
      %p350 = pneg %p122
      %p351 = pneg %p119
      %p352 = pneg %p143
      %p353 = pneg %p140
      %p354 = pneg %p164
      %p355 = pneg %p161
      %p356 = pneg %p185
      %p357 = pneg %p182
      %p358 = pneg %p206
      %p359 = pneg %p203
      %p360 = pneg %p232
      %p361 = pneg %p229
      %p362 = scmp.lt.s32.totalorder %s23, 1
      %s363 = scalar_select %p362, %s23, 1
      %s364 = smul.addr %s363, 2
      %s365 = smul.addr %s364, 4
      %s366 = scalar_lea.vmem %s8, %s365
      %p367 = pneg %p258
      %p368 = pneg %p255
      %p369 = scmp.lt.s32.totalorder %s23, 1
      %s370 = scalar_select %p369, %s23, 1
      %s371 = scalar_lea.vmem %s9, %s370
      %p372 = scmp.lt.s32.totalorder %s23, 1
      %s373 = scalar_select %p372, %s23, 1
      %s374 = smul.addr %s373, 2
      %s375 = smul.addr %s374, 2
      %s376 = scalar_lea.vmem %s0, %s375
      %p377 = scmp.lt.s32.totalorder %s23, 1
      %s378 = scalar_select %p377, %s23, 1
      %s379 = smul.addr %s378, 2
      %s380 = smul.addr %s379, 8
      %s381 = scalar_lea.vmem %s1, %s380
      %p382 = scmp.lt.s32.totalorder %s23, 1
      %s383 = scalar_select %p382, %s23, 1
      %s384 = scalar_lea.vmem %s2, %s383
      %p385 = scmp.lt.s32.totalorder %s23, 1
      %s386 = scalar_select %p385, %s23, 1
      %s387 = smul.addr %s386, 2
      %s388 = smul.addr %s387, 4
      %s389 = scalar_lea.vmem %s3, %s388
      %p390 = scmp.lt.s32.totalorder %s23, 1
      %s391 = scalar_select %p390, %s23, 1
      %s392 = smul.addr %s391, 2
      %s393 = smul.addr %s392, 4
      %s394 = scalar_lea.vmem %s8, %s393
      %p395 = scmp.lt.s32.totalorder %s23, 1
      %s396 = scalar_select %p395, %s23, 1
      %s397 = scalar_lea.vmem %s9, %s396
      %v399 = vld [vmem:[%s376] sm:$0x3]
      %v400 = vld [vmem:[%s376 + $0x2] sm:$0x3]
      %v401 = vunpack.c.l.s8.bf16 %v399
      %v402 = vunpack.c.l.s8.bf16 %v400
      %v403 = vld [vmem:[%s381] sm:$0xff]
      %v404 = vld [vmem:[%s381 + $0x8] sm:$0xff]
      %v405 = vld [vmem:[%s384] sm:$0x1]
      %v406 = vpack.c.bf16 %v404, %v403
      %v409 = vunpack.c.l.b16 %v401
      %v410 = vunpack.c.l.b16 %v402
      %v411 = vpack.c.b16 %v410, %v409
      %vm412 = vcmask 130048
      %v414 = vsel %vm412, %v411, 0
      %416 = vmatprep.subr.bf16.mxu0 0
      %417 = vmatpush1.bf16.msra.mxu0 %v406
      %418 = vmatprep.subr.bf16.mxu0 0
      %419 = vmatpush1.bf16.msra.mxu0 0
      %420 = vmatprep.subr.bf16.mxu0 0
      %421 = vmatpush1.bf16.msra.mxu0 0
      %422 = vmatprep.subr.bf16.mxu0 0
      %423 = vmatpush1.bf16.msra.mxu0 0
      %424 = vmatprep.subr.bf16.mxu0 0
      %425 = vmatpush1.bf16.msra.mxu0 0
      %426 = vmatprep.subr.bf16.mxu0 0
      %427 = vmatpush1.bf16.msra.mxu0 0
      %428 = vmatprep.subr.bf16.mxu0 0
      %429 = vmatpush1.bf16.msra.mxu0 0
      %430 = vmatprep.subr.bf16.mxu0 0
      %431 = vmatpush1.bf16.msra.mxu0 0
      %432 = vmatprep.subr.bf16.mxu0 0
      %433 = vmatpush1.bf16.msra.mxu0 0
      %434 = vmatprep.subr.bf16.mxu0 0
      %435 = vmatpush1.bf16.msra.mxu0 0
      %436 = vmatprep.subr.bf16.mxu0 0
      %437 = vmatpush1.bf16.msra.mxu0 0
      %438 = vmatprep.subr.bf16.mxu0 0
      %439 = vmatpush1.bf16.msra.mxu0 0
      %440 = vmatprep.subr.bf16.mxu0 0
      %441 = vmatpush1.bf16.msra.mxu0 0
      %442 = vmatprep.subr.bf16.mxu0 0
      %443 = vmatpush1.bf16.msra.mxu0 0
      %444 = vmatprep.subr.bf16.mxu0 0
      %445 = vmatpush1.bf16.msra.mxu0 0
      %446 = vmatprep.subr.bf16.mxu0 0
      %447 = vmatpush1.bf16.msra.mxu0 0
      %448 = vmatprep.mubr.bf16.mxu0 0
      %449 = vmatmul.mubr.bf16.gmra.mrb[0].mxu0 %v414
      %v450 = vpop.f32.mrb[0].mxu0
      %v451 = vadd.f32 0.0, %v450
      %v452 = vpop.f32.mrb[0].mxu0
      %v453 = vpop.f32.mrb[0].mxu0
      %v454 = vadd.f32 0.0, %v453
      %v455 = vpop.f32.mrb[0].mxu0
      %456 = vdwg.mxu0
      %v457 = vmul.f32 %v451, %v403
      %v458 = vmul.f32 %v454, %v404
      %v459 = vpack.c.bf16 %v405, %v405
      %v462 = vsel %vm412, %v459, 0
      %464 = vmatprep.subr.bf16.mxu0 0
      %465 = vmatpush1.bf16.msra.mxu0 %v411
      %466 = vmatprep.subr.bf16.mxu0 0
      %467 = vmatpush1.bf16.msra.mxu0 0
      %468 = vmatprep.subr.bf16.mxu0 0
      %469 = vmatpush1.bf16.msra.mxu0 0
      %470 = vmatprep.subr.bf16.mxu0 0
      %471 = vmatpush1.bf16.msra.mxu0 0
      %472 = vmatprep.subr.bf16.mxu0 0
      %473 = vmatpush1.bf16.msra.mxu0 0
      %474 = vmatprep.subr.bf16.mxu0 0
      %475 = vmatpush1.bf16.msra.mxu0 0
      %476 = vmatprep.subr.bf16.mxu0 0
      %477 = vmatpush1.bf16.msra.mxu0 0
      %478 = vmatprep.subr.bf16.mxu0 0
      %479 = vmatpush1.bf16.msra.mxu0 0
      %480 = vmatprep.subr.bf16.mxu0 0
      %481 = vmatpush1.bf16.msra.mxu0 0
      %482 = vmatprep.subr.bf16.mxu0 0
      %483 = vmatpush1.bf16.msra.mxu0 0
      %484 = vmatprep.subr.bf16.mxu0 0
      %485 = vmatpush1.bf16.msra.mxu0 0
      %486 = vmatprep.subr.bf16.mxu0 0
      %487 = vmatpush1.bf16.msra.mxu0 0
      %488 = vmatprep.subr.bf16.mxu0 0
      %489 = vmatpush1.bf16.msra.mxu0 0
      %490 = vmatprep.subr.bf16.mxu0 0
      %491 = vmatpush1.bf16.msra.mxu0 0
      %492 = vmatprep.subr.bf16.mxu0 0
      %493 = vmatpush1.bf16.msra.mxu0 0
      %494 = vmatprep.subr.bf16.mxu0 0
      %495 = vmatpush1.bf16.msra.mxu0 0
      %496 = vmatprep.mubr.bf16.mxu0 0
      %497 = vmatmul.mubr.bf16.gmra.mrb[0].mxu0 %v462
      %v498 = vpop.f32.mrb[0].mxu0
      %v499 = vadd.f32 0.0, %v498
      %v500 = vpop.f32.mrb[0].mxu0
      %v501 = vpop.f32.mrb[0].mxu0
      %v502 = vpop.f32.mrb[0].mxu0
      %503 = vdwg.mxu0
      %v504 = vmul.f32 %v499, %v405
      %vm505 = vcmp.gt.f32.partialorder %v457, 0.0
      %vm506 = vcmp.gt.f32.partialorder %v458, 0.0
      %v507 = vrsqrt.pop %v457
      %v508 = vrsqrt.pop %v458
      %v509 = vsel %vm505, %v507, 0.0
      %v510 = vsel %vm506, %v508, 0.0
      %vm511 = vcmp.gt.f32.partialorder %v504, 0.0
      %v512 = vrsqrt.pop %v504
      %v513 = vsel %vm511, %v512, 0.0
      %v514 = vld [vmem:[%s389] sm:$0xf]
      %v515 = vld [vmem:[%s389 + $0x4] sm:$0xf]
      %v516 = vld [vmem:[%s4] sm:$0xf]
      %v519 = vunpack.c.l.b16 %v514
      %v520 = vunpack.c.l.b16 %v515
      %v521 = vpack.c.b16 %v520, %v519
      %vm522 = vcmask 64512
      %v524 = vsel %vm522, %v521, 0
      %vm526 = vcmask 1043456
      %v528 = vsel %vm526, %v516, 0
      %530 = vmatprep.subr.bf16.mxu0 0
      %531 = vmatpush1.bf16.msra.mxu0 %v528
      %532 = vmatprep.subr.bf16.mxu0 0
      %533 = vmatpush1.bf16.msra.mxu0 0
      %534 = vmatprep.subr.bf16.mxu0 0
      %535 = vmatpush1.bf16.msra.mxu0 0
      %536 = vmatprep.subr.bf16.mxu0 0
      %537 = vmatpush1.bf16.msra.mxu0 0
      %538 = vmatprep.subr.bf16.mxu0 0
      %539 = vmatpush1.bf16.msra.mxu0 0
      %540 = vmatprep.subr.bf16.mxu0 0
      %541 = vmatpush1.bf16.msra.mxu0 0
      %542 = vmatprep.subr.bf16.mxu0 0
      %543 = vmatpush1.bf16.msra.mxu0 0
      %544 = vmatprep.subr.bf16.mxu0 0
      %545 = vmatpush1.bf16.msra.mxu0 0
      %546 = vmatprep.subr.bf16.mxu0 0
      %547 = vmatpush1.bf16.msra.mxu0 0
      %548 = vmatprep.subr.bf16.mxu0 0
      %549 = vmatpush1.bf16.msra.mxu0 0
      %550 = vmatprep.subr.bf16.mxu0 0
      %551 = vmatpush1.bf16.msra.mxu0 0
      %552 = vmatprep.subr.bf16.mxu0 0
      %553 = vmatpush1.bf16.msra.mxu0 0
      %554 = vmatprep.subr.bf16.mxu0 0
      %555 = vmatpush1.bf16.msra.mxu0 0
      %556 = vmatprep.subr.bf16.mxu0 0
      %557 = vmatpush1.bf16.msra.mxu0 0
      %558 = vmatprep.subr.bf16.mxu0 0
      %559 = vmatpush1.bf16.msra.mxu0 0
      %560 = vmatprep.subr.bf16.mxu0 0
      %561 = vmatpush1.bf16.msra.mxu0 0
      %562 = vmatprep.mubr.bf16.mxu0 0
      %563 = vmatmul.mubr.bf16.gmra.mrb[0].mxu0 %v524
      %v564 = vpop.f32.mrb[0].mxu0
      %v565 = vadd.f32 0.0, %v564
      %v566 = vpop.f32.mrb[0].mxu0
      %v567 = vpop.f32.mrb[0].mxu0
      %v568 = vadd.f32 0.0, %v567
      %v569 = vpop.f32.mrb[0].mxu0
      %570 = vdwg.mxu0
      %572 = vset.pattern.permute.xlu0 0
      %573 = vperm.xlu0 %572, %v509
      %v574 = vpop.permute.xlu0 %573
      %577 = vset.pattern.permute.xlu0 0
      %578 = vperm.xlu0 %577, %v510
      %v579 = vpop.permute.xlu0 %578
      %v581 = vmul.f32 %v565, %v574
      %v582 = vmul.f32 %v568, %v579
      %v583 = vpack.c.bf16 %v582, %v581
      %584 = vmatprep.subr.bf16.mxu0 0
      %585 = vmatpush1.bf16.msra.mxu0 %v583
      %586 = vmatprep.subr.bf16.mxu0 0
      %587 = vmatpush1.bf16.msra.mxu0 0
      %588 = vmatprep.subr.bf16.mxu0 0
      %589 = vmatpush1.bf16.msra.mxu0 0
      %590 = vmatprep.subr.bf16.mxu0 0
      %591 = vmatpush1.bf16.msra.mxu0 0
      %592 = vmatprep.subr.bf16.mxu0 0
      %593 = vmatpush1.bf16.msra.mxu0 0
      %594 = vmatprep.subr.bf16.mxu0 0
      %595 = vmatpush1.bf16.msra.mxu0 0
      %596 = vmatprep.subr.bf16.mxu0 0
      %597 = vmatpush1.bf16.msra.mxu0 0
      %598 = vmatprep.subr.bf16.mxu0 0
      %599 = vmatpush1.bf16.msra.mxu0 0
      %600 = vmatprep.subr.bf16.mxu0 0
      %601 = vmatpush1.bf16.msra.mxu0 0
      %602 = vmatprep.subr.bf16.mxu0 0
      %603 = vmatpush1.bf16.msra.mxu0 0
      %604 = vmatprep.subr.bf16.mxu0 0
      %605 = vmatpush1.bf16.msra.mxu0 0
      %606 = vmatprep.subr.bf16.mxu0 0
      %607 = vmatpush1.bf16.msra.mxu0 0
      %608 = vmatprep.subr.bf16.mxu0 0
      %609 = vmatpush1.bf16.msra.mxu0 0
      %610 = vmatprep.subr.bf16.mxu0 0
      %611 = vmatpush1.bf16.msra.mxu0 0
      %612 = vmatprep.subr.bf16.mxu0 0
      %613 = vmatpush1.bf16.msra.mxu0 0
      %614 = vmatprep.subr.bf16.mxu0 0
      %615 = vmatpush1.bf16.msra.mxu0 0
      %616 = vmatprep.mubr.bf16.mxu0 0
      %617 = vmatmul.mubr.bf16.gmra.mrb[0].mxu0 %v414
      %v618 = vpop.f32.mrb[0].mxu0
      %v619 = vadd.f32 0.0, %v618
      %v620 = vpop.f32.mrb[0].mxu0
      %v621 = vpop.f32.mrb[0].mxu0
      %v622 = vadd.f32 0.0, %v621
      %v623 = vpop.f32.mrb[0].mxu0
      %624 = vdwg.mxu0
      %v625 = vmul.f32 %v619, %v574
      %v626 = vmul.f32 %v622, %v579
      %v627 = vld [vmem:[%s5] sm:$0x1]
      %v629 = vlaneseq
      %v630 = vshrl.u32 %v629, 7
      %v631 = vsub.s32 0, %v630
      %v632 = vrot.slane %v627, %v631
      %v634 = vadd.f32 %v625, %v632
      %v635 = vadd.f32 %v626, %v632
      %v636 = vmax.f32 %v634, 0.0
      %v637 = vmax.f32 %v635, 0.0
      %639 = vset.pattern.permute.xlu0 0
      %640 = vperm.xlu0 %639, %v403
      %v641 = vpop.permute.xlu0 %640
      %644 = vset.pattern.permute.xlu0 0
      %645 = vperm.xlu0 %644, %v404
      %v646 = vpop.permute.xlu0 %645
      %v648 = vmul.f32 %v636, %v641
      %v649 = vmul.f32 %v637, %v646
      %v650 = vpack.c.bf16 %v649, %v648
      %v652 = vunpack.c.l.b16 %v650
      %v653 = vunpack.c.h.b16 %v650
      %v654 = vpack.c.b16 %v652, %v652
      %v655 = vpack.c.b16 %v653, %v653
      %vm658 = vcmask 257024
      %659 = vst.msk [vmem:[%s394] sm:$0xf] %vm658, %v654
      %660 = vst.msk [vmem:[%s394 + $0x4] sm:$0xf] %vm658, %v655
      %v661 = vld [vmem:[%s6] sm:$0x1]
      %v662 = vpack.c.bf16 %v661, %v661
      %vm663 = vcmask 261120
      %v665 = vsel %vm663, %v662, 0
      %v668 = vsel %vm663, %v650, 0
      %670 = vmatprep.subr.bf16.mxu0 0
      %671 = vmatpush1.bf16.xpose.msra.mxu0 %v668
      %672 = vmatprep.subr.bf16.mxu0 0
      %673 = vmatpush1.bf16.xpose.msra.mxu0 0
      %674 = vmatprep.subr.bf16.mxu0 0
      %675 = vmatpush1.bf16.xpose.msra.mxu0 0
      %676 = vmatprep.subr.bf16.mxu0 0
      %677 = vmatpush1.bf16.xpose.msra.mxu0 0
      %678 = vmatprep.subr.bf16.mxu0 0
      %679 = vmatpush1.bf16.xpose.msra.mxu0 0
      %680 = vmatprep.subr.bf16.mxu0 0
      %681 = vmatpush1.bf16.xpose.msra.mxu0 0
      %682 = vmatprep.subr.bf16.mxu0 0
      %683 = vmatpush1.bf16.xpose.msra.mxu0 0
      %684 = vmatprep.subr.bf16.mxu0 0
      %685 = vmatpush1.bf16.xpose.msra.mxu0 0
      %686 = vmatprep.subr.bf16.mxu0 0
      %687 = vmatpush1.bf16.xpose.msra.mxu0 0
      %688 = vmatprep.subr.bf16.mxu0 0
      %689 = vmatpush1.bf16.xpose.msra.mxu0 0
      %690 = vmatprep.subr.bf16.mxu0 0
      %691 = vmatpush1.bf16.xpose.msra.mxu0 0
      %692 = vmatprep.subr.bf16.mxu0 0
      %693 = vmatpush1.bf16.xpose.msra.mxu0 0
      %694 = vmatprep.subr.bf16.mxu0 0
      %695 = vmatpush1.bf16.xpose.msra.mxu0 0
      %696 = vmatprep.subr.bf16.mxu0 0
      %697 = vmatpush1.bf16.xpose.msra.mxu0 0
      %698 = vmatprep.subr.bf16.mxu0 0
      %699 = vmatpush1.bf16.xpose.msra.mxu0 0
      %700 = vmatprep.subr.bf16.mxu0 0
      %701 = vmatpush1.bf16.xpose.msra.mxu0 0
      %702 = vmatprep.mubr.bf16.mxu0 0
      %703 = vmatmul.mubr.bf16.gmra.mrb[0].mxu0 %v665
      %v704 = vpop.f32.mrb[0].mxu0
      %v705 = vadd.f32 0.0, %v704
      %v706 = vpop.f32.mrb[0].mxu0
      %v707 = vpop.f32.mrb[0].mxu0
      %v708 = vpop.f32.mrb[0].mxu0
      %709 = vdwg.mxu0
      %v710 = vmul.f32 %v705, %v513
      %v711 = vpack.c.bf16 %v710, %v710
      %v713 = vsel %vm412, %v711, 0
      %715 = vmatprep.subr.bf16.mxu0 0
      %716 = vmatpush1.bf16.msra.mxu0 %v411
      %717 = vmatprep.subr.bf16.mxu0 0
      %718 = vmatpush1.bf16.msra.mxu0 0
      %719 = vmatprep.subr.bf16.mxu0 0
      %720 = vmatpush1.bf16.msra.mxu0 0
      %721 = vmatprep.subr.bf16.mxu0 0
      %722 = vmatpush1.bf16.msra.mxu0 0
      %723 = vmatprep.subr.bf16.mxu0 0
      %724 = vmatpush1.bf16.msra.mxu0 0
      %725 = vmatprep.subr.bf16.mxu0 0
      %726 = vmatpush1.bf16.msra.mxu0 0
      %727 = vmatprep.subr.bf16.mxu0 0
      %728 = vmatpush1.bf16.msra.mxu0 0
      %729 = vmatprep.subr.bf16.mxu0 0
      %730 = vmatpush1.bf16.msra.mxu0 0
      %731 = vmatprep.subr.bf16.mxu0 0
      %732 = vmatpush1.bf16.msra.mxu0 0
      %733 = vmatprep.subr.bf16.mxu0 0
      %734 = vmatpush1.bf16.msra.mxu0 0
      %735 = vmatprep.subr.bf16.mxu0 0
      %736 = vmatpush1.bf16.msra.mxu0 0
      %737 = vmatprep.subr.bf16.mxu0 0
      %738 = vmatpush1.bf16.msra.mxu0 0
      %739 = vmatprep.subr.bf16.mxu0 0
      %740 = vmatpush1.bf16.msra.mxu0 0
      %741 = vmatprep.subr.bf16.mxu0 0
      %742 = vmatpush1.bf16.msra.mxu0 0
      %743 = vmatprep.subr.bf16.mxu0 0
      %744 = vmatpush1.bf16.msra.mxu0 0
      %745 = vmatprep.subr.bf16.mxu0 0
      %746 = vmatpush1.bf16.msra.mxu0 0
      %747 = vmatprep.mubr.bf16.mxu0 0
      %748 = vmatmul.mubr.bf16.gmra.mrb[0].mxu0 %v713
      %v749 = vpop.f32.mrb[0].mxu0
      %v750 = vadd.f32 0.0, %v749
      %v751 = vpop.f32.mrb[0].mxu0
      %v752 = vpop.f32.mrb[0].mxu0
      %v753 = vpop.f32.mrb[0].mxu0
      %754 = vdwg.mxu0
      %v755 = vmul.f32 %v750, %v513
      %v756 = vld [vmem:[#allocation2] sm:$0x1]
      %758 = vset.pattern.permute.xlu0 0
      %759 = vperm.xlu0 %758, %v756
      %v760 = vpop.permute.xlu0 %759
      %v762 = vlaneseq
      %v763 = vshrl.u32 %v762, 7
      %v764 = vsub.s32 0, %v763
      %v765 = vrot.slane %v760, %v764
      %v766 = vadd.f32 %v755, %v765
      %vm767 = vcmask 122880
      %768 = vst.msk [vmem:[%s397] sm:$0x1] %vm767, %v766
      %p769 = scmp.lt.s32.totalorder %s23, 1
      %s770 = scalar_select %p769, %s23, 1
      %s771 = smul.addr %s770, 2
      %s772 = smul.addr %s771, 4
      %s773 = scalar_lea.vmem %s8, %s772
      %p774 = scmp.lt.s32.totalorder %s23, 1
      %s775 = scalar_select %p774, %s23, 1
      %s776 = scalar_lea.vmem %s9, %s775
      // Predicated region
      $region53: #{net_forward.7} parent=51 // pred_check
        %p777 = pneg %p229
      $region54: #{net_forward.7} parent=51 // pred_check_branch
        %779 = sbr.rel (%p777) target = $region56
      $region55: #{net_forward.7} parent=51 // pred_region
        _
      $region56: #{net_forward.7} parent=51 // pred_fallthru
        _
      // Predicated region
      $region57: #{net_forward.7} parent=51 // pred_check
        %p780 = pneg %p255
      $region58: #{net_forward.7} parent=51 // pred_check_branch
        %782 = sbr.rel (%p780) target = $region60
      $region59: #{net_forward.7} parent=51 // pred_region
        _
      $region60: #{net_forward.7} parent=51 // pred_fallthru
        _
    $region52: #{net_forward.7} parent=5 // pred_fallthru
      _
    %p783 = scmp.le.s32.totalorder 2, %s18
    // Predicated region
    $region61: #{net_forward.7} parent=5 // pred_check
      %p784 = pneg %p783
    $region62: #{net_forward.7} parent=5 // pred_check_branch
      %786 = sbr.rel (%p784) target = $region64
    $region63: #{net_forward.7} parent=5 // pred_region
      %s787 = ssub.s32 %s18, 2
      // Predicated region
      $region65: #{net_forward.7} parent=63 // pred_check
        %p788 = pneg %p235
      $region66: #{net_forward.7} parent=63 // pred_check_branch
        %790 = sbr.rel (%p788) target = $region68
      $region67: #{net_forward.7} parent=63 // pred_region
        %p791 = scmp.lt.s32.totalorder %s24, 1
        %s792 = scalar_select %p791, %s24, 1
        %s793 = smul.addr %s792, 2
        %s794 = smul.addr %s793, 4
        %s795 = scalar_lea.vmem %s8, %s794
      $region68: #{net_forward.7} parent=63 // pred_fallthru
        _
      // Predicated region
      $region69: #{net_forward.7} parent=63 // pred_check
        %p796 = pneg %p261
      $region70: #{net_forward.7} parent=63 // pred_check_branch
        %798 = sbr.rel (%p796) target = $region72
      $region71: #{net_forward.7} parent=63 // pred_region
        %p799 = scmp.lt.s32.totalorder %s24, 1
        %s800 = scalar_select %p799, %s24, 1
        %s801 = scalar_lea.vmem %s9, %s800
      $region72: #{net_forward.7} parent=63 // pred_fallthru
        _
    $region64: #{net_forward.7} parent=5 // pred_fallthru
      _
  $region6: #{net_forward.7} parent=0 // loop_footer
    %s22 = sadd.s32 1, %s18
  $region7: #{net_forward.7} parent=0 // loop_footer_branch
    %17 = sbr.rel target = $region3
  $region8: #{net_forward.7} parent=0 // loop_exit
    _

// kernel: net_forward.8
$region0: #{net_forward.8}
  #allocation0 [shape = 'u32[]', space=smem, size = 0x4, offset = 0x4, fixed_abs, tag = 'smem constant byte address 0x4 - core index']
  #allocation1 [shape = 'u32[144,128]{1,0:T(1,128)}', space=vmem, size = 0x12000, scoped, tag = 'internal scratch']
  %s0 = inlined_call_operand.vmem [shape: bf16[2,16,32], index: 0, kind: input, shape index: {}]
  %s1 = inlined_call_operand.vmem [shape: f32[2,16,1], index: 1, kind: input, shape index: {}]
  %s2 = inlined_call_operand.vmem [shape: f32[2,16,1], index: 2, kind: input, shape index: {}]
  %s3 = inlined_call_operand.vmem [shape: bf16[2,16,32], index: 3, kind: output, shape index: {0}]
  %s4 = inlined_call_operand.vmem [shape: f32[2,2,32], index: 4, kind: output, shape index: {1}]
  %5 = xla_tuple %s3, %s4
  %s6 = sld [smem:[#allocation0]]
  $region53: #{net_forward.8} parent=0
    _
  %s8 = ssub.s32 1, %s6
  %s9 = scalar_select 0, %s8, %s6
  loop: start=0, step=1, limit=4
  $region2: #{net_forward.8} parent=0 // loop_pre_header
    _
  $region3: #{net_forward.8} parent=0 // loop_header
    %s11 = sphi 0, %s15
    %p12 = scmp.ge.s32.totalorder %s11, 4
    %s21 = sphi 0, %s23
    %s24 = sphi 0, %s21
    %s25 = sphi 0, %s24
    %s41 = sphi 0, %s25
    %s47 = sphi 0, %s49
    %s50 = sphi 0, %s47
    %s51 = sphi 0, %s50
    %s67 = sphi 0, %s51
    %s73 = sphi 0, %s75
    %s76 = sphi 0, %s73
    %s77 = sphi 0, %s76
    %s93 = sphi 0, %s77
    %s99 = sphi 0, %s101
    %s102 = sphi 0, %s99
    %s103 = sphi 0, %s102
    %s119 = sphi 0, %s103
    %s125 = sphi 0, %s127
    %s128 = sphi 0, %s125
    %s129 = sphi 0, %s128
    %s145 = sphi 0, %s129
  $region4: #{net_forward.8} parent=0 // loop_header_branch
    %14 = sbr.rel (%p12) target = $region8
  $region5: #{net_forward.8} parent=0 // loop_body
    %s16 = ssub.s32 %s11, 1
    %s17 = ssub.s32 %s11, 2
    %s18 = sadd.s32 %s11, 1
    %s19 = ssub.s32 %s11, %s18
    %p20 = scmp.eq.s32.totalorder %s19, 0
    %s22 = sadd.s32 %s21, 1
    %s23 = scalar_select %p20, %s21, %s22
    %p26 = pneg %p20
    %p27 = scmp.eq.s32.totalorder %s11, 1
    %p28 = por %p26, %p27
    %p29 = scmp.ne.s32.totalorder %s21, %s24
    %p30 = scmp.eq.s32.totalorder %s11, 0
    %p31 = por %p29, %p30
    %p32 = scmp.ne.s32.totalorder %s21, %s24
    %p33 = scmp.eq.s32.totalorder %s16, 1
    %p34 = por %p32, %p33
    %p35 = scmp.ne.s32.totalorder %s24, %s25
    %p36 = scmp.eq.s32.totalorder %s16, 0
    %p37 = por %p35, %p36
    %p38 = scmp.ne.s32.totalorder %s24, %s25
    %p39 = scmp.eq.s32.totalorder %s17, 1
    %p40 = por %p38, %p39
    %p42 = scmp.ne.s32.totalorder %s25, %s41
    %p43 = scmp.eq.s32.totalorder %s17, 0
    %p44 = por %p42, %p43
    %s45 = ssub.s32 %s11, %s18
    %p46 = scmp.eq.s32.totalorder %s45, 0
    %s48 = sadd.s32 %s47, 1
    %s49 = scalar_select %p46, %s47, %s48
    %p52 = pneg %p46
    %p53 = scmp.eq.s32.totalorder %s11, 1
    %p54 = por %p52, %p53
    %p55 = scmp.ne.s32.totalorder %s47, %s50
    %p56 = scmp.eq.s32.totalorder %s11, 0
    %p57 = por %p55, %p56
    %p58 = scmp.ne.s32.totalorder %s47, %s50
    %p59 = scmp.eq.s32.totalorder %s16, 1
    %p60 = por %p58, %p59
    %p61 = scmp.ne.s32.totalorder %s50, %s51
    %p62 = scmp.eq.s32.totalorder %s16, 0
    %p63 = por %p61, %p62
    %p64 = scmp.ne.s32.totalorder %s50, %s51
    %p65 = scmp.eq.s32.totalorder %s17, 1
    %p66 = por %p64, %p65
    %p68 = scmp.ne.s32.totalorder %s51, %s67
    %p69 = scmp.eq.s32.totalorder %s17, 0
    %p70 = por %p68, %p69
    %s71 = ssub.s32 %s11, %s18
    %p72 = scmp.eq.s32.totalorder %s71, 0
    %s74 = sadd.s32 %s73, 1
    %s75 = scalar_select %p72, %s73, %s74
    %p78 = pneg %p72
    %p79 = scmp.eq.s32.totalorder %s11, 1
    %p80 = por %p78, %p79
    %p81 = scmp.ne.s32.totalorder %s73, %s76
    %p82 = scmp.eq.s32.totalorder %s11, 0
    %p83 = por %p81, %p82
    %p84 = scmp.ne.s32.totalorder %s73, %s76
    %p85 = scmp.eq.s32.totalorder %s16, 1
    %p86 = por %p84, %p85
    %p87 = scmp.ne.s32.totalorder %s76, %s77
    %p88 = scmp.eq.s32.totalorder %s16, 0
    %p89 = por %p87, %p88
    %p90 = scmp.ne.s32.totalorder %s76, %s77
    %p91 = scmp.eq.s32.totalorder %s17, 1
    %p92 = por %p90, %p91
    %p94 = scmp.ne.s32.totalorder %s77, %s93
    %p95 = scmp.eq.s32.totalorder %s17, 0
    %p96 = por %p94, %p95
    %s97 = ssub.s32 %s11, %s18
    %p98 = scmp.eq.s32.totalorder %s97, 0
    %s100 = sadd.s32 %s99, 1
    %s101 = scalar_select %p98, %s99, %s100
    %p104 = pneg %p98
    %p105 = scmp.eq.s32.totalorder %s11, 1
    %p106 = por %p104, %p105
    %p107 = scmp.ne.s32.totalorder %s99, %s102
    %p108 = scmp.eq.s32.totalorder %s11, 0
    %p109 = por %p107, %p108
    %p110 = scmp.ne.s32.totalorder %s99, %s102
    %p111 = scmp.eq.s32.totalorder %s16, 1
    %p112 = por %p110, %p111
    %p113 = scmp.ne.s32.totalorder %s102, %s103
    %p114 = scmp.eq.s32.totalorder %s16, 0
    %p115 = por %p113, %p114
    %p116 = scmp.ne.s32.totalorder %s102, %s103
    %p117 = scmp.eq.s32.totalorder %s17, 1
    %p118 = por %p116, %p117
    %p120 = scmp.ne.s32.totalorder %s103, %s119
    %p121 = scmp.eq.s32.totalorder %s17, 0
    %p122 = por %p120, %p121
    %s123 = ssub.s32 %s11, %s18
    %p124 = scmp.eq.s32.totalorder %s123, 0
    %s126 = sadd.s32 %s125, 1
    %s127 = scalar_select %p124, %s125, %s126
    %p130 = pneg %p124
    %p131 = scmp.eq.s32.totalorder %s11, 1
    %p132 = por %p130, %p131
    %p133 = scmp.ne.s32.totalorder %s125, %s128
    %p134 = scmp.eq.s32.totalorder %s11, 0
    %p135 = por %p133, %p134
    %p136 = scmp.ne.s32.totalorder %s125, %s128
    %p137 = scmp.eq.s32.totalorder %s16, 1
    %p138 = por %p136, %p137
    %p139 = scmp.ne.s32.totalorder %s128, %s129
    %p140 = scmp.eq.s32.totalorder %s16, 0
    %p141 = por %p139, %p140
    %p142 = scmp.ne.s32.totalorder %s128, %s129
    %p143 = scmp.eq.s32.totalorder %s17, 1
    %p144 = por %p142, %p143
    %p146 = scmp.ne.s32.totalorder %s129, %s145
    %p147 = scmp.eq.s32.totalorder %s17, 0
    %p148 = por %p146, %p147
    %p149 = scmp.le.s32.totalorder 1, %s11
    %p150 = scmp.lt.s32.totalorder %s11, 3
    %p151 = pnand %p149, %p150
    %p152 = pneg %p151
    // Predicated region
    $region9: #{net_forward.8} parent=5 // pred_check
      _
    $region10: #{net_forward.8} parent=5 // pred_check_branch
      %154 = sbr.rel (%p151) target = $region12
    $region11: #{net_forward.8} parent=5 // pred_region
      %s155 = ssub.s32 %s11, 1
    $region12: #{net_forward.8} parent=5 // pred_fallthru
      _
    %p156 = scmp.lt.s32.totalorder %s11, 2
    // Predicated region
    $region13: #{net_forward.8} parent=5 // pred_check
      %p157 = pneg %p156
    $region14: #{net_forward.8} parent=5 // pred_check_branch
      %159 = sbr.rel (%p157) target = $region16
    $region15: #{net_forward.8} parent=5 // pred_region
      // Predicated region
      $region17: #{net_forward.8} parent=15 // pred_check
        %p160 = pneg %p31
      $region18: #{net_forward.8} parent=15 // pred_check_branch
        %162 = sbr.rel (%p160) target = $region20
      $region19: #{net_forward.8} parent=15 // pred_region
        %p163 = scmp.lt.s32.totalorder %s11, 1
        %s164 = scalar_select %p163, %s11, 1
        %s165 = smul.addr %s164, 2
        %s166 = smul.addr %s165, 4
        %s167 = scalar_lea.vmem %s0, %s166
      $region20: #{net_forward.8} parent=15 // pred_fallthru
        _
      // Predicated region
      $region21: #{net_forward.8} parent=15 // pred_check
        %p168 = pneg %p57
      $region22: #{net_forward.8} parent=15 // pred_check_branch
        %170 = sbr.rel (%p168) target = $region24
      $region23: #{net_forward.8} parent=15 // pred_region
        %p171 = scmp.lt.s32.totalorder %s11, 1
        %s172 = scalar_select %p171, %s11, 1
        %s173 = smul.addr %s172, 2
        %s174 = smul.addr %s173, 8
        %s175 = scalar_lea.vmem %s1, %s174
      $region24: #{net_forward.8} parent=15 // pred_fallthru
        _
      // Predicated region
      $region25: #{net_forward.8} parent=15 // pred_check
        %p176 = pneg %p83
      $region26: #{net_forward.8} parent=15 // pred_check_branch
        %178 = sbr.rel (%p176) target = $region28
      $region27: #{net_forward.8} parent=15 // pred_region
        %p179 = scmp.lt.s32.totalorder %s11, 1
        %s180 = scalar_select %p179, %s11, 1
        %s181 = smul.addr %s180, 2
        %s182 = smul.addr %s181, 8
        %s183 = scalar_lea.vmem %s2, %s182
      $region28: #{net_forward.8} parent=15 // pred_fallthru
        _
    $region16: #{net_forward.8} parent=5 // pred_fallthru
      _
    %p184 = scmp.le.s32.totalorder 1, %s11
    %p185 = scmp.lt.s32.totalorder %s11, 3
    %p186 = pnand %p184, %p185
    %p187 = pneg %p186
    // Predicated region
    $region29: #{net_forward.8} parent=5 // pred_check
      _
    $region30: #{net_forward.8} parent=5 // pred_check_branch
      %189 = sbr.rel (%p186) target = $region32
    $region31: #{net_forward.8} parent=5 // pred_region
      %s190 = ssub.s32 %s11, 1
      %p191 = scmp.lt.s32.totalorder %s16, 1
      %s192 = scalar_select %p191, %s16, 1
      %s193 = smul.addr %s192, 2
      %s194 = smul.addr %s193, 4
      %s195 = scalar_lea.vmem %s0, %s194
      %p196 = pneg %p37
      %p197 = pneg %p34
      %p198 = scmp.lt.s32.totalorder %s16, 1
      %s199 = scalar_select %p198, %s16, 1
      %s200 = smul.addr %s199, 2
      %s201 = smul.addr %s200, 8
      %s202 = scalar_lea.vmem %s1, %s201
      %p203 = pneg %p63
      %p204 = pneg %p60
      %p205 = scmp.lt.s32.totalorder %s16, 1
      %s206 = scalar_select %p205, %s16, 1
      %s207 = smul.addr %s206, 2
      %s208 = smul.addr %s207, 8
      %s209 = scalar_lea.vmem %s2, %s208
      %p210 = pneg %p89
      %p211 = pneg %p86
      %p212 = pneg %p115
      %p213 = pneg %p112
      %p214 = scmp.lt.s32.totalorder %s16, 1
      %s215 = scalar_select %p214, %s16, 1
      %s216 = smul.addr %s215, 2
      %s217 = smul.addr %s216, 4
      %s218 = scalar_lea.vmem %s3, %s217
      %p219 = pneg %p141
      %p220 = pneg %p138
      %p221 = scmp.lt.s32.totalorder %s16, 1
      %s222 = scalar_select %p221, %s16, 1
      %s223 = smul.addr %s222, 2
      %s224 = scalar_lea.vmem %s4, %s223
      %p225 = scmp.lt.s32.totalorder %s16, 1
      %s226 = scalar_select %p225, %s16, 1
      %s227 = smul.addr %s226, 2
      %s228 = smul.addr %s227, 4
      %s229 = scalar_lea.vmem %s0, %s228
      %p230 = scmp.lt.s32.totalorder %s16, 1
      %s231 = scalar_select %p230, %s16, 1
      %s232 = smul.addr %s231, 2
      %s233 = smul.addr %s232, 8
      %s234 = scalar_lea.vmem %s1, %s233
      %p235 = scmp.lt.s32.totalorder %s16, 1
      %s236 = scalar_select %p235, %s16, 1
      %s237 = smul.addr %s236, 2
      %s238 = smul.addr %s237, 8
      %s239 = scalar_lea.vmem %s2, %s238
      %p240 = scmp.lt.s32.totalorder %s16, 1
      %s241 = scalar_select %p240, %s16, 1
      %s242 = smul.addr %s241, 2
      %s243 = smul.addr %s242, 4
      %s244 = scalar_lea.vmem %s3, %s243
      %p245 = scmp.lt.s32.totalorder %s16, 1
      %s246 = scalar_select %p245, %s16, 1
      %s247 = smul.addr %s246, 2
      %s248 = scalar_lea.vmem %s4, %s247
      %v249 = vld [vmem:[%s229] sm:$0xf]
      %v250 = vld [vmem:[%s229 + $0x4] sm:$0xf]
      %v251 = vunpack.c.l.bf16 %v249
      %v252 = vunpack.c.l.bf16 %v250
      %v253 = vld [vmem:[%s234] sm:$0xff]
      %v254 = vld [vmem:[%s234 + $0x8] sm:$0xff]
      %v255 = vld [vmem:[%s239] sm:$0xff]
      %v256 = vld [vmem:[%s239 + $0x8] sm:$0xff]
      %v257 = vtanh.pop %v253
      %v258 = vtanh.pop %v254
      %v259 = vmul.f32 %v257, %v255
      %v260 = vmul.f32 %v258, %v256
      %262 = vset.pattern.permute.xlu0 0
      %263 = vperm.xlu0 %262, %v259
      %v264 = vpop.permute.xlu0 %263
      %267 = vset.pattern.permute.xlu0 0
      %268 = vperm.xlu0 %267, %v260
      %v269 = vpop.permute.xlu0 %268
      %v271 = vmul.f32 %v251, %v264
      %v272 = vmul.f32 %v252, %v269
      %v273 = vpack.c.bf16 %v272, %v271
      %v275 = vunpack.c.l.b16 %v273
      %v276 = vunpack.c.h.b16 %v273
      %v277 = vpack.c.b16 %v275, %v275
      %v278 = vpack.c.b16 %v276, %v276
      %vm281 = vcmask 257024
      %282 = vst.msk [vmem:[%s244] sm:$0xf] %vm281, %v277
      %283 = vst.msk [vmem:[%s244 + $0x4] sm:$0xf] %vm281, %v278
      %vm284 = vcmask 7168
      %v285 = vsel %vm284, %v255, 0.0
      %v286 = vsel %vm284, %v256, 0.0
      %v287 = vadd.f32 %v285, %v286
      %v288 = vrot.slane %v287, 4
      %v289 = vadd.f32 %v287, %v288
      %v290 = vrot.slane %v289, 2
      %v291 = vadd.f32 %v289, %v290
      %v292 = vrot.slane %v291, 1
      %v293 = vadd.f32 %v291, %v292
      %vm294 = vcmp.gt.f32.partialorder %v255, 0.0
      %vm295 = vcmp.gt.f32.partialorder %v256, 0.0
      %v296 = vsel %vm294, 1, 0
      %v297 = vsel %vm295, 1, 0
      %298 = vset.pattern.permute.xlu0 0
      %299 = vperm.xlu0 %298, %v296
      %v300 = vpop.permute.xlu0 %299
      %301 = vset.pattern.permute.xlu0 0
      %302 = vperm.xlu0 %301, %v297
      %v303 = vpop.permute.xlu0 %302
      %vm304 = vcmp.eq.s32.totalorder %v300, 1
      %vm305 = vcmp.eq.s32.totalorder %v303, 1
      %v306 = vsel %vm304, %v271, -3.4028235e+38
      %v307 = vsel %vm305, %v272, -3.4028235e+38
      %vm308 = vcmask 261120
      %v309 = vsel %vm308, %v306, -inf
      %v310 = vsel %vm308, %v307, -inf
      %v311 = vmax.f32 %v309, %v310
      %v312 = vrot.slane %v311, 4
      %v313 = vmax.f32 %v311, %v312
      %v314 = vrot.slane %v313, 2
      %v315 = vmax.f32 %v313, %v314
      %v316 = vrot.slane %v315, 1
      %v317 = vmax.f32 %v315, %v316
      %vm318 = vcmp.gt.f32.partialorder %v293, 0.0
      %v319 = vsel %vm318, 1, 0
      %320 = vset.pattern.permute.xlu0 0
      %321 = vperm.xlu0 %320, %v319
      %v322 = vpop.permute.xlu0 %321
      %vm323 = vcmp.eq.s32.totalorder %v322, 1
      %v324 = vsel %vm323, %v317, 0.0
      %v325 = vsel %vm308, %v271, 0.0
      %v326 = vsel %vm308, %v272, 0.0
      %v327 = vadd.f32 %v325, %v326
      %v328 = vrot.slane %v327, 4
      %v329 = vadd.f32 %v327, %v328
      %v330 = vrot.slane %v329, 2
      %v331 = vadd.f32 %v329, %v330
      %v332 = vrot.slane %v331, 1
      %v333 = vadd.f32 %v331, %v332
      %v334 = vmax.f32 %v293, 1.0
      %336 = vset.pattern.permute.xlu0 0
      %337 = vperm.xlu0 %336, %v334
      %v338 = vpop.permute.xlu0 %337
      %v340 = vrcp.pop %v338
      %v341 = vmul.f32 %v333, %v340
      %vm342 = vcmask 253952
      %343 = vst.msk [vmem:[%s248] sm:$0x1] %vm342, %v324
      %344 = vst.msk [vmem:[%s248 + $0x1] sm:$0x1] %vm342, %v341
      %p345 = scmp.lt.s32.totalorder %s16, 1
      %s346 = scalar_select %p345, %s16, 1
      %s347 = smul.addr %s346, 2
      %s348 = smul.addr %s347, 4
      %s349 = scalar_lea.vmem %s3, %s348
      %p350 = scmp.lt.s32.totalorder %s16, 1
      %s351 = scalar_select %p350, %s16, 1
      %s352 = smul.addr %s351, 2
      %s353 = scalar_lea.vmem %s4, %s352
      // Predicated region
      $region33: #{net_forward.8} parent=31 // pred_check
        %p354 = pneg %p112
      $region34: #{net_forward.8} parent=31 // pred_check_branch
        %356 = sbr.rel (%p354) target = $region36
      $region35: #{net_forward.8} parent=31 // pred_region
        _
      $region36: #{net_forward.8} parent=31 // pred_fallthru
        _
      // Predicated region
      $region37: #{net_forward.8} parent=31 // pred_check
        %p357 = pneg %p138
      $region38: #{net_forward.8} parent=31 // pred_check_branch
        %359 = sbr.rel (%p357) target = $region40
      $region39: #{net_forward.8} parent=31 // pred_region
        _
      $region40: #{net_forward.8} parent=31 // pred_fallthru
        _
    $region32: #{net_forward.8} parent=5 // pred_fallthru
      _
    %p360 = scmp.le.s32.totalorder 2, %s11
    // Predicated region
    $region41: #{net_forward.8} parent=5 // pred_check
      %p361 = pneg %p360
    $region42: #{net_forward.8} parent=5 // pred_check_branch
      %363 = sbr.rel (%p361) target = $region44
    $region43: #{net_forward.8} parent=5 // pred_region
      %s364 = ssub.s32 %s11, 2
      // Predicated region
      $region45: #{net_forward.8} parent=43 // pred_check
        %p365 = pneg %p118
      $region46: #{net_forward.8} parent=43 // pred_check_branch
        %367 = sbr.rel (%p365) target = $region48
      $region47: #{net_forward.8} parent=43 // pred_region
        %p368 = scmp.lt.s32.totalorder %s17, 1
        %s369 = scalar_select %p368, %s17, 1
        %s370 = smul.addr %s369, 2
        %s371 = smul.addr %s370, 4
        %s372 = scalar_lea.vmem %s3, %s371
      $region48: #{net_forward.8} parent=43 // pred_fallthru
        _
      // Predicated region
      $region49: #{net_forward.8} parent=43 // pred_check
        %p373 = pneg %p144
      $region50: #{net_forward.8} parent=43 // pred_check_branch
        %375 = sbr.rel (%p373) target = $region52
      $region51: #{net_forward.8} parent=43 // pred_region
        %p376 = scmp.lt.s32.totalorder %s17, 1
        %s377 = scalar_select %p376, %s17, 1
        %s378 = smul.addr %s377, 2
        %s379 = scalar_lea.vmem %s4, %s378
      $region52: #{net_forward.8} parent=43 // pred_fallthru
        _
    $region44: #{net_forward.8} parent=5 // pred_fallthru
      _
  $region6: #{net_forward.8} parent=0 // loop_footer
    %s15 = sadd.s32 1, %s11
  $region7: #{net_forward.8} parent=0 // loop_footer_branch
    %10 = sbr.rel target = $region3
  $region8: #{net_forward.8} parent=0 // loop_exit
    _

// kernel: net_forward.12
$region0: #{net_forward.12}
  #allocation0 [shape = 'u32[]', space=smem, size = 0x4, offset = 0x4, fixed_abs, tag = 'smem constant byte address 0x4 - core index']
  #allocation1 [shape = 'u32[144,128]{1,0:T(1,128)}', space=vmem, size = 0x12000, scoped, tag = 'internal scratch']
  %s0 = inlined_call_operand.vmem [shape: bf16[2,16,32], index: 0, kind: input, shape index: {}]
  %s1 = inlined_call_operand.vmem [shape: f32[2,16,1], index: 1, kind: input, shape index: {}]
  %s2 = inlined_call_operand.vmem [shape: f32[2,16,1], index: 2, kind: input, shape index: {}]
  %s3 = inlined_call_operand.hbm [shape: bf16[2,16,32], index: 3, kind: output, shape index: {0}]
  %s4 = inlined_call_operand.vmem [shape: f32[2,2,32], index: 4, kind: output, shape index: {1}]
  %5 = xla_tuple %s3, %s4
  %s6 = sld [smem:[#allocation0]]
  $region53: #{net_forward.12} parent=0
    _
  %s8 = ssub.s32 1, %s6
  %s9 = scalar_select 0, %s8, %s6
  $region1: #{net_forward.12} parent=0
    #allocation2 [shape = 'u8[8192]{0}', space=vmem, size = 0x2000, scoped, tag = 'output window, operand 0']
    #allocation3 [shape = 's32[2]{0}', space=sflag, size = 0x8, scoped, tag = 'scoped memory for net_forward.12']
    %10 = vsyncpa [#allocation3], 0
    %s11 = scalar_lea.sflag [#allocation3], 1
    %12 = vsyncpa %s11, 0
    loop: start=0, step=1, limit=4
    $region2: #{net_forward.12} parent=1 // loop_pre_header
      _
    $region3: #{net_forward.12} parent=1 // loop_header
      %s14 = sphi 0, %s18
      %p15 = scmp.ge.s32.totalorder %s14, 4
      %s24 = sphi 0, %s26
      %s27 = sphi 0, %s24
      %s28 = sphi 0, %s27
      %s44 = sphi 0, %s28
      %s50 = sphi 0, %s52
      %s53 = sphi 0, %s50
      %s54 = sphi 0, %s53
      %s70 = sphi 0, %s54
      %s76 = sphi 0, %s78
      %s79 = sphi 0, %s76
      %s80 = sphi 0, %s79
      %s96 = sphi 0, %s80
      %s102 = sphi 0, %s104
      %s105 = sphi 0, %s102
      %s106 = sphi 0, %s105
      %s122 = sphi 0, %s106
      %s128 = sphi 0, %s130
      %s131 = sphi 0, %s128
      %s132 = sphi 0, %s131
      %s148 = sphi 0, %s132
    $region4: #{net_forward.12} parent=1 // loop_header_branch
      %17 = sbr.rel (%p15) target = $region8
    $region5: #{net_forward.12} parent=1 // loop_body
      %s19 = ssub.s32 %s14, 1
      %s20 = ssub.s32 %s14, 2
      %s21 = sadd.s32 %s14, 1
      %s22 = ssub.s32 %s14, %s21
      %p23 = scmp.eq.s32.totalorder %s22, 0
      %s25 = sadd.s32 %s24, 1
      %s26 = scalar_select %p23, %s24, %s25
      %p29 = pneg %p23
      %p30 = scmp.eq.s32.totalorder %s14, 1
      %p31 = por %p29, %p30
      %p32 = scmp.ne.s32.totalorder %s24, %s27
      %p33 = scmp.eq.s32.totalorder %s14, 0
      %p34 = por %p32, %p33
      %p35 = scmp.ne.s32.totalorder %s24, %s27
      %p36 = scmp.eq.s32.totalorder %s19, 1
      %p37 = por %p35, %p36
      %p38 = scmp.ne.s32.totalorder %s27, %s28
      %p39 = scmp.eq.s32.totalorder %s19, 0
      %p40 = por %p38, %p39
      %p41 = scmp.ne.s32.totalorder %s27, %s28
      %p42 = scmp.eq.s32.totalorder %s20, 1
      %p43 = por %p41, %p42
      %p45 = scmp.ne.s32.totalorder %s28, %s44
      %p46 = scmp.eq.s32.totalorder %s20, 0
      %p47 = por %p45, %p46
      %s48 = ssub.s32 %s14, %s21
      %p49 = scmp.eq.s32.totalorder %s48, 0
      %s51 = sadd.s32 %s50, 1
      %s52 = scalar_select %p49, %s50, %s51
      %p55 = pneg %p49
      %p56 = scmp.eq.s32.totalorder %s14, 1
      %p57 = por %p55, %p56
      %p58 = scmp.ne.s32.totalorder %s50, %s53
      %p59 = scmp.eq.s32.totalorder %s14, 0
      %p60 = por %p58, %p59
      %p61 = scmp.ne.s32.totalorder %s50, %s53
      %p62 = scmp.eq.s32.totalorder %s19, 1
      %p63 = por %p61, %p62
      %p64 = scmp.ne.s32.totalorder %s53, %s54
      %p65 = scmp.eq.s32.totalorder %s19, 0
      %p66 = por %p64, %p65
      %p67 = scmp.ne.s32.totalorder %s53, %s54
      %p68 = scmp.eq.s32.totalorder %s20, 1
      %p69 = por %p67, %p68
      %p71 = scmp.ne.s32.totalorder %s54, %s70
      %p72 = scmp.eq.s32.totalorder %s20, 0
      %p73 = por %p71, %p72
      %s74 = ssub.s32 %s14, %s21
      %p75 = scmp.eq.s32.totalorder %s74, 0
      %s77 = sadd.s32 %s76, 1
      %s78 = scalar_select %p75, %s76, %s77
      %p81 = pneg %p75
      %p82 = scmp.eq.s32.totalorder %s14, 1
      %p83 = por %p81, %p82
      %p84 = scmp.ne.s32.totalorder %s76, %s79
      %p85 = scmp.eq.s32.totalorder %s14, 0
      %p86 = por %p84, %p85
      %p87 = scmp.ne.s32.totalorder %s76, %s79
      %p88 = scmp.eq.s32.totalorder %s19, 1
      %p89 = por %p87, %p88
      %p90 = scmp.ne.s32.totalorder %s79, %s80
      %p91 = scmp.eq.s32.totalorder %s19, 0
      %p92 = por %p90, %p91
      %p93 = scmp.ne.s32.totalorder %s79, %s80
      %p94 = scmp.eq.s32.totalorder %s20, 1
      %p95 = por %p93, %p94
      %p97 = scmp.ne.s32.totalorder %s80, %s96
      %p98 = scmp.eq.s32.totalorder %s20, 0
      %p99 = por %p97, %p98
      %s100 = ssub.s32 %s14, %s21
      %p101 = scmp.eq.s32.totalorder %s100, 0
      %s103 = sadd.s32 %s102, 1
      %s104 = scalar_select %p101, %s102, %s103
      %p107 = pneg %p101
      %p108 = scmp.eq.s32.totalorder %s14, 1
      %p109 = por %p107, %p108
      %p110 = scmp.ne.s32.totalorder %s102, %s105
      %p111 = scmp.eq.s32.totalorder %s14, 0
      %p112 = por %p110, %p111
      %p113 = scmp.ne.s32.totalorder %s102, %s105
      %p114 = scmp.eq.s32.totalorder %s19, 1
      %p115 = por %p113, %p114
      %p116 = scmp.ne.s32.totalorder %s105, %s106
      %p117 = scmp.eq.s32.totalorder %s19, 0
      %p118 = por %p116, %p117
      %p119 = scmp.ne.s32.totalorder %s105, %s106
      %p120 = scmp.eq.s32.totalorder %s20, 1
      %p121 = por %p119, %p120
      %p123 = scmp.ne.s32.totalorder %s106, %s122
      %p124 = scmp.eq.s32.totalorder %s20, 0
      %p125 = por %p123, %p124
      %s126 = ssub.s32 %s14, %s21
      %p127 = scmp.eq.s32.totalorder %s126, 0
      %s129 = sadd.s32 %s128, 1
      %s130 = scalar_select %p127, %s128, %s129
      %p133 = pneg %p127
      %p134 = scmp.eq.s32.totalorder %s14, 1
      %p135 = por %p133, %p134
      %p136 = scmp.ne.s32.totalorder %s128, %s131
      %p137 = scmp.eq.s32.totalorder %s14, 0
      %p138 = por %p136, %p137
      %p139 = scmp.ne.s32.totalorder %s128, %s131
      %p140 = scmp.eq.s32.totalorder %s19, 1
      %p141 = por %p139, %p140
      %p142 = scmp.ne.s32.totalorder %s131, %s132
      %p143 = scmp.eq.s32.totalorder %s19, 0
      %p144 = por %p142, %p143
      %p145 = scmp.ne.s32.totalorder %s131, %s132
      %p146 = scmp.eq.s32.totalorder %s20, 1
      %p147 = por %p145, %p146
      %p149 = scmp.ne.s32.totalorder %s132, %s148
      %p150 = scmp.eq.s32.totalorder %s20, 0
      %p151 = por %p149, %p150
      %p152 = scmp.le.s32.totalorder 1, %s14
      %p153 = scmp.lt.s32.totalorder %s14, 3
      %p154 = pnand %p152, %p153
      %p155 = pneg %p154
      // Predicated region
      $region9: #{net_forward.12} parent=5 // pred_check
        _
      $region10: #{net_forward.12} parent=5 // pred_check_branch
        %157 = sbr.rel (%p154) target = $region12
      $region11: #{net_forward.12} parent=5 // pred_region
        %s158 = ssub.s32 %s14, 1
      $region12: #{net_forward.12} parent=5 // pred_fallthru
        _
      %p159 = scmp.lt.s32.totalorder %s14, 2
      // Predicated region
      $region13: #{net_forward.12} parent=5 // pred_check
        %p160 = pneg %p159
      $region14: #{net_forward.12} parent=5 // pred_check_branch
        %162 = sbr.rel (%p160) target = $region16
      $region15: #{net_forward.12} parent=5 // pred_region
        // Predicated region
        $region17: #{net_forward.12} parent=15 // pred_check
          %p163 = pneg %p34
        $region18: #{net_forward.12} parent=15 // pred_check_branch
          %165 = sbr.rel (%p163) target = $region20
        $region19: #{net_forward.12} parent=15 // pred_region
          %p166 = scmp.lt.s32.totalorder %s14, 1
          %s167 = scalar_select %p166, %s14, 1
          %s168 = smul.addr %s167, 2
          %s169 = smul.addr %s168, 4
          %s170 = scalar_lea.vmem %s0, %s169
        $region20: #{net_forward.12} parent=15 // pred_fallthru
          _
        // Predicated region
        $region21: #{net_forward.12} parent=15 // pred_check
          %p171 = pneg %p60
        $region22: #{net_forward.12} parent=15 // pred_check_branch
          %173 = sbr.rel (%p171) target = $region24
        $region23: #{net_forward.12} parent=15 // pred_region
          %p174 = scmp.lt.s32.totalorder %s14, 1
          %s175 = scalar_select %p174, %s14, 1
          %s176 = smul.addr %s175, 2
          %s177 = smul.addr %s176, 8
          %s178 = scalar_lea.vmem %s1, %s177
        $region24: #{net_forward.12} parent=15 // pred_fallthru
          _
        // Predicated region
        $region25: #{net_forward.12} parent=15 // pred_check
          %p179 = pneg %p86
        $region26: #{net_forward.12} parent=15 // pred_check_branch
          %181 = sbr.rel (%p179) target = $region28
        $region27: #{net_forward.12} parent=15 // pred_region
          %p182 = scmp.lt.s32.totalorder %s14, 1
          %s183 = scalar_select %p182, %s14, 1
          %s184 = smul.addr %s183, 2
          %s185 = smul.addr %s184, 8
          %s186 = scalar_lea.vmem %s2, %s185
        $region28: #{net_forward.12} parent=15 // pred_fallthru
          _
      $region16: #{net_forward.12} parent=5 // pred_fallthru
        _
      %p187 = scmp.le.s32.totalorder 1, %s14
      %p188 = scmp.lt.s32.totalorder %s14, 3
      %p189 = pnand %p187, %p188
      %p190 = pneg %p189
      // Predicated region
      $region29: #{net_forward.12} parent=5 // pred_check
        _
      $region30: #{net_forward.12} parent=5 // pred_check_branch
        %192 = sbr.rel (%p189) target = $region32
      $region31: #{net_forward.12} parent=5 // pred_region
        %s193 = ssub.s32 %s14, 1
        %p194 = scmp.lt.s32.totalorder %s19, 1
        %s195 = scalar_select %p194, %s19, 1
        %s196 = smul.addr %s195, 2
        %s197 = smul.addr %s196, 4
        %s198 = scalar_lea.vmem %s0, %s197
        %p199 = pneg %p40
        %p200 = pneg %p37
        %p201 = scmp.lt.s32.totalorder %s19, 1
        %s202 = scalar_select %p201, %s19, 1
        %s203 = smul.addr %s202, 2
        %s204 = smul.addr %s203, 8
        %s205 = scalar_lea.vmem %s1, %s204
        %p206 = pneg %p66
        %p207 = pneg %p63
        %p208 = scmp.lt.s32.totalorder %s19, 1
        %s209 = scalar_select %p208, %s19, 1
        %s210 = smul.addr %s209, 2
        %s211 = smul.addr %s210, 8
        %s212 = scalar_lea.vmem %s2, %s211
        %p213 = pneg %p92
        %p214 = pneg %p89
        %p215 = pneg %p118
        %p216 = pneg %p115
        %s217 = sand.u32 %s105, 1
        %s218 = scalar_lea.sflag [#allocation3], %s217
        %s219 = sand.u32 %s105, 1
        %s220 = smul.addr %s219, 8
        %s221 = scalar_lea.vmem [#allocation2], %s220
        %p222 = pneg %p144
        %p223 = pneg %p141
        %p224 = scmp.lt.s32.totalorder %s19, 1
        %s225 = scalar_select %p224, %s19, 1
        %s226 = smul.addr %s225, 2
        %s227 = scalar_lea.vmem %s4, %s226
        %p228 = scmp.lt.s32.totalorder %s19, 1
        %s229 = scalar_select %p228, %s19, 1
        %s230 = smul.addr %s229, 2
        %s231 = smul.addr %s230, 4
        %s232 = scalar_lea.vmem %s0, %s231
        %p233 = scmp.lt.s32.totalorder %s19, 1
        %s234 = scalar_select %p233, %s19, 1
        %s235 = smul.addr %s234, 2
        %s236 = smul.addr %s235, 8
        %s237 = scalar_lea.vmem %s1, %s236
        %p238 = scmp.lt.s32.totalorder %s19, 1
        %s239 = scalar_select %p238, %s19, 1
        %s240 = smul.addr %s239, 2
        %s241 = smul.addr %s240, 8
        %s242 = scalar_lea.vmem %s2, %s241
        %p243 = scmp.lt.s32.totalorder %s19, 1
        %s244 = scalar_select %p243, %s19, 1
        %s245 = smul.addr %s244, 2
        %s246 = scalar_lea.vmem %s4, %s245
        %v247 = vld [vmem:[%s232] sm:$0xf]
        %v248 = vld [vmem:[%s232 + $0x4] sm:$0xf]
        %v249 = vunpack.c.l.bf16 %v247
        %v250 = vunpack.c.l.bf16 %v248
        %v251 = vld [vmem:[%s237] sm:$0xff]
        %v252 = vld [vmem:[%s237 + $0x8] sm:$0xff]
        %v253 = vld [vmem:[%s242] sm:$0xff]
        %v254 = vld [vmem:[%s242 + $0x8] sm:$0xff]
        %v255 = vtanh.pop %v251
        %v256 = vtanh.pop %v252
        %v257 = vmul.f32 %v255, %v253
        %v258 = vmul.f32 %v256, %v254
        %260 = vset.pattern.permute.xlu0 0
        %261 = vperm.xlu0 %260, %v257
        %v262 = vpop.permute.xlu0 %261
        %265 = vset.pattern.permute.xlu0 0
        %266 = vperm.xlu0 %265, %v258
        %v267 = vpop.permute.xlu0 %266
        %v269 = vmul.f32 %v249, %v262
        %v270 = vmul.f32 %v250, %v267
        %v271 = vpack.c.bf16 %v270, %v269
        %v273 = vunpack.c.l.b16 %v271
        %v274 = vunpack.c.h.b16 %v271
        %v275 = vpack.c.b16 %v273, %v273
        %v276 = vpack.c.b16 %v274, %v274
        %vm279 = vcmask 257024
        %280 = vst.msk [vmem:[%s221] sm:$0xf] %vm279, %v275
        %281 = vst.msk [vmem:[%s221 + $0x4] sm:$0xf] %vm279, %v276
        %vm282 = vcmask 7168
        %v283 = vsel %vm282, %v253, 0.0
        %v284 = vsel %vm282, %v254, 0.0
        %v285 = vadd.f32 %v283, %v284
        %v286 = vrot.slane %v285, 4
        %v287 = vadd.f32 %v285, %v286
        %v288 = vrot.slane %v287, 2
        %v289 = vadd.f32 %v287, %v288
        %v290 = vrot.slane %v289, 1
        %v291 = vadd.f32 %v289, %v290
        %vm292 = vcmp.gt.f32.partialorder %v253, 0.0
        %vm293 = vcmp.gt.f32.partialorder %v254, 0.0
        %v294 = vsel %vm292, 1, 0
        %v295 = vsel %vm293, 1, 0
        %296 = vset.pattern.permute.xlu0 0
        %297 = vperm.xlu0 %296, %v294
        %v298 = vpop.permute.xlu0 %297
        %299 = vset.pattern.permute.xlu0 0
        %300 = vperm.xlu0 %299, %v295
        %v301 = vpop.permute.xlu0 %300
        %vm302 = vcmp.eq.s32.totalorder %v298, 1
        %vm303 = vcmp.eq.s32.totalorder %v301, 1
        %v304 = vsel %vm302, %v269, -3.4028235e+38
        %v305 = vsel %vm303, %v270, -3.4028235e+38
        %vm306 = vcmask 261120
        %v307 = vsel %vm306, %v304, -inf
        %v308 = vsel %vm306, %v305, -inf
        %v309 = vmax.f32 %v307, %v308
        %v310 = vrot.slane %v309, 4
        %v311 = vmax.f32 %v309, %v310
        %v312 = vrot.slane %v311, 2
        %v313 = vmax.f32 %v311, %v312
        %v314 = vrot.slane %v313, 1
        %v315 = vmax.f32 %v313, %v314
        %vm316 = vcmp.gt.f32.partialorder %v291, 0.0
        %v317 = vsel %vm316, 1, 0
        %318 = vset.pattern.permute.xlu0 0
        %319 = vperm.xlu0 %318, %v317
        %v320 = vpop.permute.xlu0 %319
        %vm321 = vcmp.eq.s32.totalorder %v320, 1
        %v322 = vsel %vm321, %v315, 0.0
        %v323 = vsel %vm306, %v269, 0.0
        %v324 = vsel %vm306, %v270, 0.0
        %v325 = vadd.f32 %v323, %v324
        %v326 = vrot.slane %v325, 4
        %v327 = vadd.f32 %v325, %v326
        %v328 = vrot.slane %v327, 2
        %v329 = vadd.f32 %v327, %v328
        %v330 = vrot.slane %v329, 1
        %v331 = vadd.f32 %v329, %v330
        %v332 = vmax.f32 %v291, 1.0
        %334 = vset.pattern.permute.xlu0 0
        %335 = vperm.xlu0 %334, %v332
        %v336 = vpop.permute.xlu0 %335
        %v338 = vrcp.pop %v336
        %v339 = vmul.f32 %v331, %v338
        %vm340 = vcmask 253952
        %341 = vst.msk [vmem:[%s246] sm:$0x1] %vm340, %v322
        %342 = vst.msk [vmem:[%s246 + $0x1] sm:$0x1] %vm340, %v339
        %s343 = sand.u32 %s105, 1
        %s344 = scalar_lea.sflag [#allocation3], %s343
        %s345 = sand.u32 %s105, 1
        %s346 = smul.addr %s345, 8
        %s347 = scalar_lea.vmem [#allocation2], %s346
        %p348 = scmp.lt.s32.totalorder %s19, 1
        %s349 = scalar_select %p348, %s19, 1
        %s350 = smul.addr %s349, 2
        %s351 = scalar_lea.vmem %s4, %s350
        // Predicated region
        $region33: #{net_forward.12} parent=31 // pred_check
          %p352 = pneg %p115
        $region34: #{net_forward.12} parent=31 // pred_check_branch
          %354 = sbr.rel (%p352) target = $region36
        $region35: #{net_forward.12} parent=31 // pred_region
          %s356 = ssub.s32 128, 128
          %357 = vsyncadd %s344, %s356
          %s358 = smul.addr %s19, 2
          %s359 = smul.addr %s358, 64
          %s360 = scalar_lea.hbm %s3, %s359
          %s361 = sshll.u32 %s347, 4
          %s362 = int_to_ptr.vmem [resolvable:$true] %s361
          %367 = dma.vmem_to_hbm [thread:$0]  %s362, 128, %s360, %s344, 64, 64, 4
        $region36: #{net_forward.12} parent=31 // pred_fallthru
          _
        // Predicated region
        $region37: #{net_forward.12} parent=31 // pred_check
          %p368 = pneg %p141
        $region38: #{net_forward.12} parent=31 // pred_check_branch
          %370 = sbr.rel (%p368) target = $region40
        $region39: #{net_forward.12} parent=31 // pred_region
          _
        $region40: #{net_forward.12} parent=31 // pred_fallthru
          _
      $region32: #{net_forward.12} parent=5 // pred_fallthru
        _
      %p371 = scmp.le.s32.totalorder 2, %s14
      // Predicated region
      $region41: #{net_forward.12} parent=5 // pred_check
        %p372 = pneg %p371
      $region42: #{net_forward.12} parent=5 // pred_check_branch
        %374 = sbr.rel (%p372) target = $region44
      $region43: #{net_forward.12} parent=5 // pred_region
        %s375 = ssub.s32 %s14, 2
        // Predicated region
        $region45: #{net_forward.12} parent=43 // pred_check
          %p376 = pneg %p121
        $region46: #{net_forward.12} parent=43 // pred_check_branch
          %378 = sbr.rel (%p376) target = $region48
        $region47: #{net_forward.12} parent=43 // pred_region
          %s379 = sand.u32 %s106, 1
          %s380 = scalar_lea.sflag [#allocation3], %s379
          %s381 = sand.u32 %s106, 1
          %s382 = smul.addr %s381, 8
          %s383 = scalar_lea.vmem [#allocation2], %s382
          %384 = dma.done %s380, 128
        $region48: #{net_forward.12} parent=43 // pred_fallthru
          _
        // Predicated region
        $region49: #{net_forward.12} parent=43 // pred_check
          %p385 = pneg %p147
        $region50: #{net_forward.12} parent=43 // pred_check_branch
          %387 = sbr.rel (%p385) target = $region52
        $region51: #{net_forward.12} parent=43 // pred_region
          %p388 = scmp.lt.s32.totalorder %s20, 1
          %s389 = scalar_select %p388, %s20, 1
          %s390 = smul.addr %s389, 2
          %s391 = scalar_lea.vmem %s4, %s390
        $region52: #{net_forward.12} parent=43 // pred_fallthru
          _
      $region44: #{net_forward.12} parent=5 // pred_fallthru
        _
    $region6: #{net_forward.12} parent=1 // loop_footer
      %s18 = sadd.s32 1, %s14
    $region7: #{net_forward.12} parent=1 // loop_footer_branch
      %13 = sbr.rel target = $region3
    $region8: #{net_forward.12} parent=1 // loop_exit
      _
    %392 = vsyncpa [#allocation3], 1
    %s393 = scalar_lea.sflag [#allocation3], 1
    %394 = vsyncpa %s393, 1

// kernel: net_forward.9
$region0: #{net_forward.9}
  #allocation0 [shape = 'u32[]', space=smem, size = 0x4, offset = 0x4, fixed_abs, tag = 'smem constant byte address 0x4 - core index']
  #allocation1 [shape = 'u32[144,128]{1,0:T(1,128)}', space=vmem, size = 0x12000, scoped, tag = 'internal scratch']
  #allocation2 [shape = 'f32[1,1]{1,0:T(1,128)S(1)}', space=vmem, size = 0x200, scoped, tag = 'scoped memory for net_forward.9']
  %s0 = inlined_call_operand.vmem [shape: s8[2,16,16], index: 0, kind: input, shape index: {}]
  %s1 = inlined_call_operand.vmem [shape: f32[2,16,1], index: 1, kind: input, shape index: {}]
  %s2 = inlined_call_operand.vmem [shape: f32[2,1,16], index: 2, kind: input, shape index: {}]
  %s3 = inlined_call_operand.vmem [shape: bf16[2,16,32], index: 3, kind: input, shape index: {}]
  %s4 = inlined_call_operand.vmem [shape: bf16[32,32], index: 4, kind: input, shape index: {}]
  %s5 = inlined_call_operand.vmem [shape: f32[1,32], index: 5, kind: input, shape index: {}]
  %s6 = inlined_call_operand.vmem [shape: f32[1,1,32], index: 6, kind: input, shape index: {}]
  %s7 = inlined_call_operand.<no memory space> [shape: f32[1,1], index: 7, kind: input, shape index: {}]
  %s8 = inlined_call_operand.vmem [shape: bf16[2,16,32], index: 8, kind: output, shape index: {0}]
  %s9 = inlined_call_operand.vmem [shape: f32[2,1,16], index: 9, kind: output, shape index: {1}]
  %10 = xla_tuple %s8, %s9
  %s11 = sld [smem:[#allocation0]]
  $region73: #{net_forward.9} parent=0
    _
  %s13 = ssub.s32 1, %s11
  %s14 = scalar_select 0, %s13, %s11
  %v15 = vstv %s7
  %16 = vst [vmem:[#allocation2] sm:$0x1] %v15
  loop: start=0, step=1, limit=4
  $region2: #{net_forward.9} parent=0 // loop_pre_header
    _
  $region3: #{net_forward.9} parent=0 // loop_header
    %s18 = sphi 0, %s22
    %p19 = scmp.ge.s32.totalorder %s18, 4
    %s28 = sphi 0, %s30
    %s31 = sphi 0, %s28
    %s32 = sphi 0, %s31
    %s48 = sphi 0, %s32
    %s54 = sphi 0, %s56
    %s57 = sphi 0, %s54
    %s58 = sphi 0, %s57
    %s74 = sphi 0, %s58
    %s80 = sphi 0, %s82
    %s83 = sphi 0, %s80
    %s84 = sphi 0, %s83
    %s100 = sphi 0, %s84
    %s106 = sphi 0, %s108
    %s109 = sphi 0, %s106
    %s110 = sphi 0, %s109
    %s126 = sphi 0, %s110
    %s130 = sphi 0, %s130
    %s132 = sphi 0, %s130
    %s133 = sphi 0, %s132
    %s147 = sphi 0, %s133
    %s151 = sphi 0, %s151
    %s153 = sphi 0, %s151
    %s154 = sphi 0, %s153
    %s168 = sphi 0, %s154
    %s172 = sphi 0, %s172
    %s174 = sphi 0, %s172
    %s175 = sphi 0, %s174
    %s189 = sphi 0, %s175
    %s193 = sphi 0, %s193
    %s195 = sphi 0, %s193
    %s196 = sphi 0, %s195
    %s210 = sphi 0, %s196
    %s216 = sphi 0, %s218
    %s219 = sphi 0, %s216
    %s220 = sphi 0, %s219
    %s236 = sphi 0, %s220
    %s242 = sphi 0, %s244
    %s245 = sphi 0, %s242
    %s246 = sphi 0, %s245
    %s262 = sphi 0, %s246
  $region4: #{net_forward.9} parent=0 // loop_header_branch
    %21 = sbr.rel (%p19) target = $region8
  $region5: #{net_forward.9} parent=0 // loop_body
    %s23 = ssub.s32 %s18, 1
    %s24 = ssub.s32 %s18, 2
    %s25 = sadd.s32 %s18, 1
    %s26 = ssub.s32 %s18, %s25
    %p27 = scmp.eq.s32.totalorder %s26, 0
    %s29 = sadd.s32 %s28, 1
    %s30 = scalar_select %p27, %s28, %s29
    %p33 = pneg %p27
    %p34 = scmp.eq.s32.totalorder %s18, 1
    %p35 = por %p33, %p34
    %p36 = scmp.ne.s32.totalorder %s28, %s31
    %p37 = scmp.eq.s32.totalorder %s18, 0
    %p38 = por %p36, %p37
    %p39 = scmp.ne.s32.totalorder %s28, %s31
    %p40 = scmp.eq.s32.totalorder %s23, 1
    %p41 = por %p39, %p40
    %p42 = scmp.ne.s32.totalorder %s31, %s32
    %p43 = scmp.eq.s32.totalorder %s23, 0
    %p44 = por %p42, %p43
    %p45 = scmp.ne.s32.totalorder %s31, %s32
    %p46 = scmp.eq.s32.totalorder %s24, 1
    %p47 = por %p45, %p46
    %p49 = scmp.ne.s32.totalorder %s32, %s48
    %p50 = scmp.eq.s32.totalorder %s24, 0
    %p51 = por %p49, %p50
    %s52 = ssub.s32 %s18, %s25
    %p53 = scmp.eq.s32.totalorder %s52, 0
    %s55 = sadd.s32 %s54, 1
    %s56 = scalar_select %p53, %s54, %s55
    %p59 = pneg %p53
    %p60 = scmp.eq.s32.totalorder %s18, 1
    %p61 = por %p59, %p60
    %p62 = scmp.ne.s32.totalorder %s54, %s57
    %p63 = scmp.eq.s32.totalorder %s18, 0
    %p64 = por %p62, %p63
    %p65 = scmp.ne.s32.totalorder %s54, %s57
    %p66 = scmp.eq.s32.totalorder %s23, 1
    %p67 = por %p65, %p66
    %p68 = scmp.ne.s32.totalorder %s57, %s58
    %p69 = scmp.eq.s32.totalorder %s23, 0
    %p70 = por %p68, %p69
    %p71 = scmp.ne.s32.totalorder %s57, %s58
    %p72 = scmp.eq.s32.totalorder %s24, 1
    %p73 = por %p71, %p72
    %p75 = scmp.ne.s32.totalorder %s58, %s74
    %p76 = scmp.eq.s32.totalorder %s24, 0
    %p77 = por %p75, %p76
    %s78 = ssub.s32 %s18, %s25
    %p79 = scmp.eq.s32.totalorder %s78, 0
    %s81 = sadd.s32 %s80, 1
    %s82 = scalar_select %p79, %s80, %s81
    %p85 = pneg %p79
    %p86 = scmp.eq.s32.totalorder %s18, 1
    %p87 = por %p85, %p86
    %p88 = scmp.ne.s32.totalorder %s80, %s83
    %p89 = scmp.eq.s32.totalorder %s18, 0
    %p90 = por %p88, %p89
    %p91 = scmp.ne.s32.totalorder %s80, %s83
    %p92 = scmp.eq.s32.totalorder %s23, 1
    %p93 = por %p91, %p92
    %p94 = scmp.ne.s32.totalorder %s83, %s84
    %p95 = scmp.eq.s32.totalorder %s23, 0
    %p96 = por %p94, %p95
    %p97 = scmp.ne.s32.totalorder %s83, %s84
    %p98 = scmp.eq.s32.totalorder %s24, 1
    %p99 = por %p97, %p98
    %p101 = scmp.ne.s32.totalorder %s84, %s100
    %p102 = scmp.eq.s32.totalorder %s24, 0
    %p103 = por %p101, %p102
    %s104 = ssub.s32 %s18, %s25
    %p105 = scmp.eq.s32.totalorder %s104, 0
    %s107 = sadd.s32 %s106, 1
    %s108 = scalar_select %p105, %s106, %s107
    %p111 = pneg %p105
    %p112 = scmp.eq.s32.totalorder %s18, 1
    %p113 = por %p111, %p112
    %p114 = scmp.ne.s32.totalorder %s106, %s109
    %p115 = scmp.eq.s32.totalorder %s18, 0
    %p116 = por %p114, %p115
    %p117 = scmp.ne.s32.totalorder %s106, %s109
    %p118 = scmp.eq.s32.totalorder %s23, 1
    %p119 = por %p117, %p118
    %p120 = scmp.ne.s32.totalorder %s109, %s110
    %p121 = scmp.eq.s32.totalorder %s23, 0
    %p122 = por %p120, %p121
    %p123 = scmp.ne.s32.totalorder %s109, %s110
    %p124 = scmp.eq.s32.totalorder %s24, 1
    %p125 = por %p123, %p124
    %p127 = scmp.ne.s32.totalorder %s110, %s126
    %p128 = scmp.eq.s32.totalorder %s24, 0
    %p129 = por %p127, %p128
    %s131 = sadd.s32 %s130, 1
    %p134 = scmp.eq.s32.totalorder %s18, 1
    %p135 = scmp.ne.s32.totalorder %s130, %s132
    %p136 = scmp.eq.s32.totalorder %s18, 0
    %p137 = por %p135, %p136
    %p138 = scmp.ne.s32.totalorder %s130, %s132
    %p139 = scmp.eq.s32.totalorder %s23, 1
    %p140 = por %p138, %p139
    %p141 = scmp.ne.s32.totalorder %s132, %s133
    %p142 = scmp.eq.s32.totalorder %s23, 0
    %p143 = por %p141, %p142
    %p144 = scmp.ne.s32.totalorder %s132, %s133
    %p145 = scmp.eq.s32.totalorder %s24, 1
    %p146 = por %p144, %p145
    %p148 = scmp.ne.s32.totalorder %s133, %s147
    %p149 = scmp.eq.s32.totalorder %s24, 0
    %p150 = por %p148, %p149
    %s152 = sadd.s32 %s151, 1
    %p155 = scmp.eq.s32.totalorder %s18, 1
    %p156 = scmp.ne.s32.totalorder %s151, %s153
    %p157 = scmp.eq.s32.totalorder %s18, 0
    %p158 = por %p156, %p157
    %p159 = scmp.ne.s32.totalorder %s151, %s153
    %p160 = scmp.eq.s32.totalorder %s23, 1
    %p161 = por %p159, %p160
    %p162 = scmp.ne.s32.totalorder %s153, %s154
    %p163 = scmp.eq.s32.totalorder %s23, 0
    %p164 = por %p162, %p163
    %p165 = scmp.ne.s32.totalorder %s153, %s154
    %p166 = scmp.eq.s32.totalorder %s24, 1
    %p167 = por %p165, %p166
    %p169 = scmp.ne.s32.totalorder %s154, %s168
    %p170 = scmp.eq.s32.totalorder %s24, 0
    %p171 = por %p169, %p170
    %s173 = sadd.s32 %s172, 1
    %p176 = scmp.eq.s32.totalorder %s18, 1
    %p177 = scmp.ne.s32.totalorder %s172, %s174
    %p178 = scmp.eq.s32.totalorder %s18, 0
    %p179 = por %p177, %p178
    %p180 = scmp.ne.s32.totalorder %s172, %s174
    %p181 = scmp.eq.s32.totalorder %s23, 1
    %p182 = por %p180, %p181
    %p183 = scmp.ne.s32.totalorder %s174, %s175
    %p184 = scmp.eq.s32.totalorder %s23, 0
    %p185 = por %p183, %p184
    %p186 = scmp.ne.s32.totalorder %s174, %s175
    %p187 = scmp.eq.s32.totalorder %s24, 1
    %p188 = por %p186, %p187
    %p190 = scmp.ne.s32.totalorder %s175, %s189
    %p191 = scmp.eq.s32.totalorder %s24, 0
    %p192 = por %p190, %p191
    %s194 = sadd.s32 %s193, 1
    %p197 = scmp.eq.s32.totalorder %s18, 1
    %p198 = scmp.ne.s32.totalorder %s193, %s195
    %p199 = scmp.eq.s32.totalorder %s18, 0
    %p200 = por %p198, %p199
    %p201 = scmp.ne.s32.totalorder %s193, %s195
    %p202 = scmp.eq.s32.totalorder %s23, 1
    %p203 = por %p201, %p202
    %p204 = scmp.ne.s32.totalorder %s195, %s196
    %p205 = scmp.eq.s32.totalorder %s23, 0
    %p206 = por %p204, %p205
    %p207 = scmp.ne.s32.totalorder %s195, %s196
    %p208 = scmp.eq.s32.totalorder %s24, 1
    %p209 = por %p207, %p208
    %p211 = scmp.ne.s32.totalorder %s196, %s210
    %p212 = scmp.eq.s32.totalorder %s24, 0
    %p213 = por %p211, %p212
    %s214 = ssub.s32 %s18, %s25
    %p215 = scmp.eq.s32.totalorder %s214, 0
    %s217 = sadd.s32 %s216, 1
    %s218 = scalar_select %p215, %s216, %s217
    %p221 = pneg %p215
    %p222 = scmp.eq.s32.totalorder %s18, 1
    %p223 = por %p221, %p222
    %p224 = scmp.ne.s32.totalorder %s216, %s219
    %p225 = scmp.eq.s32.totalorder %s18, 0
    %p226 = por %p224, %p225
    %p227 = scmp.ne.s32.totalorder %s216, %s219
    %p228 = scmp.eq.s32.totalorder %s23, 1
    %p229 = por %p227, %p228
    %p230 = scmp.ne.s32.totalorder %s219, %s220
    %p231 = scmp.eq.s32.totalorder %s23, 0
    %p232 = por %p230, %p231
    %p233 = scmp.ne.s32.totalorder %s219, %s220
    %p234 = scmp.eq.s32.totalorder %s24, 1
    %p235 = por %p233, %p234
    %p237 = scmp.ne.s32.totalorder %s220, %s236
    %p238 = scmp.eq.s32.totalorder %s24, 0
    %p239 = por %p237, %p238
    %s240 = ssub.s32 %s18, %s25
    %p241 = scmp.eq.s32.totalorder %s240, 0
    %s243 = sadd.s32 %s242, 1
    %s244 = scalar_select %p241, %s242, %s243
    %p247 = pneg %p241
    %p248 = scmp.eq.s32.totalorder %s18, 1
    %p249 = por %p247, %p248
    %p250 = scmp.ne.s32.totalorder %s242, %s245
    %p251 = scmp.eq.s32.totalorder %s18, 0
    %p252 = por %p250, %p251
    %p253 = scmp.ne.s32.totalorder %s242, %s245
    %p254 = scmp.eq.s32.totalorder %s23, 1
    %p255 = por %p253, %p254
    %p256 = scmp.ne.s32.totalorder %s245, %s246
    %p257 = scmp.eq.s32.totalorder %s23, 0
    %p258 = por %p256, %p257
    %p259 = scmp.ne.s32.totalorder %s245, %s246
    %p260 = scmp.eq.s32.totalorder %s24, 1
    %p261 = por %p259, %p260
    %p263 = scmp.ne.s32.totalorder %s246, %s262
    %p264 = scmp.eq.s32.totalorder %s24, 0
    %p265 = por %p263, %p264
    %p266 = scmp.le.s32.totalorder 1, %s18
    %p267 = scmp.lt.s32.totalorder %s18, 3
    %p268 = pnand %p266, %p267
    %p269 = pneg %p268
    // Predicated region
    $region9: #{net_forward.9} parent=5 // pred_check
      _
    $region10: #{net_forward.9} parent=5 // pred_check_branch
      %271 = sbr.rel (%p268) target = $region12
    $region11: #{net_forward.9} parent=5 // pred_region
      %s272 = ssub.s32 %s18, 1
      // Predicated region
      $region13: #{net_forward.9} parent=11 // pred_check
        %p273 = pneg %p143
      $region14: #{net_forward.9} parent=11 // pred_check_branch
        %275 = sbr.rel (%p273) target = $region16
      $region15: #{net_forward.9} parent=11 // pred_region
        _
      $region16: #{net_forward.9} parent=11 // pred_fallthru
        _
      // Predicated region
      $region17: #{net_forward.9} parent=11 // pred_check
        %p276 = pneg %p164
      $region18: #{net_forward.9} parent=11 // pred_check_branch
        %278 = sbr.rel (%p276) target = $region20
      $region19: #{net_forward.9} parent=11 // pred_region
        _
      $region20: #{net_forward.9} parent=11 // pred_fallthru
        _
      // Predicated region
      $region21: #{net_forward.9} parent=11 // pred_check
        %p279 = pneg %p185
      $region22: #{net_forward.9} parent=11 // pred_check_branch
        %281 = sbr.rel (%p279) target = $region24
      $region23: #{net_forward.9} parent=11 // pred_region
        _
      $region24: #{net_forward.9} parent=11 // pred_fallthru
        _
      // Predicated region
      $region25: #{net_forward.9} parent=11 // pred_check
        %p282 = pneg %p206
      $region26: #{net_forward.9} parent=11 // pred_check_branch
        %284 = sbr.rel (%p282) target = $region28
      $region27: #{net_forward.9} parent=11 // pred_region
        _
      $region28: #{net_forward.9} parent=11 // pred_fallthru
        _
    $region12: #{net_forward.9} parent=5 // pred_fallthru
      _
    %p285 = scmp.lt.s32.totalorder %s18, 2
    // Predicated region
    $region29: #{net_forward.9} parent=5 // pred_check
      %p286 = pneg %p285
    $region30: #{net_forward.9} parent=5 // pred_check_branch
      %288 = sbr.rel (%p286) target = $region32
    $region31: #{net_forward.9} parent=5 // pred_region
      // Predicated region
      $region33: #{net_forward.9} parent=31 // pred_check
        %p289 = pneg %p38
      $region34: #{net_forward.9} parent=31 // pred_check_branch
        %291 = sbr.rel (%p289) target = $region36
      $region35: #{net_forward.9} parent=31 // pred_region
        %p292 = scmp.lt.s32.totalorder %s18, 1
        %s293 = scalar_select %p292, %s18, 1
        %s294 = smul.addr %s293, 2
        %s295 = smul.addr %s294, 2
        %s296 = scalar_lea.vmem %s0, %s295
      $region36: #{net_forward.9} parent=31 // pred_fallthru
        _
      // Predicated region
      $region37: #{net_forward.9} parent=31 // pred_check
        %p297 = pneg %p64
      $region38: #{net_forward.9} parent=31 // pred_check_branch
        %299 = sbr.rel (%p297) target = $region40
      $region39: #{net_forward.9} parent=31 // pred_region
        %p300 = scmp.lt.s32.totalorder %s18, 1
        %s301 = scalar_select %p300, %s18, 1
        %s302 = smul.addr %s301, 2
        %s303 = smul.addr %s302, 8
        %s304 = scalar_lea.vmem %s1, %s303
      $region40: #{net_forward.9} parent=31 // pred_fallthru
        _
      // Predicated region
      $region41: #{net_forward.9} parent=31 // pred_check
        %p305 = pneg %p90
      $region42: #{net_forward.9} parent=31 // pred_check_branch
        %307 = sbr.rel (%p305) target = $region44
      $region43: #{net_forward.9} parent=31 // pred_region
        %p308 = scmp.lt.s32.totalorder %s18, 1
        %s309 = scalar_select %p308, %s18, 1
        %s310 = scalar_lea.vmem %s2, %s309
      $region44: #{net_forward.9} parent=31 // pred_fallthru
        _
      // Predicated region
      $region45: #{net_forward.9} parent=31 // pred_check
        %p311 = pneg %p116
      $region46: #{net_forward.9} parent=31 // pred_check_branch
        %313 = sbr.rel (%p311) target = $region48
      $region47: #{net_forward.9} parent=31 // pred_region
        %p314 = scmp.lt.s32.totalorder %s18, 1
        %s315 = scalar_select %p314, %s18, 1
        %s316 = smul.addr %s315, 2
        %s317 = smul.addr %s316, 4
        %s318 = scalar_lea.vmem %s3, %s317
      $region48: #{net_forward.9} parent=31 // pred_fallthru
        _
    $region32: #{net_forward.9} parent=5 // pred_fallthru
      _
    %p319 = scmp.le.s32.totalorder 1, %s18
    %p320 = scmp.lt.s32.totalorder %s18, 3
    %p321 = pnand %p319, %p320
    %p322 = pneg %p321
    // Predicated region
    $region49: #{net_forward.9} parent=5 // pred_check
      _
    $region50: #{net_forward.9} parent=5 // pred_check_branch
      %324 = sbr.rel (%p321) target = $region52
    $region51: #{net_forward.9} parent=5 // pred_region
      %s325 = ssub.s32 %s18, 1
      %p326 = scmp.lt.s32.totalorder %s23, 1
      %s327 = scalar_select %p326, %s23, 1
      %s328 = smul.addr %s327, 2
      %s329 = smul.addr %s328, 2
      %s330 = scalar_lea.vmem %s0, %s329
      %p331 = pneg %p44
      %p332 = pneg %p41
      %p333 = scmp.lt.s32.totalorder %s23, 1
      %s334 = scalar_select %p333, %s23, 1
      %s335 = smul.addr %s334, 2
      %s336 = smul.addr %s335, 8
      %s337 = scalar_lea.vmem %s1, %s336
      %p338 = pneg %p70
      %p339 = pneg %p67
      %p340 = scmp.lt.s32.totalorder %s23, 1
      %s341 = scalar_select %p340, %s23, 1
      %s342 = scalar_lea.vmem %s2, %s341
      %p343 = pneg %p96
      %p344 = pneg %p93
      %p345 = scmp.lt.s32.totalorder %s23, 1
      %s346 = scalar_select %p345, %s23, 1
      %s347 = smul.addr %s346, 2
      %s348 = smul.addr %s347, 4
      %s349 = scalar_lea.vmem %s3, %s348
      %p350 = pneg %p122
      %p351 = pneg %p119
      %p352 = pneg %p143
      %p353 = pneg %p140
      %p354 = pneg %p164
      %p355 = pneg %p161
      %p356 = pneg %p185
      %p357 = pneg %p182
      %p358 = pneg %p206
      %p359 = pneg %p203
      %p360 = pneg %p232
      %p361 = pneg %p229
      %p362 = scmp.lt.s32.totalorder %s23, 1
      %s363 = scalar_select %p362, %s23, 1
      %s364 = smul.addr %s363, 2
      %s365 = smul.addr %s364, 4
      %s366 = scalar_lea.vmem %s8, %s365
      %p367 = pneg %p258
      %p368 = pneg %p255
      %p369 = scmp.lt.s32.totalorder %s23, 1
      %s370 = scalar_select %p369, %s23, 1
      %s371 = scalar_lea.vmem %s9, %s370
      %p372 = scmp.lt.s32.totalorder %s23, 1
      %s373 = scalar_select %p372, %s23, 1
      %s374 = smul.addr %s373, 2
      %s375 = smul.addr %s374, 2
      %s376 = scalar_lea.vmem %s0, %s375
      %p377 = scmp.lt.s32.totalorder %s23, 1
      %s378 = scalar_select %p377, %s23, 1
      %s379 = smul.addr %s378, 2
      %s380 = smul.addr %s379, 8
      %s381 = scalar_lea.vmem %s1, %s380
      %p382 = scmp.lt.s32.totalorder %s23, 1
      %s383 = scalar_select %p382, %s23, 1
      %s384 = scalar_lea.vmem %s2, %s383
      %p385 = scmp.lt.s32.totalorder %s23, 1
      %s386 = scalar_select %p385, %s23, 1
      %s387 = smul.addr %s386, 2
      %s388 = smul.addr %s387, 4
      %s389 = scalar_lea.vmem %s3, %s388
      %p390 = scmp.lt.s32.totalorder %s23, 1
      %s391 = scalar_select %p390, %s23, 1
      %s392 = smul.addr %s391, 2
      %s393 = smul.addr %s392, 4
      %s394 = scalar_lea.vmem %s8, %s393
      %p395 = scmp.lt.s32.totalorder %s23, 1
      %s396 = scalar_select %p395, %s23, 1
      %s397 = scalar_lea.vmem %s9, %s396
      %v399 = vld [vmem:[%s376] sm:$0x3]
      %v400 = vld [vmem:[%s376 + $0x2] sm:$0x3]
      %v401 = vunpack.c.l.s8.bf16 %v399
      %v402 = vunpack.c.l.s8.bf16 %v400
      %v403 = vld [vmem:[%s381] sm:$0xff]
      %v404 = vld [vmem:[%s381 + $0x8] sm:$0xff]
      %v405 = vld [vmem:[%s384] sm:$0x1]
      %v406 = vpack.c.bf16 %v404, %v403
      %v409 = vunpack.c.l.b16 %v401
      %v410 = vunpack.c.l.b16 %v402
      %v411 = vpack.c.b16 %v410, %v409
      %vm412 = vcmask 130048
      %v414 = vsel %vm412, %v411, 0
      %416 = vmatprep.subr.bf16.mxu0 0
      %417 = vmatpush1.bf16.msra.mxu0 %v406
      %418 = vmatprep.subr.bf16.mxu0 0
      %419 = vmatpush1.bf16.msra.mxu0 0
      %420 = vmatprep.subr.bf16.mxu0 0
      %421 = vmatpush1.bf16.msra.mxu0 0
      %422 = vmatprep.subr.bf16.mxu0 0
      %423 = vmatpush1.bf16.msra.mxu0 0
      %424 = vmatprep.subr.bf16.mxu0 0
      %425 = vmatpush1.bf16.msra.mxu0 0
      %426 = vmatprep.subr.bf16.mxu0 0
      %427 = vmatpush1.bf16.msra.mxu0 0
      %428 = vmatprep.subr.bf16.mxu0 0
      %429 = vmatpush1.bf16.msra.mxu0 0
      %430 = vmatprep.subr.bf16.mxu0 0
      %431 = vmatpush1.bf16.msra.mxu0 0
      %432 = vmatprep.subr.bf16.mxu0 0
      %433 = vmatpush1.bf16.msra.mxu0 0
      %434 = vmatprep.subr.bf16.mxu0 0
      %435 = vmatpush1.bf16.msra.mxu0 0
      %436 = vmatprep.subr.bf16.mxu0 0
      %437 = vmatpush1.bf16.msra.mxu0 0
      %438 = vmatprep.subr.bf16.mxu0 0
      %439 = vmatpush1.bf16.msra.mxu0 0
      %440 = vmatprep.subr.bf16.mxu0 0
      %441 = vmatpush1.bf16.msra.mxu0 0
      %442 = vmatprep.subr.bf16.mxu0 0
      %443 = vmatpush1.bf16.msra.mxu0 0
      %444 = vmatprep.subr.bf16.mxu0 0
      %445 = vmatpush1.bf16.msra.mxu0 0
      %446 = vmatprep.subr.bf16.mxu0 0
      %447 = vmatpush1.bf16.msra.mxu0 0
      %448 = vmatprep.mubr.bf16.mxu0 0
      %449 = vmatmul.mubr.bf16.gmra.mrb[0].mxu0 %v414
      %v450 = vpop.f32.mrb[0].mxu0
      %v451 = vadd.f32 0.0, %v450
      %v452 = vpop.f32.mrb[0].mxu0
      %v453 = vpop.f32.mrb[0].mxu0
      %v454 = vadd.f32 0.0, %v453
      %v455 = vpop.f32.mrb[0].mxu0
      %456 = vdwg.mxu0
      %v457 = vmul.f32 %v451, %v403
      %v458 = vmul.f32 %v454, %v404
      %v459 = vpack.c.bf16 %v405, %v405
      %v462 = vsel %vm412, %v459, 0
      %464 = vmatprep.subr.bf16.mxu0 0
      %465 = vmatpush1.bf16.msra.mxu0 %v411
      %466 = vmatprep.subr.bf16.mxu0 0
      %467 = vmatpush1.bf16.msra.mxu0 0
      %468 = vmatprep.subr.bf16.mxu0 0
      %469 = vmatpush1.bf16.msra.mxu0 0
      %470 = vmatprep.subr.bf16.mxu0 0
      %471 = vmatpush1.bf16.msra.mxu0 0
      %472 = vmatprep.subr.bf16.mxu0 0
      %473 = vmatpush1.bf16.msra.mxu0 0
      %474 = vmatprep.subr.bf16.mxu0 0
      %475 = vmatpush1.bf16.msra.mxu0 0
      %476 = vmatprep.subr.bf16.mxu0 0
      %477 = vmatpush1.bf16.msra.mxu0 0
      %478 = vmatprep.subr.bf16.mxu0 0
      %479 = vmatpush1.bf16.msra.mxu0 0
      %480 = vmatprep.subr.bf16.mxu0 0
      %481 = vmatpush1.bf16.msra.mxu0 0
      %482 = vmatprep.subr.bf16.mxu0 0
      %483 = vmatpush1.bf16.msra.mxu0 0
      %484 = vmatprep.subr.bf16.mxu0 0
      %485 = vmatpush1.bf16.msra.mxu0 0
      %486 = vmatprep.subr.bf16.mxu0 0
      %487 = vmatpush1.bf16.msra.mxu0 0
      %488 = vmatprep.subr.bf16.mxu0 0
      %489 = vmatpush1.bf16.msra.mxu0 0
      %490 = vmatprep.subr.bf16.mxu0 0
      %491 = vmatpush1.bf16.msra.mxu0 0
      %492 = vmatprep.subr.bf16.mxu0 0
      %493 = vmatpush1.bf16.msra.mxu0 0
      %494 = vmatprep.subr.bf16.mxu0 0
      %495 = vmatpush1.bf16.msra.mxu0 0
      %496 = vmatprep.mubr.bf16.mxu0 0
      %497 = vmatmul.mubr.bf16.gmra.mrb[0].mxu0 %v462
      %v498 = vpop.f32.mrb[0].mxu0
      %v499 = vadd.f32 0.0, %v498
      %v500 = vpop.f32.mrb[0].mxu0
      %v501 = vpop.f32.mrb[0].mxu0
      %v502 = vpop.f32.mrb[0].mxu0
      %503 = vdwg.mxu0
      %v504 = vmul.f32 %v499, %v405
      %vm505 = vcmp.gt.f32.partialorder %v457, 0.0
      %vm506 = vcmp.gt.f32.partialorder %v458, 0.0
      %v507 = vrsqrt.pop %v457
      %v508 = vrsqrt.pop %v458
      %v509 = vsel %vm505, %v507, 0.0
      %v510 = vsel %vm506, %v508, 0.0
      %vm511 = vcmp.gt.f32.partialorder %v504, 0.0
      %v512 = vrsqrt.pop %v504
      %v513 = vsel %vm511, %v512, 0.0
      %v514 = vld [vmem:[%s389] sm:$0xf]
      %v515 = vld [vmem:[%s389 + $0x4] sm:$0xf]
      %v516 = vld [vmem:[%s4] sm:$0xf]
      %v517 = vld [vmem:[%s4 + $0x4] sm:$0xf]
      %v518 = vld [vmem:[%s4 + $0x8] sm:$0xf]
      %v519 = vld [vmem:[%s4 + $0xc] sm:$0xf]
      %v522 = vunpack.c.l.b16 %v514
      %v523 = vunpack.c.l.b16 %v515
      %v524 = vpack.c.b16 %v523, %v522
      %v529 = vunpack.c.l.b16 %v516
      %v530 = vunpack.c.l.b16 %v517
      %v531 = vunpack.c.l.b16 %v518
      %v532 = vunpack.c.l.b16 %v519
      %v533 = vpack.c.b16 %v530, %v529
      %v534 = vpack.c.b16 %v532, %v531
      %vm537 = vcmask 261120
      %v539 = vsel %vm537, %v524, 0
      %541 = vmatprep.subr.bf16.mxu0 0
      %542 = vmatpush1.bf16.msra.mxu0 %v533
      %543 = vmatprep.subr.bf16.mxu0 0
      %544 = vmatpush1.bf16.msra.mxu0 %v534
      %545 = vmatprep.subr.bf16.mxu0 0
      %546 = vmatpush1.bf16.msra.mxu0 0
      %547 = vmatprep.subr.bf16.mxu0 0
      %548 = vmatpush1.bf16.msra.mxu0 0
      %549 = vmatprep.subr.bf16.mxu0 0
      %550 = vmatpush1.bf16.msra.mxu0 0
      %551 = vmatprep.subr.bf16.mxu0 0
      %552 = vmatpush1.bf16.msra.mxu0 0
      %553 = vmatprep.subr.bf16.mxu0 0
      %554 = vmatpush1.bf16.msra.mxu0 0
      %555 = vmatprep.subr.bf16.mxu0 0
      %556 = vmatpush1.bf16.msra.mxu0 0
      %557 = vmatprep.subr.bf16.mxu0 0
      %558 = vmatpush1.bf16.msra.mxu0 0
      %559 = vmatprep.subr.bf16.mxu0 0
      %560 = vmatpush1.bf16.msra.mxu0 0
      %561 = vmatprep.subr.bf16.mxu0 0
      %562 = vmatpush1.bf16.msra.mxu0 0
      %563 = vmatprep.subr.bf16.mxu0 0
      %564 = vmatpush1.bf16.msra.mxu0 0
      %565 = vmatprep.subr.bf16.mxu0 0
      %566 = vmatpush1.bf16.msra.mxu0 0
      %567 = vmatprep.subr.bf16.mxu0 0
      %568 = vmatpush1.bf16.msra.mxu0 0
      %569 = vmatprep.subr.bf16.mxu0 0
      %570 = vmatpush1.bf16.msra.mxu0 0
      %571 = vmatprep.subr.bf16.mxu0 0
      %572 = vmatpush1.bf16.msra.mxu0 0
      %573 = vmatprep.mubr.bf16.mxu0 0
      %574 = vmatmul.mubr.bf16.gmra.mrb[0].mxu0 %v539
      %v575 = vpop.f32.mrb[0].mxu0
      %v576 = vadd.f32 0.0, %v575
      %v577 = vpop.f32.mrb[0].mxu0
      %v578 = vpop.f32.mrb[0].mxu0
      %v579 = vadd.f32 0.0, %v578
      %v580 = vpop.f32.mrb[0].mxu0
      %581 = vdwg.mxu0
      %583 = vset.pattern.permute.xlu0 0
      %584 = vperm.xlu0 %583, %v509
      %v585 = vpop.permute.xlu0 %584
      %588 = vset.pattern.permute.xlu0 0
      %589 = vperm.xlu0 %588, %v510
      %v590 = vpop.permute.xlu0 %589
      %v592 = vmul.f32 %v576, %v585
      %v593 = vmul.f32 %v579, %v590
      %v594 = vpack.c.bf16 %v593, %v592
      %595 = vmatprep.subr.bf16.mxu0 0
      %596 = vmatpush1.bf16.msra.mxu0 %v594
      %597 = vmatprep.subr.bf16.mxu0 0
      %598 = vmatpush1.bf16.msra.mxu0 0
      %599 = vmatprep.subr.bf16.mxu0 0
      %600 = vmatpush1.bf16.msra.mxu0 0
      %601 = vmatprep.subr.bf16.mxu0 0
      %602 = vmatpush1.bf16.msra.mxu0 0
      %603 = vmatprep.subr.bf16.mxu0 0
      %604 = vmatpush1.bf16.msra.mxu0 0
      %605 = vmatprep.subr.bf16.mxu0 0
      %606 = vmatpush1.bf16.msra.mxu0 0
      %607 = vmatprep.subr.bf16.mxu0 0
      %608 = vmatpush1.bf16.msra.mxu0 0
      %609 = vmatprep.subr.bf16.mxu0 0
      %610 = vmatpush1.bf16.msra.mxu0 0
      %611 = vmatprep.subr.bf16.mxu0 0
      %612 = vmatpush1.bf16.msra.mxu0 0
      %613 = vmatprep.subr.bf16.mxu0 0
      %614 = vmatpush1.bf16.msra.mxu0 0
      %615 = vmatprep.subr.bf16.mxu0 0
      %616 = vmatpush1.bf16.msra.mxu0 0
      %617 = vmatprep.subr.bf16.mxu0 0
      %618 = vmatpush1.bf16.msra.mxu0 0
      %619 = vmatprep.subr.bf16.mxu0 0
      %620 = vmatpush1.bf16.msra.mxu0 0
      %621 = vmatprep.subr.bf16.mxu0 0
      %622 = vmatpush1.bf16.msra.mxu0 0
      %623 = vmatprep.subr.bf16.mxu0 0
      %624 = vmatpush1.bf16.msra.mxu0 0
      %625 = vmatprep.subr.bf16.mxu0 0
      %626 = vmatpush1.bf16.msra.mxu0 0
      %627 = vmatprep.mubr.bf16.mxu0 0
      %628 = vmatmul.mubr.bf16.gmra.mrb[0].mxu0 %v414
      %v629 = vpop.f32.mrb[0].mxu0
      %v630 = vadd.f32 0.0, %v629
      %v631 = vpop.f32.mrb[0].mxu0
      %v632 = vpop.f32.mrb[0].mxu0
      %v633 = vadd.f32 0.0, %v632
      %v634 = vpop.f32.mrb[0].mxu0
      %635 = vdwg.mxu0
      %v636 = vmul.f32 %v630, %v585
      %v637 = vmul.f32 %v633, %v590
      %v638 = vld [vmem:[%s5] sm:$0x1]
      %v640 = vlaneseq
      %v641 = vshrl.u32 %v640, 7
      %v642 = vsub.s32 0, %v641
      %v643 = vrot.slane %v638, %v642
      %v645 = vadd.f32 %v636, %v643
      %v646 = vadd.f32 %v637, %v643
      %v647 = vmax.f32 %v645, 0.0
      %v648 = vmax.f32 %v646, 0.0
      %650 = vset.pattern.permute.xlu0 0
      %651 = vperm.xlu0 %650, %v403
      %v652 = vpop.permute.xlu0 %651
      %655 = vset.pattern.permute.xlu0 0
      %656 = vperm.xlu0 %655, %v404
      %v657 = vpop.permute.xlu0 %656
      %v659 = vmul.f32 %v647, %v652
      %v660 = vmul.f32 %v648, %v657
      %v661 = vpack.c.bf16 %v660, %v659
      %v663 = vunpack.c.l.b16 %v661
      %v664 = vunpack.c.h.b16 %v661
      %v665 = vpack.c.b16 %v663, %v663
      %v666 = vpack.c.b16 %v664, %v664
      %vm669 = vcmask 257024
      %670 = vst.msk [vmem:[%s394] sm:$0xf] %vm669, %v665
      %671 = vst.msk [vmem:[%s394 + $0x4] sm:$0xf] %vm669, %v666
      %v672 = vld [vmem:[%s6] sm:$0x1]
      %v673 = vpack.c.bf16 %v672, %v672
      %v675 = vsel %vm537, %v673, 0
      %v678 = vsel %vm537, %v661, 0
      %680 = vmatprep.subr.bf16.mxu0 0
      %681 = vmatpush1.bf16.xpose.msra.mxu0 %v678
      %682 = vmatprep.subr.bf16.mxu0 0
      %683 = vmatpush1.bf16.xpose.msra.mxu0 0
      %684 = vmatprep.subr.bf16.mxu0 0
      %685 = vmatpush1.bf16.xpose.msra.mxu0 0
      %686 = vmatprep.subr.bf16.mxu0 0
      %687 = vmatpush1.bf16.xpose.msra.mxu0 0
      %688 = vmatprep.subr.bf16.mxu0 0
      %689 = vmatpush1.bf16.xpose.msra.mxu0 0
      %690 = vmatprep.subr.bf16.mxu0 0
      %691 = vmatpush1.bf16.xpose.msra.mxu0 0
      %692 = vmatprep.subr.bf16.mxu0 0
      %693 = vmatpush1.bf16.xpose.msra.mxu0 0
      %694 = vmatprep.subr.bf16.mxu0 0
      %695 = vmatpush1.bf16.xpose.msra.mxu0 0
      %696 = vmatprep.subr.bf16.mxu0 0
      %697 = vmatpush1.bf16.xpose.msra.mxu0 0
      %698 = vmatprep.subr.bf16.mxu0 0
      %699 = vmatpush1.bf16.xpose.msra.mxu0 0
      %700 = vmatprep.subr.bf16.mxu0 0
      %701 = vmatpush1.bf16.xpose.msra.mxu0 0
      %702 = vmatprep.subr.bf16.mxu0 0
      %703 = vmatpush1.bf16.xpose.msra.mxu0 0
      %704 = vmatprep.subr.bf16.mxu0 0
      %705 = vmatpush1.bf16.xpose.msra.mxu0 0
      %706 = vmatprep.subr.bf16.mxu0 0
      %707 = vmatpush1.bf16.xpose.msra.mxu0 0
      %708 = vmatprep.subr.bf16.mxu0 0
      %709 = vmatpush1.bf16.xpose.msra.mxu0 0
      %710 = vmatprep.subr.bf16.mxu0 0
      %711 = vmatpush1.bf16.xpose.msra.mxu0 0
      %712 = vmatprep.mubr.bf16.mxu0 0
      %713 = vmatmul.mubr.bf16.gmra.mrb[0].mxu0 %v675
      %v714 = vpop.f32.mrb[0].mxu0
      %v715 = vadd.f32 0.0, %v714
      %v716 = vpop.f32.mrb[0].mxu0
      %v717 = vpop.f32.mrb[0].mxu0
      %v718 = vpop.f32.mrb[0].mxu0
      %719 = vdwg.mxu0
      %v720 = vmul.f32 %v715, %v513
      %v721 = vpack.c.bf16 %v720, %v720
      %v723 = vsel %vm412, %v721, 0
      %725 = vmatprep.subr.bf16.mxu0 0
      %726 = vmatpush1.bf16.msra.mxu0 %v411
      %727 = vmatprep.subr.bf16.mxu0 0
      %728 = vmatpush1.bf16.msra.mxu0 0
      %729 = vmatprep.subr.bf16.mxu0 0
      %730 = vmatpush1.bf16.msra.mxu0 0
      %731 = vmatprep.subr.bf16.mxu0 0
      %732 = vmatpush1.bf16.msra.mxu0 0
      %733 = vmatprep.subr.bf16.mxu0 0
      %734 = vmatpush1.bf16.msra.mxu0 0
      %735 = vmatprep.subr.bf16.mxu0 0
      %736 = vmatpush1.bf16.msra.mxu0 0
      %737 = vmatprep.subr.bf16.mxu0 0
      %738 = vmatpush1.bf16.msra.mxu0 0
      %739 = vmatprep.subr.bf16.mxu0 0
      %740 = vmatpush1.bf16.msra.mxu0 0
      %741 = vmatprep.subr.bf16.mxu0 0
      %742 = vmatpush1.bf16.msra.mxu0 0
      %743 = vmatprep.subr.bf16.mxu0 0
      %744 = vmatpush1.bf16.msra.mxu0 0
      %745 = vmatprep.subr.bf16.mxu0 0
      %746 = vmatpush1.bf16.msra.mxu0 0
      %747 = vmatprep.subr.bf16.mxu0 0
      %748 = vmatpush1.bf16.msra.mxu0 0
      %749 = vmatprep.subr.bf16.mxu0 0
      %750 = vmatpush1.bf16.msra.mxu0 0
      %751 = vmatprep.subr.bf16.mxu0 0
      %752 = vmatpush1.bf16.msra.mxu0 0
      %753 = vmatprep.subr.bf16.mxu0 0
      %754 = vmatpush1.bf16.msra.mxu0 0
      %755 = vmatprep.subr.bf16.mxu0 0
      %756 = vmatpush1.bf16.msra.mxu0 0
      %757 = vmatprep.mubr.bf16.mxu0 0
      %758 = vmatmul.mubr.bf16.gmra.mrb[0].mxu0 %v723
      %v759 = vpop.f32.mrb[0].mxu0
      %v760 = vadd.f32 0.0, %v759
      %v761 = vpop.f32.mrb[0].mxu0
      %v762 = vpop.f32.mrb[0].mxu0
      %v763 = vpop.f32.mrb[0].mxu0
      %764 = vdwg.mxu0
      %v765 = vmul.f32 %v760, %v513
      %v766 = vld [vmem:[#allocation2] sm:$0x1]
      %768 = vset.pattern.permute.xlu0 0
      %769 = vperm.xlu0 %768, %v766
      %v770 = vpop.permute.xlu0 %769
      %v772 = vlaneseq
      %v773 = vshrl.u32 %v772, 7
      %v774 = vsub.s32 0, %v773
      %v775 = vrot.slane %v770, %v774
      %v776 = vadd.f32 %v765, %v775
      %vm777 = vcmask 122880
      %778 = vst.msk [vmem:[%s397] sm:$0x1] %vm777, %v776
      %p779 = scmp.lt.s32.totalorder %s23, 1
      %s780 = scalar_select %p779, %s23, 1
      %s781 = smul.addr %s780, 2
      %s782 = smul.addr %s781, 4
      %s783 = scalar_lea.vmem %s8, %s782
      %p784 = scmp.lt.s32.totalorder %s23, 1
      %s785 = scalar_select %p784, %s23, 1
      %s786 = scalar_lea.vmem %s9, %s785
      // Predicated region
      $region53: #{net_forward.9} parent=51 // pred_check
        %p787 = pneg %p229
      $region54: #{net_forward.9} parent=51 // pred_check_branch
        %789 = sbr.rel (%p787) target = $region56
      $region55: #{net_forward.9} parent=51 // pred_region
        _
      $region56: #{net_forward.9} parent=51 // pred_fallthru
        _
      // Predicated region
      $region57: #{net_forward.9} parent=51 // pred_check
        %p790 = pneg %p255
      $region58: #{net_forward.9} parent=51 // pred_check_branch
        %792 = sbr.rel (%p790) target = $region60
      $region59: #{net_forward.9} parent=51 // pred_region
        _
      $region60: #{net_forward.9} parent=51 // pred_fallthru
        _
    $region52: #{net_forward.9} parent=5 // pred_fallthru
      _
    %p793 = scmp.le.s32.totalorder 2, %s18
    // Predicated region
    $region61: #{net_forward.9} parent=5 // pred_check
      %p794 = pneg %p793
    $region62: #{net_forward.9} parent=5 // pred_check_branch
      %796 = sbr.rel (%p794) target = $region64
    $region63: #{net_forward.9} parent=5 // pred_region
      %s797 = ssub.s32 %s18, 2
      // Predicated region
      $region65: #{net_forward.9} parent=63 // pred_check
        %p798 = pneg %p235
      $region66: #{net_forward.9} parent=63 // pred_check_branch
        %800 = sbr.rel (%p798) target = $region68
      $region67: #{net_forward.9} parent=63 // pred_region
        %p801 = scmp.lt.s32.totalorder %s24, 1
        %s802 = scalar_select %p801, %s24, 1
        %s803 = smul.addr %s802, 2
        %s804 = smul.addr %s803, 4
        %s805 = scalar_lea.vmem %s8, %s804
      $region68: #{net_forward.9} parent=63 // pred_fallthru
        _
      // Predicated region
      $region69: #{net_forward.9} parent=63 // pred_check
        %p806 = pneg %p261
      $region70: #{net_forward.9} parent=63 // pred_check_branch
        %808 = sbr.rel (%p806) target = $region72
      $region71: #{net_forward.9} parent=63 // pred_region
        %p809 = scmp.lt.s32.totalorder %s24, 1
        %s810 = scalar_select %p809, %s24, 1
        %s811 = scalar_lea.vmem %s9, %s810
      $region72: #{net_forward.9} parent=63 // pred_fallthru
        _
    $region64: #{net_forward.9} parent=5 // pred_fallthru
      _
  $region6: #{net_forward.9} parent=0 // loop_footer
    %s22 = sadd.s32 1, %s18
  $region7: #{net_forward.9} parent=0 // loop_footer_branch
    %17 = sbr.rel target = $region3
  $region8: #{net_forward.9} parent=0 // loop_exit
    _

// kernel: net_forward.13
$region0: #{net_forward.13}
  #allocation0 [shape = 'u32[]', space=smem, size = 0x4, offset = 0x4, fixed_abs, tag = 'smem constant byte address 0x4 - core index']
  #allocation1 [shape = 'u32[144,128]{1,0:T(1,128)}', space=vmem, size = 0x12000, scoped, tag = 'internal scratch']
  %s0 = inlined_call_operand.vmem [shape: f32[2,64], index: 0, kind: input, shape index: {}]
  %s1 = inlined_call_operand.vmem [shape: f32[2,64], index: 1, kind: input, shape index: {}]
  %s2 = inlined_call_operand.vmem [shape: f32[2,64], index: 2, kind: input, shape index: {}]
  %s3 = inlined_call_operand.vmem [shape: f32[64,32], index: 3, kind: input, shape index: {}]
  %s4 = inlined_call_operand.vmem [shape: f32[1,32], index: 4, kind: input, shape index: {}]
  %s5 = inlined_call_operand.vmem [shape: f32[32,16], index: 5, kind: input, shape index: {}]
  %s6 = inlined_call_operand.vmem [shape: f32[1,16], index: 6, kind: input, shape index: {}]
  %s7 = inlined_call_operand.vmem [shape: f32[16,4], index: 7, kind: input, shape index: {}]
  %s8 = inlined_call_operand.vmem [shape: f32[1,4], index: 8, kind: input, shape index: {}]
  %s9 = inlined_call_operand.hbm [shape: f32[2,4], index: 9, kind: output, shape index: {}]
  %s10 = sld [smem:[#allocation0]]
  $region46: #{net_forward.13} parent=0
    _
  %s12 = ssub.s32 1, %s10
  %s13 = scalar_select 0, %s12, %s10
  $region1: #{net_forward.13} parent=0
    #allocation2 [shape = 'u8[1024]{0}', space=vmem, size = 0x400, scoped, tag = 'output window, operand 0, single buffered']
    #allocation3 [shape = 's32[1]{0}', space=sflag, size = 0x4, scoped, tag = 'scoped memory for net_forward.13']
    %14 = vsyncpa [#allocation3], 0
    // Predicated region
    $region2: #{net_forward.13} parent=1 // pred_check
      _
    $region3: #{net_forward.13} parent=1 // pred_check_branch
      %16 = sbr.rel (0) target = $region5
    $region4: #{net_forward.13} parent=1 // pred_region
      _
    $region5: #{net_forward.13} parent=1 // pred_fallthru
      _
    // Predicated region
    $region6: #{net_forward.13} parent=1 // pred_check
      _
    $region7: #{net_forward.13} parent=1 // pred_check_branch
      %18 = sbr.rel (0) target = $region9
    $region8: #{net_forward.13} parent=1 // pred_region
      _
    $region9: #{net_forward.13} parent=1 // pred_fallthru
      _
    // Predicated region
    $region10: #{net_forward.13} parent=1 // pred_check
      _
    $region11: #{net_forward.13} parent=1 // pred_check_branch
      %20 = sbr.rel (0) target = $region13
    $region12: #{net_forward.13} parent=1 // pred_region
      _
    $region13: #{net_forward.13} parent=1 // pred_fallthru
      _
    // Predicated region
    $region14: #{net_forward.13} parent=1 // pred_check
      _
    $region15: #{net_forward.13} parent=1 // pred_check_branch
      %22 = sbr.rel (0) target = $region17
    $region16: #{net_forward.13} parent=1 // pred_region
      _
    $region17: #{net_forward.13} parent=1 // pred_fallthru
      _
    // Predicated region
    $region18: #{net_forward.13} parent=1 // pred_check
      _
    $region19: #{net_forward.13} parent=1 // pred_check_branch
      %24 = sbr.rel (0) target = $region21
    $region20: #{net_forward.13} parent=1 // pred_region
      _
    $region21: #{net_forward.13} parent=1 // pred_fallthru
      _
    // Predicated region
    $region22: #{net_forward.13} parent=1 // pred_check
      _
    $region23: #{net_forward.13} parent=1 // pred_check_branch
      %26 = sbr.rel (0) target = $region25
    $region24: #{net_forward.13} parent=1 // pred_region
      _
    $region25: #{net_forward.13} parent=1 // pred_fallthru
      _
    // Predicated region
    $region26: #{net_forward.13} parent=1 // pred_check
      _
    $region27: #{net_forward.13} parent=1 // pred_check_branch
      %28 = sbr.rel (0) target = $region29
    $region28: #{net_forward.13} parent=1 // pred_region
      _
    $region29: #{net_forward.13} parent=1 // pred_fallthru
      _
    // Predicated region
    $region30: #{net_forward.13} parent=1 // pred_check
      _
    $region31: #{net_forward.13} parent=1 // pred_check_branch
      %30 = sbr.rel (0) target = $region33
    $region32: #{net_forward.13} parent=1 // pred_region
      _
    $region33: #{net_forward.13} parent=1 // pred_fallthru
      _
    // Predicated region
    $region34: #{net_forward.13} parent=1 // pred_check
      _
    $region35: #{net_forward.13} parent=1 // pred_check_branch
      %32 = sbr.rel (0) target = $region37
    $region36: #{net_forward.13} parent=1 // pred_region
      _
    $region37: #{net_forward.13} parent=1 // pred_fallthru
      _
    %v33 = vld [vmem:[%s0] sm:$0x3]
    %v34 = vld [vmem:[%s1] sm:$0x3]
    %v35 = vadd.f32 %v33, %v34
    %v36 = vld [vmem:[%s2] sm:$0x3]
    %v37 = vadd.f32 %v35, %v36
    %v38 = vld [vmem:[%s3] sm:$0xff]
    %v39 = vld [vmem:[%s3 + $0x8] sm:$0xff]
    %v40 = vld [vmem:[%s3 + $0x10] sm:$0xff]
    %v41 = vld [vmem:[%s3 + $0x18] sm:$0xff]
    %v42 = vld [vmem:[%s3 + $0x20] sm:$0xff]
    %v43 = vld [vmem:[%s3 + $0x28] sm:$0xff]
    %v44 = vld [vmem:[%s3 + $0x30] sm:$0xff]
    %v45 = vld [vmem:[%s3 + $0x38] sm:$0xff]
    %v46 = vld [vmem:[%s4] sm:$0x1]
    %v48 = vlaneseq
    %v49 = vshrl.u32 %v48, 7
    %v50 = vsub.s32 0, %v49
    %v51 = vrot.slane %v46, %v50
    %vm53 = vcmask 523264
    %v55 = vsel %vm53, %v37, 0
    %57 = vmatprep.subr.mxu0 0.0
    %58 = vmatpush1.msra.mxu0 %v38
    %59 = vmatprep.subr.mxu0 0.0
    %60 = vmatpush1.msra.mxu0 %v39
    %61 = vmatprep.subr.mxu0 0.0
    %62 = vmatpush1.msra.mxu0 %v40
    %63 = vmatprep.subr.mxu0 0.0
    %64 = vmatpush1.msra.mxu0 %v41
    %65 = vmatprep.subr.mxu0 0.0
    %66 = vmatpush1.msra.mxu0 %v42
    %67 = vmatprep.subr.mxu0 0.0
    %68 = vmatpush1.msra.mxu0 %v43
    %69 = vmatprep.subr.mxu0 0.0
    %70 = vmatpush1.msra.mxu0 %v44
    %71 = vmatprep.subr.mxu0 0.0
    %72 = vmatpush1.msra.mxu0 %v45
    %73 = vmatprep.subr.mxu0 0.0
    %74 = vmatpush1.msra.mxu0 0.0
    %75 = vmatprep.subr.mxu0 0.0
    %76 = vmatpush1.msra.mxu0 0.0
    %77 = vmatprep.subr.mxu0 0.0
    %78 = vmatpush1.msra.mxu0 0.0
    %79 = vmatprep.subr.mxu0 0.0
    %80 = vmatpush1.msra.mxu0 0.0
    %81 = vmatprep.subr.mxu0 0.0
    %82 = vmatpush1.msra.mxu0 0.0
    %83 = vmatprep.subr.mxu0 0.0
    %84 = vmatpush1.msra.mxu0 0.0
    %85 = vmatprep.subr.mxu0 0.0
    %86 = vmatpush1.msra.mxu0 0.0
    %87 = vmatprep.subr.mxu0 0.0
    %88 = vmatpush1.msra.mxu0 0.0
    %89 = vmatprep.subr.mxu0 0.0
    %90 = vmatpush1.msra.mxu0 0.0
    %91 = vmatprep.subr.mxu0 0.0
    %92 = vmatpush1.msra.mxu0 0.0
    %93 = vmatprep.subr.mxu0 0.0
    %94 = vmatpush1.msra.mxu0 0.0
    %95 = vmatprep.subr.mxu0 0.0
    %96 = vmatpush1.msra.mxu0 0.0
    %97 = vmatprep.subr.mxu0 0.0
    %98 = vmatpush1.msra.mxu0 0.0
    %99 = vmatprep.subr.mxu0 0.0
    %100 = vmatpush1.msra.mxu0 0.0
    %101 = vmatprep.subr.mxu0 0.0
    %102 = vmatpush1.msra.mxu0 0.0
    %103 = vmatprep.subr.mxu0 0.0
    %104 = vmatpush1.msra.mxu0 0.0
    %105 = vmatprep.subr.mxu0 0.0
    %106 = vmatpush1.msra.mxu0 0.0
    %107 = vmatprep.subr.mxu0 0.0
    %108 = vmatpush1.msra.mxu0 0.0
    %109 = vmatprep.subr.mxu0 0.0
    %110 = vmatpush1.msra.mxu0 0.0
    %111 = vmatprep.subr.mxu0 0.0
    %112 = vmatpush1.msra.mxu0 0.0
    %113 = vmatprep.subr.mxu0 0.0
    %114 = vmatpush1.msra.mxu0 0.0
    %115 = vmatprep.subr.mxu0 0.0
    %116 = vmatpush1.msra.mxu0 0.0
    %117 = vmatprep.subr.mxu0 0.0
    %118 = vmatpush1.msra.mxu0 0.0
    %119 = vmatprep.subr.mxu0 0.0
    %120 = vmatpush1.msra.mxu0 0.0
    %121 = vmatprep.mubr.f32.mxu0 0.0
    %122 = vmatmul.mubr.f32.gmra.mrb[0].mxu0 %v55
    %v123 = vpop.f32.mrb[0].mxu0
    %v124 = vadd.f32 %v51, %v123
    %v125 = vpop.f32.mrb[0].mxu0
    %126 = vdwg.mxu0
    %v127 = vmax.f32 %v124, 0.0
    %v128 = vld [vmem:[%s5] sm:$0xff]
    %v129 = vld [vmem:[%s5 + $0x8] sm:$0xff]
    %v130 = vld [vmem:[%s5 + $0x10] sm:$0xff]
    %v131 = vld [vmem:[%s5 + $0x18] sm:$0xff]
    %v132 = vld [vmem:[%s6] sm:$0x1]
    %v134 = vlaneseq
    %v135 = vshrl.u32 %v134, 7
    %v136 = vsub.s32 0, %v135
    %v137 = vrot.slane %v132, %v136
    %vm139 = vcmask 261120
    %v141 = vsel %vm139, %v127, 0
    %143 = vmatprep.subr.mxu0 0.0
    %144 = vmatpush1.msra.mxu0 %v128
    %145 = vmatprep.subr.mxu0 0.0
    %146 = vmatpush1.msra.mxu0 %v129
    %147 = vmatprep.subr.mxu0 0.0
    %148 = vmatpush1.msra.mxu0 %v130
    %149 = vmatprep.subr.mxu0 0.0
    %150 = vmatpush1.msra.mxu0 %v131
    %151 = vmatprep.subr.mxu0 0.0
    %152 = vmatpush1.msra.mxu0 0.0
    %153 = vmatprep.subr.mxu0 0.0
    %154 = vmatpush1.msra.mxu0 0.0
    %155 = vmatprep.subr.mxu0 0.0
    %156 = vmatpush1.msra.mxu0 0.0
    %157 = vmatprep.subr.mxu0 0.0
    %158 = vmatpush1.msra.mxu0 0.0
    %159 = vmatprep.subr.mxu0 0.0
    %160 = vmatpush1.msra.mxu0 0.0
    %161 = vmatprep.subr.mxu0 0.0
    %162 = vmatpush1.msra.mxu0 0.0
    %163 = vmatprep.subr.mxu0 0.0
    %164 = vmatpush1.msra.mxu0 0.0
    %165 = vmatprep.subr.mxu0 0.0
    %166 = vmatpush1.msra.mxu0 0.0
    %167 = vmatprep.subr.mxu0 0.0
    %168 = vmatpush1.msra.mxu0 0.0
    %169 = vmatprep.subr.mxu0 0.0
    %170 = vmatpush1.msra.mxu0 0.0
    %171 = vmatprep.subr.mxu0 0.0
    %172 = vmatpush1.msra.mxu0 0.0
    %173 = vmatprep.subr.mxu0 0.0
    %174 = vmatpush1.msra.mxu0 0.0
    %175 = vmatprep.subr.mxu0 0.0
    %176 = vmatpush1.msra.mxu0 0.0
    %177 = vmatprep.subr.mxu0 0.0
    %178 = vmatpush1.msra.mxu0 0.0
    %179 = vmatprep.subr.mxu0 0.0
    %180 = vmatpush1.msra.mxu0 0.0
    %181 = vmatprep.subr.mxu0 0.0
    %182 = vmatpush1.msra.mxu0 0.0
    %183 = vmatprep.subr.mxu0 0.0
    %184 = vmatpush1.msra.mxu0 0.0
    %185 = vmatprep.subr.mxu0 0.0
    %186 = vmatpush1.msra.mxu0 0.0
    %187 = vmatprep.subr.mxu0 0.0
    %188 = vmatpush1.msra.mxu0 0.0
    %189 = vmatprep.subr.mxu0 0.0
    %190 = vmatpush1.msra.mxu0 0.0
    %191 = vmatprep.subr.mxu0 0.0
    %192 = vmatpush1.msra.mxu0 0.0
    %193 = vmatprep.subr.mxu0 0.0
    %194 = vmatpush1.msra.mxu0 0.0
    %195 = vmatprep.subr.mxu0 0.0
    %196 = vmatpush1.msra.mxu0 0.0
    %197 = vmatprep.subr.mxu0 0.0
    %198 = vmatpush1.msra.mxu0 0.0
    %199 = vmatprep.subr.mxu0 0.0
    %200 = vmatpush1.msra.mxu0 0.0
    %201 = vmatprep.subr.mxu0 0.0
    %202 = vmatpush1.msra.mxu0 0.0
    %203 = vmatprep.subr.mxu0 0.0
    %204 = vmatpush1.msra.mxu0 0.0
    %205 = vmatprep.subr.mxu0 0.0
    %206 = vmatpush1.msra.mxu0 0.0
    %207 = vmatprep.mubr.f32.mxu0 0.0
    %208 = vmatmul.mubr.f32.gmra.mrb[0].mxu0 %v141
    %v209 = vpop.f32.mrb[0].mxu0
    %v210 = vadd.f32 %v137, %v209
    %v211 = vpop.f32.mrb[0].mxu0
    %212 = vdwg.mxu0
    %v213 = vmax.f32 %v210, 0.0
    %v214 = vld [vmem:[%s7] sm:$0xff]
    %v215 = vld [vmem:[%s7 + $0x8] sm:$0xff]
    %v216 = vld [vmem:[%s8] sm:$0x1]
    %v218 = vlaneseq
    %v219 = vshrl.u32 %v218, 7
    %v220 = vsub.s32 0, %v219
    %v221 = vrot.slane %v216, %v220
    %vm223 = vcmask 130048
    %v225 = vsel %vm223, %v213, 0
    %227 = vmatprep.subr.mxu0 0.0
    %228 = vmatpush1.msra.mxu0 %v214
    %229 = vmatprep.subr.mxu0 0.0
    %230 = vmatpush1.msra.mxu0 %v215
    %231 = vmatprep.subr.mxu0 0.0
    %232 = vmatpush1.msra.mxu0 0.0
    %233 = vmatprep.subr.mxu0 0.0
    %234 = vmatpush1.msra.mxu0 0.0
    %235 = vmatprep.subr.mxu0 0.0
    %236 = vmatpush1.msra.mxu0 0.0
    %237 = vmatprep.subr.mxu0 0.0
    %238 = vmatpush1.msra.mxu0 0.0
    %239 = vmatprep.subr.mxu0 0.0
    %240 = vmatpush1.msra.mxu0 0.0
    %241 = vmatprep.subr.mxu0 0.0
    %242 = vmatpush1.msra.mxu0 0.0
    %243 = vmatprep.subr.mxu0 0.0
    %244 = vmatpush1.msra.mxu0 0.0
    %245 = vmatprep.subr.mxu0 0.0
    %246 = vmatpush1.msra.mxu0 0.0
    %247 = vmatprep.subr.mxu0 0.0
    %248 = vmatpush1.msra.mxu0 0.0
    %249 = vmatprep.subr.mxu0 0.0
    %250 = vmatpush1.msra.mxu0 0.0
    %251 = vmatprep.subr.mxu0 0.0
    %252 = vmatpush1.msra.mxu0 0.0
    %253 = vmatprep.subr.mxu0 0.0
    %254 = vmatpush1.msra.mxu0 0.0
    %255 = vmatprep.subr.mxu0 0.0
    %256 = vmatpush1.msra.mxu0 0.0
    %257 = vmatprep.subr.mxu0 0.0
    %258 = vmatpush1.msra.mxu0 0.0
    %259 = vmatprep.subr.mxu0 0.0
    %260 = vmatpush1.msra.mxu0 0.0
    %261 = vmatprep.subr.mxu0 0.0
    %262 = vmatpush1.msra.mxu0 0.0
    %263 = vmatprep.subr.mxu0 0.0
    %264 = vmatpush1.msra.mxu0 0.0
    %265 = vmatprep.subr.mxu0 0.0
    %266 = vmatpush1.msra.mxu0 0.0
    %267 = vmatprep.subr.mxu0 0.0
    %268 = vmatpush1.msra.mxu0 0.0
    %269 = vmatprep.subr.mxu0 0.0
    %270 = vmatpush1.msra.mxu0 0.0
    %271 = vmatprep.subr.mxu0 0.0
    %272 = vmatpush1.msra.mxu0 0.0
    %273 = vmatprep.subr.mxu0 0.0
    %274 = vmatpush1.msra.mxu0 0.0
    %275 = vmatprep.subr.mxu0 0.0
    %276 = vmatpush1.msra.mxu0 0.0
    %277 = vmatprep.subr.mxu0 0.0
    %278 = vmatpush1.msra.mxu0 0.0
    %279 = vmatprep.subr.mxu0 0.0
    %280 = vmatpush1.msra.mxu0 0.0
    %281 = vmatprep.subr.mxu0 0.0
    %282 = vmatpush1.msra.mxu0 0.0
    %283 = vmatprep.subr.mxu0 0.0
    %284 = vmatpush1.msra.mxu0 0.0
    %285 = vmatprep.subr.mxu0 0.0
    %286 = vmatpush1.msra.mxu0 0.0
    %287 = vmatprep.subr.mxu0 0.0
    %288 = vmatpush1.msra.mxu0 0.0
    %289 = vmatprep.subr.mxu0 0.0
    %290 = vmatpush1.msra.mxu0 0.0
    %291 = vmatprep.mubr.f32.mxu0 0.0
    %292 = vmatmul.mubr.f32.gmra.mrb[0].mxu0 %v225
    %v293 = vpop.f32.mrb[0].mxu0
    %v294 = vadd.f32 %v221, %v293
    %v295 = vpop.f32.mrb[0].mxu0
    %296 = vdwg.mxu0
    %vm297 = vcmask 25600
    %v298 = vsel %vm297, %v294, -inf
    %299 = vmax.xlane.f32.xlu0 %v298
    %v300 = vpop.xlane.xlu0 %299
    %v301 = vsub.f32 %v294, %v300
    %v302 = vmul.f32 %v301, 1.442695
    %v303 = vpow.pop %v302
    %v304 = vsel %vm297, %v303, 0.0
    %305 = vadd.xlane.f32.xlu0 %v304
    %v306 = vpop.xlane.xlu0 %305
    %v307 = vlog2.pop %v306
    %v308 = vmul.f32 %v307, 0.6931472
    %v309 = vadd.f32 %v308, %v300
    %v310 = vsub.f32 %v294, %v309
    %311 = vst.msk [vmem:[#allocation2] sm:$0x3] %vm297, %v310
    // Predicated region
    $region38: #{net_forward.13} parent=1 // pred_check
      _
    $region39: #{net_forward.13} parent=1 // pred_check_branch
      %313 = sbr.rel (0) target = $region41
    $region40: #{net_forward.13} parent=1 // pred_region
      %s315 = ssub.s32 32, 32
      %316 = vsyncadd [#allocation3], %s315
      %s318 = sshll.u32 [#allocation2], 4
      %s319 = int_to_ptr.vmem [resolvable:$true] %s318
      %321 = dma.vmem_to_hbm [thread:$0]  %s319, 32, %s9, [#allocation3]
    $region41: #{net_forward.13} parent=1 // pred_fallthru
      _
    // Predicated region
    $region42: #{net_forward.13} parent=1 // pred_check
      _
    $region43: #{net_forward.13} parent=1 // pred_check_branch
      %323 = sbr.rel (0) target = $region45
    $region44: #{net_forward.13} parent=1 // pred_region
      %324 = dma.done [#allocation3], 32
    $region45: #{net_forward.13} parent=1 // pred_fallthru
      _
    %325 = vsyncpa [#allocation3], 1

</llo_original>
